<compile_context>
chip_gen: v5e
topology: v5e:2x2
jax: 0.10.0
libtpu: 0.0.40
codegen_flags: <defaults>
</compile_context>

<pallas_src>
import functools

import numpy as np
import jax
import jax.numpy as jnp
from jax.experimental import pallas as pl
from jax.experimental.pallas import tpu as pltpu


def _mod1(x):
    # keep only the fractional number of cycles (exact phase mod 2*pi)
    return x - jnp.floor(x)


def _coil_st_fwd_kernel(trjT_ref, coords_ref, bx2_ref, hstk_ref, out_ref, gacc_ref,
                        *, n_inner, d, mm_dtype):
    # trjT_ref  : (d, tk)            trajectory (transposed), tiled over K
    # coords_ref: (tr, max(d-1,1))   centered/normalized OUTER-dim pixel coords
    # bx2_ref   : (2*L*n_inner, tr)  [Re; Im] of Bx transposed to (L, n_inner, R), tiled over R
    # hstk_ref  : (L, 2C, tk)        [Re, Im] of h stacked along coil axis, tiled over K
    # out_ref   : (2C, tk)           [Re(ksp); Im(ksp)]
    # gacc_ref  : (2, L*n_inner, tk) f32 accumulator for Re/Im of stage-1 result G
    tk = trjT_ref.shape[1]
    tr = coords_ref.shape[0]
    LnI = bx2_ref.shape[0] // 2
    L = LnI // n_inner
    C = out_ref.shape[0] // 2

    i = pl.program_id(1)                    # outer-row tile index (reduction axis, last)
    n_i = pl.num_programs(1)

    @pl.when(i == 0)
    def _init():
        gacc_ref[...] = jnp.zeros_like(gacc_ref)

    # ---- outer-dims phase factor E_out for this (row-tile, k-tile) ----
    # cycles = sum_{dd < d-1} coord_dd(row) * trj[k, dd]; per-term mod-1 range reduction.
    if d >= 2:
        cyc = None
        for dd in range(d - 1):                                    # unrolled (d-1 = 1..2)
            term = coords_ref[:, dd:dd + 1] * trjT_ref[dd:dd + 1, :]   # (tr,1)*(1,tk)
            term = _mod1(term)
            cyc = term if cyc is None else cyc + term
        cyc = _mod1(cyc)
        pho = (-2.0 * np.pi) * cyc
        co = jnp.cos(pho)                                          # (tr, tk)
        so = jnp.sin(pho)
    else:
        co = jnp.ones((tr, tk), jnp.float32)
        so = jnp.zeros((tr, tk), jnp.float32)

    # ---- stage 1: two MXU passes (Re/Im of Bx stacked along the LHS rows) ----
    bx2 = bx2_ref[...]                                             # (2*LnI, tr), mm_dtype
    P = jnp.dot(bx2, co.astype(mm_dtype), preferred_element_type=jnp.float32)  # (2*LnI, tk)
    Q = jnp.dot(bx2, so.astype(mm_dtype), preferred_element_type=jnp.float32)
    # Gr = Re(Bx)@co - Im(Bx)@so ;  Gi = Re(Bx)@so + Im(Bx)@co
    gacc_ref[0] = gacc_ref[0] + (P[:LnI, :] - Q[LnI:, :])
    gacc_ref[1] = gacc_ref[1] + (Q[:LnI, :] + P[LnI:, :])

    # ---- last outer-row tile: inner-dim factor, reduce over n_inner, coil combine ----
    @pl.when(i == n_i - 1)
    def _finalize():
        # E_in for the innermost image dim (n_inner, tk); exact small-int iota coords.
        ri = jax.lax.broadcasted_iota(jnp.int32, (n_inner, 1), 0).astype(jnp.float32)
        coord_in = (ri - float(n_inner // 2)) * (1.0 / float(n_inner))
        cyc_in = _mod1(coord_in * trjT_ref[d - 1:d, :])
        phi = (-2.0 * np.pi) * cyc_in
        ci_ = jnp.cos(phi)                                         # (n_inner, tk)
        si_ = jnp.sin(phi)

        gr = gacc_ref[0]                                           # (L*n_inner, tk)
        gi = gacc_ref[1]

        outr = jnp.zeros((C, tk), jnp.float32)
        outi = jnp.zeros((C, tk), jnp.float32)
        for l in range(L):                                         # small static unroll
            gr_l = gr[l * n_inner:(l + 1) * n_inner, :]            # (n_inner, tk)
            gi_l = gi[l * n_inner:(l + 1) * n_inner, :]
            # F[l,k] = sum_{r_in} G[l,r_in,k] * E_in[r_in,k]   (complex)
            fr = jnp.sum(gr_l * ci_ - gi_l * si_, axis=0, keepdims=True)   # (1, tk)
            fi = jnp.sum(gr_l * si_ + gi_l * ci_, axis=0, keepdims=True)
            hr = hstk_ref[l, 0:C, :]                               # (C, tk)
            hi = hstk_ref[l, C:2 * C, :]
            # ksp[c,k] += h[l,c,k] * F[l,k]
            outr = outr + hr * fr - hi * fi
            outi = outi + hr * fi + hi * fr
        # direct slab writes (no concatenate relayout)
        out_ref[0:C, :] = outr
        out_ref[C:2 * C, :] = outi


def _pick_tk(K):
    # Largest lane-dense tile dividing K.  Per perf review: do NOT force >=2 k-tiles
    # (single-TC v5e/v6e gain nothing); on v7x more k-tiles help megacore balance but
    # 256-wide lane-dense tiles come first.
    for t in (256, 128):
        if K % t == 0:
            return t
    if K <= 4096:
        return K          # full-extent block is always legal
    raise ValueError("large K must be a multiple of 128; TODO(synk): pad + mask k-space")


def _pick_tr(R):
    # lane width of the bx2 block: must be a multiple of 128 or equal to full R.
    for t in (256, 128):
        if R % t == 0:
            return t
    return R


def coil_spatiotemporal_forward(img, trj, b, h, *, tk=None, tr=None,
                                matmul_dtype=jnp.bfloat16):
    """
    img : (*im_size)             complex64
    trj : (*trj_size, d)         float32, values in [-n/2, n/2]
    b   : (L, *im_size)          complex64   (spatial_funcs)
    h   : (L, C, *trj_size)      complex64   (temporal_funcs)
    returns ksp : (C, *trj_size) complex64
    """
    im_size = tuple(int(n) for n in img.shape)
    d = int(trj.shape[-1])
    trj_size = trj.shape[:-1]
    L = int(b.shape[0])
    C = int(h.shape[1])
    N = int(np.prod(im_size))
    K = int(np.prod(trj_size))
    n_inner = im_size[-1]
    R = N // n_inner                       # flattened outer-row count (1 if d == 1)

    if tk is None:
        tk = _pick_tk(K)
    if tr is None:
        tr = _pick_tr(R)
    assert K % tk == 0 and R % tr == 0

    # --- glue: Bx = b * img, transpose so stage-1 contracts over the OUTER rows ---
    # (L, *im_size) -> (L, R, n_inner) -> (L, n_inner, R) -> (L*n_inner, R); stack Re/Im.
    Bx = (b * img[None]).reshape(L, R, n_inner)
    BxT = jnp.transpose(Bx, (0, 2, 1)).reshape(L * n_inner, R)
    bx2 = jnp.concatenate([jnp.real(BxT), jnp.imag(BxT)], axis=0).astype(matmul_dtype)

    # trajectory transposed -> (d, K); h stacked real/imag along coil axis -> (L, 2C, K)
    trjT = jnp.transpose(trj.reshape(K, d)).astype(jnp.float32)
    hf = h.reshape(L, C, K)
    hstk = jnp.concatenate([jnp.real(hf), jnp.imag(hf)], axis=1).astype(jnp.float32)

    # precomputed centered/normalized coordinates of the OUTER image dims: (R, d-1)
    if d >= 2:
        axes = [(np.arange(n) - n // 2) / float(n) for n in im_size[:-1]]
        mesh = np.meshgrid(*axes, indexing="ij")
        coords_np = np.stack([m.reshape(-1) for m in mesh], axis=-1).astype(np.float32)
    else:
        coords_np = np.zeros((1, 1), np.float32)
    coords = jnp.asarray(coords_np)
    dout = coords.shape[1]

    kernel = functools.partial(_coil_st_fwd_kernel, n_inner=n_inner, d=d,
                               mm_dtype=matmul_dtype)

    out = pl.pallas_call(
        kernel,
        out_shape=jax.ShapeDtypeStruct((2 * C, K), jnp.float32),
        grid_spec=pltpu.PrefetchScalarGridSpec(
            num_scalar_prefetch=0,
            grid=(K // tk, R // tr),                  # (parallel K, reduction over rows last)
            in_specs=[
                pl.BlockSpec((d, tk), lambda j, i: (0, j)),                 # trjT
                pl.BlockSpec((tr, dout), lambda j, i: (i, 0)),              # outer coords
                pl.BlockSpec((2 * L * n_inner, tr), lambda j, i: (0, i)),   # [Re;Im](BxT)
                pl.BlockSpec((L, 2 * C, tk), lambda j, i: (0, 0, j)),       # [Re,Im](h)
            ],
            out_specs=pl.BlockSpec((2 * C, tk), lambda j, i: (0, j)),
            scratch_shapes=[pltpu.VMEM((2, L * n_inner, tk), jnp.float32)],
        ),
        compiler_params=pltpu.CompilerParams(
            dimension_semantics=("parallel", "arbitrary"),
            vmem_limit_bytes=48 * 1024 * 1024),
    )(trjT, coords, bx2, hstk)

    ksp = (out[:C] + 1j * out[C:]).astype(jnp.complex64)
    return ksp.reshape(C, *trj_size)


def reference_forward(img, trj, b, h):
    """Pure-JAX reference of the same linop (direct NDFT)."""
    im_size = img.shape
    d = trj.shape[-1]
    trj_size = trj.shape[:-1]
    L = b.shape[0]
    C = h.shape[1]
    N = int(np.prod(im_size))
    K = int(np.prod(trj_size))
    axes = [(np.arange(n) - n // 2) / float(n) for n in im_size]
    mesh = np.meshgrid(*axes, indexing="ij")
    grid = jnp.asarray(np.stack([m.reshape(-1) for m in mesh], axis=-1),
                       dtype=jnp.float32)                        # (N, d)
    phase = -2.0 * np.pi * (trj.reshape(K, d) @ grid.T)          # (K, N)
    E = jnp.exp(1j * phase.astype(jnp.float32)).astype(jnp.complex64)
    Bx = (b * img[None]).reshape(L, N)
    FBx = Bx @ E.T                                               # (L, K)
    ksp = jnp.sum(h.reshape(L, C, K) * FBx[:, None, :], axis=0)  # (C, K)
    return ksp.reshape(C, *trj_size)


if __name__ == "__main__":
    # small shapes consistent with the module:
    #   im_size = (16, 16), trj_size = (2, 128), d = 2, L = 3 segments, C = 4 coils
    im_size = (16, 16)
    trj_size = (2, 128)
    d = 2
    L, C = 3, 4

    key = jax.random.PRNGKey(0)
    k1, k2, k3, k4, k5, k6, k7 = jax.random.split(key, 7)

    n_half = im_size[0] // 2
    trj = jax.random.uniform(k1, (*trj_size, d), jnp.float32,
                             minval=-n_half, maxval=n_half)
    b = (jax.random.normal(k2, (L, *im_size), jnp.float32)
         + 1j * jax.random.normal(k3, (L, *im_size), jnp.float32)).astype(jnp.complex64)
    h = (jax.random.normal(k4, (L, C, *trj_size), jnp.float32)
         + 1j * jax.random.normal(k5, (L, C, *trj_size), jnp.float32)).astype(jnp.complex64)
    img = (jax.random.normal(k6, im_size, jnp.float32)
           + 1j * jax.random.normal(k7, im_size, jnp.float32)).astype(jnp.complex64)

    ref = jax.block_until_ready(reference_forward(img, trj, b, h))
    ref_max = float(jnp.max(jnp.abs(ref))) + 1e-12

    # default path: bf16 MXU operands, f32 accumulation (per perf review)
    ksp = jax.block_until_ready(coil_spatiotemporal_forward(img, trj, b, h))
    assert ksp.shape == (C, *trj_size) and ksp.dtype == jnp.complex64
    err_bf16 = float(jnp.max(jnp.abs(ksp - ref)) / ref_max)
    assert err_bf16 < 1e-2, f"bf16-matmul mismatch vs reference: rel err = {err_bf16}"

    # full-f32 path validates the kernel math tightly (same code, f32 MXU operands)
    ksp32 = jax.block_until_ready(
        coil_spatiotemporal_forward(img, trj, b, h, matmul_dtype=jnp.float32))
    err_f32 = float(jnp.max(jnp.abs(ksp32 - ref)) / ref_max)
    assert err_f32 < 1e-3, f"f32-matmul mismatch vs reference: rel err = {err_f32}"

    print("KERNEL_OK")
</pallas_src>

<mosaic_0001>
module attributes {stable_mosaic.version = 11 : i64} {
  func.func @_coil_st_fwd_kernel(%arg0: i32, %arg1: i32, %arg2: memref<2x256xf32, #tpu.memory_space<vmem>>, %arg3: memref<16x1xf32, #tpu.memory_space<vmem>>, %arg4: memref<96x16xbf16, #tpu.memory_space<vmem>>, %arg5: memref<3x8x256xf32, #tpu.memory_space<vmem>>, %arg6: memref<8x256xf32, #tpu.memory_space<vmem>>, %arg7: memref<2x48x256xf32, #tpu.memory_space<vmem>>) attributes {dimension_semantics = [#tpu.dimension_semantics<parallel>, #tpu.dimension_semantics<arbitrary>], iteration_bounds = array<i64: 1, 1>, scalar_prefetch = 0 : i64, scratch_operands = 1 : i64, tpu.core_type = #tpu.core_type<tc>, window_params = [{transform_indices = @transform_0, window_bounds = array<i64: 2, 256>}, {transform_indices = @transform_1, window_bounds = array<i64: 16, 1>}, {transform_indices = @transform_2, window_bounds = array<i64: 96, 16>}, {transform_indices = @transform_3, window_bounds = array<i64: 3, 8, 256>}, {transform_indices = @transform_4, window_bounds = array<i64: 8, 256>}]} {
    %c0_i32 = arith.constant 0 : i32
    %0 = arith.cmpi eq, %arg1, %c0_i32 : i32
    %1 = arith.extui %0 : i1 to i32
    %c0_i32_0 = arith.constant 0 : i32
    %2 = arith.cmpi ne, %1, %c0_i32_0 : i32
    scf.if %2 {
      %cst_21 = arith.constant 0.000000e+00 : f32
      %42 = vector.broadcast %cst_21 : f32 to vector<2x48x256xf32>
      %c0_22 = arith.constant 0 : index
      %c0_23 = arith.constant 0 : index
      %c0_24 = arith.constant 0 : index
      %43 = vector.load %arg7[%c0_22, %c0_23, %c0_24] : memref<2x48x256xf32, #tpu.memory_space<vmem>>, vector<2x48x256xf32>
      tpu.vector_store %arg7[%c0_22, %c0_23, %c0_24], %42 {strides = array<i32>} : memref<2x48x256xf32, #tpu.memory_space<vmem>>, vector<2x48x256xf32>,
    } else {
    }
    %c0 = arith.constant 0 : index
    %c0_1 = arith.constant 0 : index
    %3 = vector.load %arg3[%c0, %c0_1] : memref<16x1xf32, #tpu.memory_space<vmem>>, vector<16x1xf32>
    %c0_2 = arith.constant 0 : index
    %c0_3 = arith.constant 0 : index
    %4 = vector.load %arg2[%c0_2, %c0_3] : memref<2x256xf32, #tpu.memory_space<vmem>>, vector<1x256xf32>
    %5 = vector.broadcast %3 : vector<16x1xf32> to vector<16x256xf32>
    %6 = vector.broadcast %4 : vector<1x256xf32> to vector<16x256xf32>
    %7 = arith.mulf %5, %6 : vector<16x256xf32>
    %8 = math.floor %7 : vector<16x256xf32>
    %9 = arith.subf %7, %8 : vector<16x256xf32>
    %10 = math.floor %9 : vector<16x256xf32>
    %11 = arith.subf %9, %10 : vector<16x256xf32>
    %cst = arith.constant -6.28318548 : f32
    %12 = vector.broadcast %cst : f32 to vector<16x256xf32>
    %13 = arith.mulf %12, %11 : vector<16x256xf32>
    %14 = math.cos %13 : vector<16x256xf32>
    %15 = math.sin %13 : vector<16x256xf32>
    %c0_4 = arith.constant 0 : index
    %c0_5 = arith.constant 0 : index
    %16 = vector.load %arg4[%c0_4, %c0_5] : memref<96x16xbf16, #tpu.memory_space<vmem>>, vector<96x16xbf16>
    %17 = arith.truncf %14 : vector<16x256xf32> to vector<16x256xbf16>
    %cst_6 = arith.constant dense<0.000000e+00> : vector<96x256xf32>
    %18 = tpu.matmul %16, %17, %cst_6 {dimension_numbers = #tpu.dot_dimension_numbers<[1], [0], [0], [1], [0, 0, 1, 1], [], []>} : vector<96x16xbf16>, vector<16x256xbf16>, vector<96x256xf32> -> vector<96x256xf32>
    %19 = arith.truncf %15 : vector<16x256xf32> to vector<16x256xbf16>
    %cst_7 = arith.constant dense<0.000000e+00> : vector<96x256xf32>
    %20 = tpu.matmul %16, %19, %cst_7 {dimension_numbers = #tpu.dot_dimension_numbers<[1], [0], [0], [1], [0, 0, 1, 1], [], []>} : vector<96x16xbf16>, vector<16x256xbf16>, vector<96x256xf32> -> vector<96x256xf32>
    %c0_8 = arith.constant 0 : index
    %c0_9 = arith.constant 0 : index
    %c0_10 = arith.constant 0 : index
    %21 = vector.load %arg7[%c0_8, %c0_9, %c0_10] : memref<2x48x256xf32, #tpu.memory_space<vmem>>, vector<1x48x256xf32>
    %22 = vector.shape_cast %21 : vector<1x48x256xf32> to vector<48x256xf32>
    %23 = vector.extract_strided_slice %18 {offsets = [0, 0], sizes = [48, 256], strides = [1, 1]} : vector<96x256xf32> to vector<48x256xf32>
    %24 = vector.extract_strided_slice %20 {offsets = [48, 0], sizes = [48, 256], strides = [1, 1]} : vector<96x256xf32> to vector<48x256xf32>
    %25 = arith.subf %23, %24 : vector<48x256xf32>
    %26 = arith.addf %22, %25 : vector<48x256xf32>
    %c0_11 = arith.constant 0 : index
    %c0_12 = arith.constant 0 : index
    %c0_13 = arith.constant 0 : index
    %27 = vector.load %arg7[%c0_11, %c0_12, %c0_13] : memref<2x48x256xf32, #tpu.memory_space<vmem>>, vector<1x48x256xf32>
    %28 = vector.shape_cast %27 : vector<1x48x256xf32> to vector<48x256xf32>
    %29 = vector.shape_cast %26 : vector<48x256xf32> to vector<1x48x256xf32>
    tpu.vector_store %arg7[%c0_11, %c0_12, %c0_13], %29 {strides = array<i32>} : memref<2x48x256xf32, #tpu.memory_space<vmem>>, vector<1x48x256xf32>,
    %c1 = arith.constant 1 : index
    %c0_14 = arith.constant 0 : index
    %c0_15 = arith.constant 0 : index
    %30 = vector.load %arg7[%c1, %c0_14, %c0_15] : memref<2x48x256xf32, #tpu.memory_space<vmem>>, vector<1x48x256xf32>
    %31 = vector.shape_cast %30 : vector<1x48x256xf32> to vector<48x256xf32>
    %32 = vector.extract_strided_slice %20 {offsets = [0, 0], sizes = [48, 256], strides = [1, 1]} : vector<96x256xf32> to vector<48x256xf32>
    %33 = vector.extract_strided_slice %18 {offsets = [48, 0], sizes = [48, 256], strides = [1, 1]} : vector<96x256xf32> to vector<48x256xf32>
    %34 = arith.addf %32, %33 : vector<48x256xf32>
    %35 = arith.addf %31, %34 : vector<48x256xf32>
    %c1_16 = arith.constant 1 : index
    %c0_17 = arith.constant 0 : index
    %c0_18 = arith.constant 0 : index
    %36 = vector.load %arg7[%c1_16, %c0_17, %c0_18] : memref<2x48x256xf32, #tpu.memory_space<vmem>>, vector<1x48x256xf32>
    %37 = vector.shape_cast %36 : vector<1x48x256xf32> to vector<48x256xf32>
    %38 = vector.shape_cast %35 : vector<48x256xf32> to vector<1x48x256xf32>
    tpu.vector_store %arg7[%c1_16, %c0_17, %c0_18], %38 {strides = array<i32>} : memref<2x48x256xf32, #tpu.memory_space<vmem>>, vector<1x48x256xf32>,
    %c0_i32_19 = arith.constant 0 : i32
    %39 = arith.cmpi eq, %arg1, %c0_i32_19 : i32
    %40 = arith.extui %39 : i1 to i32
    %c0_i32_20 = arith.constant 0 : i32
    %41 = arith.cmpi ne, %40, %c0_i32_20 : i32
    scf.if %41 {
      %42 = tpu.iota {dimensions = array<i32: 0>} : vector<16x1xi32>
      %43 = arith.sitofp %42 : vector<16x1xi32> to vector<16x1xf32>
      %cst_21 = arith.constant 8.000000e+00 : f32
      %44 = vector.broadcast %cst_21 : f32 to vector<16x1xf32>
      %45 = arith.subf %43, %44 : vector<16x1xf32>
      %cst_22 = arith.constant 6.250000e-02 : f32
      %46 = vector.broadcast %cst_22 : f32 to vector<16x1xf32>
      %47 = arith.mulf %45, %46 : vector<16x1xf32>
      %c1_23 = arith.constant 1 : index
      %c0_24 = arith.constant 0 : index
      %48 = vector.load %arg2[%c1_23, %c0_24] : memref<2x256xf32, #tpu.memory_space<vmem>>, vector<1x256xf32>
      %49 = vector.broadcast %47 : vector<16x1xf32> to vector<16x256xf32>
      %50 = vector.broadcast %48 : vector<1x256xf32> to vector<16x256xf32>
      %51 = arith.mulf %49, %50 : vector<16x256xf32>
      %52 = math.floor %51 : vector<16x256xf32>
      %53 = arith.subf %51, %52 : vector<16x256xf32>
      %cst_25 = arith.constant -6.28318548 : f32
      %54 = vector.broadcast %cst_25 : f32 to vector<16x256xf32>
      %55 = arith.mulf %54, %53 : vector<16x256xf32>
      %56 = math.cos %55 : vector<16x256xf32>
      %57 = math.sin %55 : vector<16x256xf32>
      %c0_26 = arith.constant 0 : index
      %c0_27 = arith.constant 0 : index
      %c0_28 = arith.constant 0 : index
      %58 = vector.load %arg7[%c0_26, %c0_27, %c0_28] : memref<2x48x256xf32, #tpu.memory_space<vmem>>, vector<1x48x256xf32>
      %59 = vector.shape_cast %58 : vector<1x48x256xf32> to vector<48x256xf32>
      %c1_29 = arith.constant 1 : index
      %c0_30 = arith.constant 0 : index
      %c0_31 = arith.constant 0 : index
      %60 = vector.load %arg7[%c1_29, %c0_30, %c0_31] : memref<2x48x256xf32, #tpu.memory_space<vmem>>, vector<1x48x256xf32>
      %61 = vector.shape_cast %60 : vector<1x48x256xf32> to vector<48x256xf32>
      %cst_32 = arith.constant 0.000000e+00 : f32
      %62 = vector.broadcast %cst_32 : f32 to vector<4x256xf32>
      %cst_33 = arith.constant 0.000000e+00 : f32
      %63 = vector.broadcast %cst_33 : f32 to vector<4x256xf32>
      %64 = vector.extract_strided_slice %59 {offsets = [0, 0], sizes = [16, 256], strides = [1, 1]} : vector<48x256xf32> to vector<16x256xf32>
      %65 = vector.extract_strided_slice %61 {offsets = [0, 0], sizes = [16, 256], strides = [1, 1]} : vector<48x256xf32> to vector<16x256xf32>
      %66 = arith.mulf %64, %56 : vector<16x256xf32>
      %67 = arith.mulf %65, %57 : vector<16x256xf32>
      %68 = arith.subf %66, %67 : vector<16x256xf32>
      %cst_34 = arith.constant dense<0.000000e+00> : vector<256xf32>
      %69 = vector.multi_reduction <add>, %68, %cst_34 [0] : vector<16x256xf32> to vector<256xf32>
      %70 = vector.shape_cast %69 : vector<256xf32> to vector<1x256xf32>
      %71 = arith.mulf %64, %57 : vector<16x256xf32>
      %72 = arith.mulf %65, %56 : vector<16x256xf32>
      %73 = arith.addf %71, %72 : vector<16x256xf32>
      %cst_35 = arith.constant dense<0.000000e+00> : vector<256xf32>
      %74 = vector.multi_reduction <add>, %73, %cst_35 [0] : vector<16x256xf32> to vector<256xf32>
      %75 = vector.shape_cast %74 : vector<256xf32> to vector<1x256xf32>
      %c0_36 = arith.constant 0 : index
      %c0_37 = arith.constant 0 : index
      %c0_38 = arith.constant 0 : index
      %76 = vector.load %arg5[%c0_36, %c0_37, %c0_38] : memref<3x8x256xf32, #tpu.memory_space<vmem>>, vector<1x4x256xf32>
      %77 = vector.shape_cast %76 : vector<1x4x256xf32> to vector<4x256xf32>
      %c0_39 = arith.constant 0 : index
      %c4 = arith.constant 4 : index
      %c0_40 = arith.constant 0 : index
      %78 = vector.load %arg5[%c0_39, %c4, %c0_40] : memref<3x8x256xf32, #tpu.memory_space<vmem>>, vector<1x4x256xf32>
      %79 = vector.shape_cast %78 : vector<1x4x256xf32> to vector<4x256xf32>
      %80 = vector.broadcast %70 : vector<1x256xf32> to vector<4x256xf32>
      %81 = arith.mulf %77, %80 : vector<4x256xf32>
      %82 = arith.addf %62, %81 : vector<4x256xf32>
      %83 = vector.broadcast %75 : vector<1x256xf32> to vector<4x256xf32>
      %84 = arith.mulf %79, %83 : vector<4x256xf32>
      %85 = arith.subf %82, %84 : vector<4x256xf32>
      %86 = vector.broadcast %75 : vector<1x256xf32> to vector<4x256xf32>
      %87 = arith.mulf %77, %86 : vector<4x256xf32>
      %88 = arith.addf %63, %87 : vector<4x256xf32>
      %89 = vector.broadcast %70 : vector<1x256xf32> to vector<4x256xf32>
      %90 = arith.mulf %79, %89 : vector<4x256xf32>
      %91 = arith.addf %88, %90 : vector<4x256xf32>
      %92 = vector.extract_strided_slice %59 {offsets = [16, 0], sizes = [16, 256], strides = [1, 1]} : vector<48x256xf32> to vector<16x256xf32>
      %93 = vector.extract_strided_slice %61 {offsets = [16, 0], sizes = [16, 256], strides = [1, 1]} : vector<48x256xf32> to vector<16x256xf32>
      %94 = arith.mulf %92, %56 : vector<16x256xf32>
      %95 = arith.mulf %93, %57 : vector<16x256xf32>
      %96 = arith.subf %94, %95 : vector<16x256xf32>
      %cst_41 = arith.constant dense<0.000000e+00> : vector<256xf32>
      %97 = vector.multi_reduction <add>, %96, %cst_41 [0] : vector<16x256xf32> to vector<256xf32>
      %98 = vector.shape_cast %97 : vector<256xf32> to vector<1x256xf32>
      %99 = arith.mulf %92, %57 : vector<16x256xf32>
      %100 = arith.mulf %93, %56 : vector<16x256xf32>
      %101 = arith.addf %99, %100 : vector<16x256xf32>
      %cst_42 = arith.constant dense<0.000000e+00> : vector<256xf32>
      %102 = vector.multi_reduction <add>, %101, %cst_42 [0] : vector<16x256xf32> to vector<256xf32>
      %103 = vector.shape_cast %102 : vector<256xf32> to vector<1x256xf32>
      %c1_43 = arith.constant 1 : index
      %c0_44 = arith.constant 0 : index
      %c0_45 = arith.constant 0 : index
      %104 = vector.load %arg5[%c1_43, %c0_44, %c0_45] : memref<3x8x256xf32, #tpu.memory_space<vmem>>, vector<1x4x256xf32>
      %105 = vector.shape_cast %104 : vector<1x4x256xf32> to vector<4x256xf32>
      %c1_46 = arith.constant 1 : index
      %c4_47 = arith.constant 4 : index
      %c0_48 = arith.constant 0 : index
      %106 = vector.load %arg5[%c1_46, %c4_47, %c0_48] : memref<3x8x256xf32, #tpu.memory_space<vmem>>, vector<1x4x256xf32>
      %107 = vector.shape_cast %106 : vector<1x4x256xf32> to vector<4x256xf32>
      %108 = vector.broadcast %98 : vector<1x256xf32> to vector<4x256xf32>
      %109 = arith.mulf %105, %108 : vector<4x256xf32>
      %110 = arith.addf %85, %109 : vector<4x256xf32>
      %111 = vector.broadcast %103 : vector<1x256xf32> to vector<4x256xf32>
      %112 = arith.mulf %107, %111 : vector<4x256xf32>
      %113 = arith.subf %110, %112 : vector<4x256xf32>
      %114 = vector.broadcast %103 : vector<1x256xf32> to vector<4x256xf32>
      %115 = arith.mulf %105, %114 : vector<4x256xf32>
      %116 = arith.addf %91, %115 : vector<4x256xf32>
      %117 = vector.broadcast %98 : vector<1x256xf32> to vector<4x256xf32>
      %118 = arith.mulf %107, %117 : vector<4x256xf32>
      %119 = arith.addf %116, %118 : vector<4x256xf32>
      %120 = vector.extract_strided_slice %59 {offsets = [32, 0], sizes = [16, 256], strides = [1, 1]} : vector<48x256xf32> to vector<16x256xf32>
      %121 = vector.extract_strided_slice %61 {offsets = [32, 0], sizes = [16, 256], strides = [1, 1]} : vector<48x256xf32> to vector<16x256xf32>
      %122 = arith.mulf %120, %56 : vector<16x256xf32>
      %123 = arith.mulf %121, %57 : vector<16x256xf32>
      %124 = arith.subf %122, %123 : vector<16x256xf32>
      %cst_49 = arith.constant dense<0.000000e+00> : vector<256xf32>
      %125 = vector.multi_reduction <add>, %124, %cst_49 [0] : vector<16x256xf32> to vector<256xf32>
      %126 = vector.shape_cast %125 : vector<256xf32> to vector<1x256xf32>
      %127 = arith.mulf %120, %57 : vector<16x256xf32>
      %128 = arith.mulf %121, %56 : vector<16x256xf32>
      %129 = arith.addf %127, %128 : vector<16x256xf32>
      %cst_50 = arith.constant dense<0.000000e+00> : vector<256xf32>
      %130 = vector.multi_reduction <add>, %129, %cst_50 [0] : vector<16x256xf32> to vector<256xf32>
      %131 = vector.shape_cast %130 : vector<256xf32> to vector<1x256xf32>
      %c2 = arith.constant 2 : index
      %c0_51 = arith.constant 0 : index
      %c0_52 = arith.constant 0 : index
      %132 = vector.load %arg5[%c2, %c0_51, %c0_52] : memref<3x8x256xf32, #tpu.memory_space<vmem>>, vector<1x4x256xf32>
      %133 = vector.shape_cast %132 : vector<1x4x256xf32> to vector<4x256xf32>
      %c2_53 = arith.constant 2 : index
      %c4_54 = arith.constant 4 : index
      %c0_55 = arith.constant 0 : index
      %134 = vector.load %arg5[%c2_53, %c4_54, %c0_55] : memref<3x8x256xf32, #tpu.memory_space<vmem>>, vector<1x4x256xf32>
      %135 = vector.shape_cast %134 : vector<1x4x256xf32> to vector<4x256xf32>
      %136 = vector.broadcast %126 : vector<1x256xf32> to vector<4x256xf32>
      %137 = arith.mulf %133, %136 : vector<4x256xf32>
      %138 = arith.addf %113, %137 : vector<4x256xf32>
      %139 = vector.broadcast %131 : vector<1x256xf32> to vector<4x256xf32>
      %140 = arith.mulf %135, %139 : vector<4x256xf32>
      %141 = arith.subf %138, %140 : vector<4x256xf32>
      %142 = vector.broadcast %131 : vector<1x256xf32> to vector<4x256xf32>
      %143 = arith.mulf %133, %142 : vector<4x256xf32>
      %144 = arith.addf %119, %143 : vector<4x256xf32>
      %145 = vector.broadcast %126 : vector<1x256xf32> to vector<4x256xf32>
      %146 = arith.mulf %135, %145 : vector<4x256xf32>
      %147 = arith.addf %144, %146 : vector<4x256xf32>
      %c0_56 = arith.constant 0 : index
      %c0_57 = arith.constant 0 : index
      %148 = vector.load %arg6[%c0_56, %c0_57] : memref<8x256xf32, #tpu.memory_space<vmem>>, vector<4x256xf32>
      tpu.vector_store %arg6[%c0_56, %c0_57], %141 {strides = array<i32>} : memref<8x256xf32, #tpu.memory_space<vmem>>, vector<4x256xf32>,
      %c4_58 = arith.constant 4 : index
      %c0_59 = arith.constant 0 : index
      %149 = vector.load %arg6[%c4_58, %c0_59] : memref<8x256xf32, #tpu.memory_space<vmem>>, vector<4x256xf32>
      tpu.vector_store %arg6[%c4_58, %c0_59], %147 {strides = array<i32>} : memref<8x256xf32, #tpu.memory_space<vmem>>, vector<4x256xf32>,
    } else {
    }
    return
  }
  func.func @transform_0(%arg0: i32, %arg1: i32) -> (i32, i32) {
    %c0_i32 = arith.constant 0 : i32
    %c0_i32_0 = arith.constant 0 : i32
    return %c0_i32, %arg0 : i32, i32
  }
  func.func @transform_1(%arg0: i32, %arg1: i32) -> (i32, i32) {
    %c0_i32 = arith.constant 0 : i32
    %c0_i32_0 = arith.constant 0 : i32
    return %arg1, %c0_i32 : i32, i32
  }
  func.func @transform_2(%arg0: i32, %arg1: i32) -> (i32, i32) {
    %c0_i32 = arith.constant 0 : i32
    %c0_i32_0 = arith.constant 0 : i32
    return %c0_i32, %arg1 : i32, i32
  }
  func.func @transform_3(%arg0: i32, %arg1: i32) -> (i32, i32, i32) {
    %c0_i32 = arith.constant 0 : i32
    %c0_i32_0 = arith.constant 0 : i32
    %c0_i32_1 = arith.constant 0 : i32
    return %c0_i32, %c0_i32_0, %arg0 : i32, i32, i32
  }
  func.func @transform_4(%arg0: i32, %arg1: i32) -> (i32, i32) {
    %c0_i32 = arith.constant 0 : i32
    %c0_i32_0 = arith.constant 0 : i32
    return %c0_i32, %arg0 : i32, i32
  }
}

</mosaic_0001>

<llo_original>
// kernel: tpu_custom_call.1
$region0: #{tpu_custom_call.1}
  #allocation0 [shape = 'u32[]', space=smem, size = 0x4, offset = 0x4, fixed_abs, tag = 'smem constant byte address 0x4 - core index']
  #allocation1 [shape = 'u32[72,128]{1,0:T(1,128)}', space=vmem, size = 0x9000, scoped, tag = 'internal scratch']
  #allocation2 [shape = 'f32[2,48,256]{2,1,0:T(8,128)}', space=vmem, size = 0x18000, scoped, tag = 'scratch operand']
  %s0 = inlined_call_operand.vmem [shape: f32[2,256], index: 0, kind: input, shape index: {}]
  %s1 = inlined_call_operand.vmem [shape: f32[16,1], index: 1, kind: input, shape index: {}]
  %s2 = inlined_call_operand.vmem [shape: bf16[96,16], index: 2, kind: input, shape index: {}]
  %s3 = inlined_call_operand.vmem [shape: f32[3,8,256], index: 3, kind: input, shape index: {}]
  %s4 = inlined_call_operand.hbm [shape: f32[8,256], index: 4, kind: output, shape index: {}]
  %s5 = sld [smem:[#allocation0]]
  $region34: #{tpu_custom_call.1} parent=0
    _
  %s7 = ssub.s32 1, %s5
  %s8 = scalar_select 0, %s7, %s5
  $region1: #{tpu_custom_call.1} parent=0
    #allocation3 [shape = 'u8[8192]{0}', space=vmem, size = 0x2000, scoped, tag = 'output window, operand 0, single buffered']
    #allocation4 [shape = 's32[1]{0}', space=sflag, size = 0x4, scoped, tag = 'scoped memory for tpu_custom_call.1']
    %9 = vsyncpa [#allocation4], 0
    // Predicated region
    $region2: #{tpu_custom_call.1} parent=1 // pred_check
      _
    $region3: #{tpu_custom_call.1} parent=1 // pred_check_branch
      %11 = sbr.rel (0) target = $region5
    $region4: #{tpu_custom_call.1} parent=1 // pred_region
      _
    $region5: #{tpu_custom_call.1} parent=1 // pred_fallthru
      _
    // Predicated region
    $region6: #{tpu_custom_call.1} parent=1 // pred_check
      _
    $region7: #{tpu_custom_call.1} parent=1 // pred_check_branch
      %13 = sbr.rel (0) target = $region9
    $region8: #{tpu_custom_call.1} parent=1 // pred_region
      _
    $region9: #{tpu_custom_call.1} parent=1 // pred_fallthru
      _
    // Predicated region
    $region10: #{tpu_custom_call.1} parent=1 // pred_check
      _
    $region11: #{tpu_custom_call.1} parent=1 // pred_check_branch
      %15 = sbr.rel (0) target = $region13
    $region12: #{tpu_custom_call.1} parent=1 // pred_region
      _
    $region13: #{tpu_custom_call.1} parent=1 // pred_fallthru
      _
    // Predicated region
    $region14: #{tpu_custom_call.1} parent=1 // pred_check
      _
    $region15: #{tpu_custom_call.1} parent=1 // pred_check_branch
      %17 = sbr.rel (0) target = $region17
    $region16: #{tpu_custom_call.1} parent=1 // pred_region
      _
    $region17: #{tpu_custom_call.1} parent=1 // pred_fallthru
      _
    %p19 = scmp.eq.s32.totalorder 0, 0
    // Predicated region
    $region18: #{tpu_custom_call.1} parent=1 // pred_check
      %p20 = pneg %p19
    $region19: #{tpu_custom_call.1} parent=1 // pred_check_branch
      %22 = sbr.rel (%p20) target = $region21
    $region20: #{tpu_custom_call.1} parent=1 // pred_region
      %23 = vst [vmem:[#allocation2] sm:$0xff] 0.0
      %24 = vst [vmem:[#allocation2 + $0x8] sm:$0xff] 0.0
      %25 = vst [vmem:[#allocation2 + $0x10] sm:$0xff] 0.0
      %26 = vst [vmem:[#allocation2 + $0x18] sm:$0xff] 0.0
      %27 = vst [vmem:[#allocation2 + $0x20] sm:$0xff] 0.0
      %28 = vst [vmem:[#allocation2 + $0x28] sm:$0xff] 0.0
      %29 = vst [vmem:[#allocation2 + $0x30] sm:$0xff] 0.0
      %30 = vst [vmem:[#allocation2 + $0x38] sm:$0xff] 0.0
      %31 = vst [vmem:[#allocation2 + $0x40] sm:$0xff] 0.0
      %32 = vst [vmem:[#allocation2 + $0x48] sm:$0xff] 0.0
      %33 = vst [vmem:[#allocation2 + $0x50] sm:$0xff] 0.0
      %34 = vst [vmem:[#allocation2 + $0x58] sm:$0xff] 0.0
      %35 = vst [vmem:[#allocation2 + $0x60] sm:$0xff] 0.0
      %36 = vst [vmem:[#allocation2 + $0x68] sm:$0xff] 0.0
      %37 = vst [vmem:[#allocation2 + $0x70] sm:$0xff] 0.0
      %38 = vst [vmem:[#allocation2 + $0x78] sm:$0xff] 0.0
      %39 = vst [vmem:[#allocation2 + $0x80] sm:$0xff] 0.0
      %40 = vst [vmem:[#allocation2 + $0x88] sm:$0xff] 0.0
      %41 = vst [vmem:[#allocation2 + $0x90] sm:$0xff] 0.0
      %42 = vst [vmem:[#allocation2 + $0x98] sm:$0xff] 0.0
      %43 = vst [vmem:[#allocation2 + $0xa0] sm:$0xff] 0.0
      %44 = vst [vmem:[#allocation2 + $0xa8] sm:$0xff] 0.0
      %45 = vst [vmem:[#allocation2 + $0xb0] sm:$0xff] 0.0
      %46 = vst [vmem:[#allocation2 + $0xb8] sm:$0xff] 0.0
    $region21: #{tpu_custom_call.1} parent=1 // pred_fallthru
      _
    %v47 = vld [vmem:[%s1] sm:$0xff]
    %v48 = vld [vmem:[%s1 + $0x8] sm:$0xff]
    %v49 = vld [vmem:[%s0] ss:$2 sm:$0x3]
    %51 = vset.pattern.permute.xlu0 0
    %52 = vperm.xlu0 %51, %v47
    %v53 = vpop.permute.xlu0 %52
    %56 = vset.pattern.permute.xlu0 0
    %57 = vperm.xlu0 %56, %v48
    %v58 = vpop.permute.xlu0 %57
    %v61 = vperm.slane %v49, 0
    %v62 = vperm.slane %v49, 1
    %v65 = vmul.f32 %v53, %v61
    %v66 = vmul.f32 %v53, %v62
    %v67 = vmul.f32 %v58, %v61
    %v68 = vmul.f32 %v58, %v62
    %v69 = vfloor.f32 %v65
    %v70 = vfloor.f32 %v66
    %v71 = vfloor.f32 %v67
    %v72 = vfloor.f32 %v68
    %v73 = vsub.f32 %v65, %v69
    %v74 = vsub.f32 %v66, %v70
    %v75 = vsub.f32 %v67, %v71
    %v76 = vsub.f32 %v68, %v72
    %v77 = vfloor.f32 %v73
    %v78 = vfloor.f32 %v74
    %v79 = vfloor.f32 %v75
    %v80 = vfloor.f32 %v76
    %v81 = vsub.f32 %v73, %v77
    %v82 = vsub.f32 %v74, %v78
    %v83 = vsub.f32 %v75, %v79
    %v84 = vsub.f32 %v76, %v80
    %v85 = vmul.f32 %v81, -6.2831855
    %v86 = vmul.f32 %v82, -6.2831855
    %v87 = vmul.f32 %v83, -6.2831855
    %v88 = vmul.f32 %v84, -6.2831855
    %v89 = vand.u32 2147483647, %v85
    %vm90 = vcmp.le.f32.partialorder %v89, 0.7853982
    %vm91 = vcmp.lt.s32.totalorder %v85, 0
    %v92 = vand.u32 %v85, 2139095040
    %v93 = vshrl.u32 %v92, 23
    %v94 = vsub.s32 %v93, 127
    %v95 = vand.u32 2147483647, %v85
    %v96 = vand.u32 %v95, 8388607
    %v97 = vor.u32 %v96, 8388608
    %v98 = vsub.s32 0, %v97
    %v99 = vadd.s32 %v94, 1
    %vm100 = vcmp.gt.s32.totalorder %v99, 0
    %v101 = vsel %vm100, %v99, 0
    %v102 = vshrl.u32 %v101, 5
    %v103 = vand.u32 %v101, 31
    %v104 = vsub.s32 32, %v103
    %v105 = vshrl.u32 683565275, %v104
    %v106 = vshll.u32 683565275, %v103
    %v107 = vshrl.u32 2475754826, %v104
    %v108 = vor.u32 %v106, %v107
    %v109 = vshll.u32 2475754826, %v103
    %v110 = vshrl.u32 2131351028, %v104
    %v111 = vor.u32 %v109, %v110
    %v112 = vshll.u32 2131351028, %v103
    %v113 = vshrl.u32 2102212464, %v104
    %v114 = vor.u32 %v112, %v113
    %v115 = vshll.u32 2102212464, %v103
    %v116 = vshrl.u32 920167782, %v104
    %v117 = vor.u32 %v115, %v116
    %v118 = vshll.u32 920167782, %v103
    %v119 = vshrl.u32 1326507024, %v104
    %v120 = vor.u32 %v118, %v119
    %vm121 = vcmp.lt.s32.totalorder %v102, 1
    %vm122 = vcmp.lt.s32.totalorder %v102, 2
    %vm123 = vcmp.lt.s32.totalorder %v102, 3
    %vm124 = vcmp.lt.s32.totalorder %v102, 4
    %v125 = vsel %vm121, %v105, %v108
    %v126 = vsel %vm124, %v114, 2102212464
    %v127 = vsel %vm123, %v111, %v126
    %v128 = vsel %vm122, %v125, %v127
    %v129 = vsel %vm121, %v108, %v111
    %v130 = vsel %vm124, %v117, 920167782
    %v131 = vsel %vm123, %v114, %v130
    %v132 = vsel %vm122, %v129, %v131
    %v133 = vsel %vm121, %v111, %v114
    %v134 = vsel %vm124, %v120, 1326507024
    %v135 = vsel %vm123, %v117, %v134
    %v136 = vsel %vm122, %v133, %v135
    %v137 = vshll.u32 %v97, 8
    %v138 = vand.u32 %v137, 65535
    %v139 = vshrl.u32 %v137, 16
    %v140 = vand.u32 %v136, 65535
    %v141 = vshrl.u32 %v136, 16
    %v142 = vmul.u32 %v138, %v140
    %v143 = vmul.u32 %v138, %v141
    %v144 = vmul.u32 %v139, %v140
    %v145 = vmul.u32 %v139, %v141
    %v146 = vshll.u32 %v143, 16
    %v147 = vshrl.u32 %v143, 16
    %v148 = vshll.u32 %v144, 16
    %v149 = vshrl.u32 %v144, 16
    %vm150 = vc.u32 %v142, %v146
    %v151 = vsel %vm150, 1, 0
    %v152 = vadd.s32 %v142, %v146
    %v153 = vadd.s32 %v145, %v151
    %vm154 = vc.u32 %v152, %v148
    %v155 = vsel %vm154, 1, 0
    %v156 = vadd.s32 %v152, %v148
    %v157 = vadd.s32 %v153, %v155
    %v158 = vadd.s32 %v157, %v147
    %v159 = vadd.s32 %v158, %v149
    %v160 = vand.u32 %v137, 65535
    %v161 = vshrl.u32 %v137, 16
    %v162 = vand.u32 %v132, 65535
    %v163 = vshrl.u32 %v132, 16
    %v164 = vmul.u32 %v160, %v162
    %v165 = vmul.u32 %v160, %v163
    %v166 = vmul.u32 %v161, %v162
    %v167 = vmul.u32 %v161, %v163
    %v168 = vshll.u32 %v165, 16
    %v169 = vshrl.u32 %v165, 16
    %v170 = vshll.u32 %v166, 16
    %v171 = vshrl.u32 %v166, 16
    %vm172 = vc.u32 %v164, %v168
    %v173 = vsel %vm172, 1, 0
    %v174 = vadd.s32 %v164, %v168
    %v175 = vadd.s32 %v167, %v173
    %vm176 = vc.u32 %v174, %v170
    %v177 = vsel %vm176, 1, 0
    %v178 = vadd.s32 %v174, %v170
    %v179 = vadd.s32 %v175, %v177
    %v180 = vadd.s32 %v179, %v169
    %v181 = vadd.s32 %v180, %v171
    %v182 = vmul.u32 %v137, %v128
    %v183 = vadd.s32 %v159, %v178
    %vm184 = vc.u32 %v159, %v178
    %v185 = vadd.s32 %v181, 1
    %v186 = vsel %vm184, %v185, %v181
    %v187 = vadd.s32 %v182, %v186
    %v188 = vadd.s32 %v187, 536870912
    %v189 = vshrl.u32 %v188, 30
    %v190 = vshll.u32 %v189, 30
    %v191 = vsub.s32 %v187, %v190
    %vm192 = vcmp.lt.s32.totalorder %v191, 0
    %v193 = vsub.s32 0, %v191
    %v194 = vsel %vm192, %v193, %v191
    %v195 = vclz %v194
    %v196 = vsub.s32 %v195, 2
    %vm197 = vcmp.gt.s32.totalorder 0, %v196
    %v198 = vsel %vm197, 0, %v196
    %v199 = vsub.s32 32, %v198
    %v200 = vshll.u32 %v191, %v198
    %v201 = vshrl.u32 %v183, %v199
    %v202 = vor.u32 %v200, %v201
    %v203 = vsub.s32 4294967266, %v198
    %v204 = vadd.s32 %v203, 127
    %v205 = vshll.u32 %v204, 23
    %v206 = vor.u32 4788187, %v205
    %v207 = vand.u32 2147483647, %v206
    %v209 = vcvt.s32.f32 %v202
    %v210 = vmul.f32 %v209, %v207
    %v211 = vxor.u32 %v210, 2147483648
    %v212 = vsel %vm91, %v211, %v210
    %v213 = vsub.s32 4, %v189
    %v214 = vsel %vm91, %v213, %v189
    %v215 = vsel %vm90, %v85, %v212
    %v216 = vsel %vm90, 0, %v214
    %v217 = vmul.f32 %v215, %v215
    %v218 = vmul.f32 %v217, -0.001358992
    %v219 = vadd.f32 %v218, 0.041655596
    %v220 = vmul.f32 %v217, %v219
    %v221 = vadd.f32 %v220, -0.4999988
    %v222 = vmul.f32 %v217, %v221
    %v223 = vadd.f32 1.0, %v222
    %v224 = vmul.f32 %v215, %v215
    %v225 = vmul.f32 %v224, -0.00019511016
    %v226 = vadd.f32 %v225, 0.008332121
    %v227 = vmul.f32 %v224, %v226
    %v228 = vadd.f32 %v227, -0.16666654
    %v229 = vmul.f32 %v224, %v228
    %v230 = vadd.f32 %v229, 1.0
    %v231 = vmul.f32 %v230, %v215
    %vm232 = vweird.f32 %v85
    %v233 = vand.u32 %v216, 3
    %vm234 = vcmp.lt.s32.totalorder %v233, 2
    %vm235 = vcmp.eq.s32.totalorder %v233, 0
    %v236 = vxor.u32 %v231, 2147483648
    %v237 = vsel %vm235, %v223, %v236
    %vm238 = vcmp.eq.s32.totalorder %v233, 2
    %v239 = vxor.u32 %v223, 2147483648
    %v240 = vsel %vm238, %v239, %v231
    %v241 = vsel %vm234, %v237, %v240
    %v242 = vsel %vm232, nan, %v241
    %v243 = vand.u32 2147483647, %v86
    %vm244 = vcmp.le.f32.partialorder %v243, 0.7853982
    %vm245 = vcmp.lt.s32.totalorder %v86, 0
    %v246 = vand.u32 %v86, 2139095040
    %v247 = vshrl.u32 %v246, 23
    %v248 = vsub.s32 %v247, 127
    %v249 = vand.u32 2147483647, %v86
    %v250 = vand.u32 %v249, 8388607
    %v251 = vor.u32 %v250, 8388608
    %v252 = vsub.s32 0, %v251
    %v253 = vadd.s32 %v248, 1
    %vm254 = vcmp.gt.s32.totalorder %v253, 0
    %v255 = vsel %vm254, %v253, 0
    %v256 = vshrl.u32 %v255, 5
    %v257 = vand.u32 %v255, 31
    %v258 = vsub.s32 32, %v257
    %v259 = vshrl.u32 683565275, %v258
    %v260 = vshll.u32 683565275, %v257
    %v261 = vshrl.u32 2475754826, %v258
    %v262 = vor.u32 %v260, %v261
    %v263 = vshll.u32 2475754826, %v257
    %v264 = vshrl.u32 2131351028, %v258
    %v265 = vor.u32 %v263, %v264
    %v266 = vshll.u32 2131351028, %v257
    %v267 = vshrl.u32 2102212464, %v258
    %v268 = vor.u32 %v266, %v267
    %v269 = vshll.u32 2102212464, %v257
    %v270 = vshrl.u32 920167782, %v258
    %v271 = vor.u32 %v269, %v270
    %v272 = vshll.u32 920167782, %v257
    %v273 = vshrl.u32 1326507024, %v258
    %v274 = vor.u32 %v272, %v273
    %vm275 = vcmp.lt.s32.totalorder %v256, 1
    %vm276 = vcmp.lt.s32.totalorder %v256, 2
    %vm277 = vcmp.lt.s32.totalorder %v256, 3
    %vm278 = vcmp.lt.s32.totalorder %v256, 4
    %v279 = vsel %vm275, %v259, %v262
    %v280 = vsel %vm278, %v268, 2102212464
    %v281 = vsel %vm277, %v265, %v280
    %v282 = vsel %vm276, %v279, %v281
    %v283 = vsel %vm275, %v262, %v265
    %v284 = vsel %vm278, %v271, 920167782
    %v285 = vsel %vm277, %v268, %v284
    %v286 = vsel %vm276, %v283, %v285
    %v287 = vsel %vm275, %v265, %v268
    %v288 = vsel %vm278, %v274, 1326507024
    %v289 = vsel %vm277, %v271, %v288
    %v290 = vsel %vm276, %v287, %v289
    %v291 = vshll.u32 %v251, 8
    %v292 = vand.u32 %v291, 65535
    %v293 = vshrl.u32 %v291, 16
    %v294 = vand.u32 %v290, 65535
    %v295 = vshrl.u32 %v290, 16
    %v296 = vmul.u32 %v292, %v294
    %v297 = vmul.u32 %v292, %v295
    %v298 = vmul.u32 %v293, %v294
    %v299 = vmul.u32 %v293, %v295
    %v300 = vshll.u32 %v297, 16
    %v301 = vshrl.u32 %v297, 16
    %v302 = vshll.u32 %v298, 16
    %v303 = vshrl.u32 %v298, 16
    %vm304 = vc.u32 %v296, %v300
    %v305 = vsel %vm304, 1, 0
    %v306 = vadd.s32 %v296, %v300
    %v307 = vadd.s32 %v299, %v305
    %vm308 = vc.u32 %v306, %v302
    %v309 = vsel %vm308, 1, 0
    %v310 = vadd.s32 %v306, %v302
    %v311 = vadd.s32 %v307, %v309
    %v312 = vadd.s32 %v311, %v301
    %v313 = vadd.s32 %v312, %v303
    %v314 = vand.u32 %v291, 65535
    %v315 = vshrl.u32 %v291, 16
    %v316 = vand.u32 %v286, 65535
    %v317 = vshrl.u32 %v286, 16
    %v318 = vmul.u32 %v314, %v316
    %v319 = vmul.u32 %v314, %v317
    %v320 = vmul.u32 %v315, %v316
    %v321 = vmul.u32 %v315, %v317
    %v322 = vshll.u32 %v319, 16
    %v323 = vshrl.u32 %v319, 16
    %v324 = vshll.u32 %v320, 16
    %v325 = vshrl.u32 %v320, 16
    %vm326 = vc.u32 %v318, %v322
    %v327 = vsel %vm326, 1, 0
    %v328 = vadd.s32 %v318, %v322
    %v329 = vadd.s32 %v321, %v327
    %vm330 = vc.u32 %v328, %v324
    %v331 = vsel %vm330, 1, 0
    %v332 = vadd.s32 %v328, %v324
    %v333 = vadd.s32 %v329, %v331
    %v334 = vadd.s32 %v333, %v323
    %v335 = vadd.s32 %v334, %v325
    %v336 = vmul.u32 %v291, %v282
    %v337 = vadd.s32 %v313, %v332
    %vm338 = vc.u32 %v313, %v332
    %v339 = vadd.s32 %v335, 1
    %v340 = vsel %vm338, %v339, %v335
    %v341 = vadd.s32 %v336, %v340
    %v342 = vadd.s32 %v341, 536870912
    %v343 = vshrl.u32 %v342, 30
    %v344 = vshll.u32 %v343, 30
    %v345 = vsub.s32 %v341, %v344
    %vm346 = vcmp.lt.s32.totalorder %v345, 0
    %v347 = vsub.s32 0, %v345
    %v348 = vsel %vm346, %v347, %v345
    %v349 = vclz %v348
    %v350 = vsub.s32 %v349, 2
    %vm351 = vcmp.gt.s32.totalorder 0, %v350
    %v352 = vsel %vm351, 0, %v350
    %v353 = vsub.s32 32, %v352
    %v354 = vshll.u32 %v345, %v352
    %v355 = vshrl.u32 %v337, %v353
    %v356 = vor.u32 %v354, %v355
    %v357 = vsub.s32 4294967266, %v352
    %v358 = vadd.s32 %v357, 127
    %v359 = vshll.u32 %v358, 23
    %v360 = vor.u32 4788187, %v359
    %v361 = vand.u32 2147483647, %v360
    %v363 = vcvt.s32.f32 %v356
    %v364 = vmul.f32 %v363, %v361
    %v365 = vxor.u32 %v364, 2147483648
    %v366 = vsel %vm245, %v365, %v364
    %v367 = vsub.s32 4, %v343
    %v368 = vsel %vm245, %v367, %v343
    %v369 = vsel %vm244, %v86, %v366
    %v370 = vsel %vm244, 0, %v368
    %v371 = vmul.f32 %v369, %v369
    %v372 = vmul.f32 %v371, -0.001358992
    %v373 = vadd.f32 %v372, 0.041655596
    %v374 = vmul.f32 %v371, %v373
    %v375 = vadd.f32 %v374, -0.4999988
    %v376 = vmul.f32 %v371, %v375
    %v377 = vadd.f32 1.0, %v376
    %v378 = vmul.f32 %v369, %v369
    %v379 = vmul.f32 %v378, -0.00019511016
    %v380 = vadd.f32 %v379, 0.008332121
    %v381 = vmul.f32 %v378, %v380
    %v382 = vadd.f32 %v381, -0.16666654
    %v383 = vmul.f32 %v378, %v382
    %v384 = vadd.f32 %v383, 1.0
    %v385 = vmul.f32 %v384, %v369
    %vm386 = vweird.f32 %v86
    %v387 = vand.u32 %v370, 3
    %vm388 = vcmp.lt.s32.totalorder %v387, 2
    %vm389 = vcmp.eq.s32.totalorder %v387, 0
    %v390 = vxor.u32 %v385, 2147483648
    %v391 = vsel %vm389, %v377, %v390
    %vm392 = vcmp.eq.s32.totalorder %v387, 2
    %v393 = vxor.u32 %v377, 2147483648
    %v394 = vsel %vm392, %v393, %v385
    %v395 = vsel %vm388, %v391, %v394
    %v396 = vsel %vm386, nan, %v395
    %v397 = vand.u32 2147483647, %v87
    %vm398 = vcmp.le.f32.partialorder %v397, 0.7853982
    %vm399 = vcmp.lt.s32.totalorder %v87, 0
    %v400 = vand.u32 %v87, 2139095040
    %v401 = vshrl.u32 %v400, 23
    %v402 = vsub.s32 %v401, 127
    %v403 = vand.u32 2147483647, %v87
    %v404 = vand.u32 %v403, 8388607
    %v405 = vor.u32 %v404, 8388608
    %v406 = vsub.s32 0, %v405
    %v407 = vadd.s32 %v402, 1
    %vm408 = vcmp.gt.s32.totalorder %v407, 0
    %v409 = vsel %vm408, %v407, 0
    %v410 = vshrl.u32 %v409, 5
    %v411 = vand.u32 %v409, 31
    %v412 = vsub.s32 32, %v411
    %v413 = vshrl.u32 683565275, %v412
    %v414 = vshll.u32 683565275, %v411
    %v415 = vshrl.u32 2475754826, %v412
    %v416 = vor.u32 %v414, %v415
    %v417 = vshll.u32 2475754826, %v411
    %v418 = vshrl.u32 2131351028, %v412
    %v419 = vor.u32 %v417, %v418
    %v420 = vshll.u32 2131351028, %v411
    %v421 = vshrl.u32 2102212464, %v412
    %v422 = vor.u32 %v420, %v421
    %v423 = vshll.u32 2102212464, %v411
    %v424 = vshrl.u32 920167782, %v412
    %v425 = vor.u32 %v423, %v424
    %v426 = vshll.u32 920167782, %v411
    %v427 = vshrl.u32 1326507024, %v412
    %v428 = vor.u32 %v426, %v427
    %vm429 = vcmp.lt.s32.totalorder %v410, 1
    %vm430 = vcmp.lt.s32.totalorder %v410, 2
    %vm431 = vcmp.lt.s32.totalorder %v410, 3
    %vm432 = vcmp.lt.s32.totalorder %v410, 4
    %v433 = vsel %vm429, %v413, %v416
    %v434 = vsel %vm432, %v422, 2102212464
    %v435 = vsel %vm431, %v419, %v434
    %v436 = vsel %vm430, %v433, %v435
    %v437 = vsel %vm429, %v416, %v419
    %v438 = vsel %vm432, %v425, 920167782
    %v439 = vsel %vm431, %v422, %v438
    %v440 = vsel %vm430, %v437, %v439
    %v441 = vsel %vm429, %v419, %v422
    %v442 = vsel %vm432, %v428, 1326507024
    %v443 = vsel %vm431, %v425, %v442
    %v444 = vsel %vm430, %v441, %v443
    %v445 = vshll.u32 %v405, 8
    %v446 = vand.u32 %v445, 65535
    %v447 = vshrl.u32 %v445, 16
    %v448 = vand.u32 %v444, 65535
    %v449 = vshrl.u32 %v444, 16
    %v450 = vmul.u32 %v446, %v448
    %v451 = vmul.u32 %v446, %v449
    %v452 = vmul.u32 %v447, %v448
    %v453 = vmul.u32 %v447, %v449
    %v454 = vshll.u32 %v451, 16
    %v455 = vshrl.u32 %v451, 16
    %v456 = vshll.u32 %v452, 16
    %v457 = vshrl.u32 %v452, 16
    %vm458 = vc.u32 %v450, %v454
    %v459 = vsel %vm458, 1, 0
    %v460 = vadd.s32 %v450, %v454
    %v461 = vadd.s32 %v453, %v459
    %vm462 = vc.u32 %v460, %v456
    %v463 = vsel %vm462, 1, 0
    %v464 = vadd.s32 %v460, %v456
    %v465 = vadd.s32 %v461, %v463
    %v466 = vadd.s32 %v465, %v455
    %v467 = vadd.s32 %v466, %v457
    %v468 = vand.u32 %v445, 65535
    %v469 = vshrl.u32 %v445, 16
    %v470 = vand.u32 %v440, 65535
    %v471 = vshrl.u32 %v440, 16
    %v472 = vmul.u32 %v468, %v470
    %v473 = vmul.u32 %v468, %v471
    %v474 = vmul.u32 %v469, %v470
    %v475 = vmul.u32 %v469, %v471
    %v476 = vshll.u32 %v473, 16
    %v477 = vshrl.u32 %v473, 16
    %v478 = vshll.u32 %v474, 16
    %v479 = vshrl.u32 %v474, 16
    %vm480 = vc.u32 %v472, %v476
    %v481 = vsel %vm480, 1, 0
    %v482 = vadd.s32 %v472, %v476
    %v483 = vadd.s32 %v475, %v481
    %vm484 = vc.u32 %v482, %v478
    %v485 = vsel %vm484, 1, 0
    %v486 = vadd.s32 %v482, %v478
    %v487 = vadd.s32 %v483, %v485
    %v488 = vadd.s32 %v487, %v477
    %v489 = vadd.s32 %v488, %v479
    %v490 = vmul.u32 %v445, %v436
    %v491 = vadd.s32 %v467, %v486
    %vm492 = vc.u32 %v467, %v486
    %v493 = vadd.s32 %v489, 1
    %v494 = vsel %vm492, %v493, %v489
    %v495 = vadd.s32 %v490, %v494
    %v496 = vadd.s32 %v495, 536870912
    %v497 = vshrl.u32 %v496, 30
    %v498 = vshll.u32 %v497, 30
    %v499 = vsub.s32 %v495, %v498
    %vm500 = vcmp.lt.s32.totalorder %v499, 0
    %v501 = vsub.s32 0, %v499
    %v502 = vsel %vm500, %v501, %v499
    %v503 = vclz %v502
    %v504 = vsub.s32 %v503, 2
    %vm505 = vcmp.gt.s32.totalorder 0, %v504
    %v506 = vsel %vm505, 0, %v504
    %v507 = vsub.s32 32, %v506
    %v508 = vshll.u32 %v499, %v506
    %v509 = vshrl.u32 %v491, %v507
    %v510 = vor.u32 %v508, %v509
    %v511 = vsub.s32 4294967266, %v506
    %v512 = vadd.s32 %v511, 127
    %v513 = vshll.u32 %v512, 23
    %v514 = vor.u32 4788187, %v513
    %v515 = vand.u32 2147483647, %v514
    %v517 = vcvt.s32.f32 %v510
    %v518 = vmul.f32 %v517, %v515
    %v519 = vxor.u32 %v518, 2147483648
    %v520 = vsel %vm399, %v519, %v518
    %v521 = vsub.s32 4, %v497
    %v522 = vsel %vm399, %v521, %v497
    %v523 = vsel %vm398, %v87, %v520
    %v524 = vsel %vm398, 0, %v522
    %v525 = vmul.f32 %v523, %v523
    %v526 = vmul.f32 %v525, -0.001358992
    %v527 = vadd.f32 %v526, 0.041655596
    %v528 = vmul.f32 %v525, %v527
    %v529 = vadd.f32 %v528, -0.4999988
    %v530 = vmul.f32 %v525, %v529
    %v531 = vadd.f32 1.0, %v530
    %v532 = vmul.f32 %v523, %v523
    %v533 = vmul.f32 %v532, -0.00019511016
    %v534 = vadd.f32 %v533, 0.008332121
    %v535 = vmul.f32 %v532, %v534
    %v536 = vadd.f32 %v535, -0.16666654
    %v537 = vmul.f32 %v532, %v536
    %v538 = vadd.f32 %v537, 1.0
    %v539 = vmul.f32 %v538, %v523
    %vm540 = vweird.f32 %v87
    %v541 = vand.u32 %v524, 3
    %vm542 = vcmp.lt.s32.totalorder %v541, 2
    %vm543 = vcmp.eq.s32.totalorder %v541, 0
    %v544 = vxor.u32 %v539, 2147483648
    %v545 = vsel %vm543, %v531, %v544
    %vm546 = vcmp.eq.s32.totalorder %v541, 2
    %v547 = vxor.u32 %v531, 2147483648
    %v548 = vsel %vm546, %v547, %v539
    %v549 = vsel %vm542, %v545, %v548
    %v550 = vsel %vm540, nan, %v549
    %v551 = vand.u32 2147483647, %v88
    %vm552 = vcmp.le.f32.partialorder %v551, 0.7853982
    %vm553 = vcmp.lt.s32.totalorder %v88, 0
    %v554 = vand.u32 %v88, 2139095040
    %v555 = vshrl.u32 %v554, 23
    %v556 = vsub.s32 %v555, 127
    %v557 = vand.u32 2147483647, %v88
    %v558 = vand.u32 %v557, 8388607
    %v559 = vor.u32 %v558, 8388608
    %v560 = vsub.s32 0, %v559
    %v561 = vadd.s32 %v556, 1
    %vm562 = vcmp.gt.s32.totalorder %v561, 0
    %v563 = vsel %vm562, %v561, 0
    %v564 = vshrl.u32 %v563, 5
    %v565 = vand.u32 %v563, 31
    %v566 = vsub.s32 32, %v565
    %v567 = vshrl.u32 683565275, %v566
    %v568 = vshll.u32 683565275, %v565
    %v569 = vshrl.u32 2475754826, %v566
    %v570 = vor.u32 %v568, %v569
    %v571 = vshll.u32 2475754826, %v565
    %v572 = vshrl.u32 2131351028, %v566
    %v573 = vor.u32 %v571, %v572
    %v574 = vshll.u32 2131351028, %v565
    %v575 = vshrl.u32 2102212464, %v566
    %v576 = vor.u32 %v574, %v575
    %v577 = vshll.u32 2102212464, %v565
    %v578 = vshrl.u32 920167782, %v566
    %v579 = vor.u32 %v577, %v578
    %v580 = vshll.u32 920167782, %v565
    %v581 = vshrl.u32 1326507024, %v566
    %v582 = vor.u32 %v580, %v581
    %vm583 = vcmp.lt.s32.totalorder %v564, 1
    %vm584 = vcmp.lt.s32.totalorder %v564, 2
    %vm585 = vcmp.lt.s32.totalorder %v564, 3
    %vm586 = vcmp.lt.s32.totalorder %v564, 4
    %v587 = vsel %vm583, %v567, %v570
    %v588 = vsel %vm586, %v576, 2102212464
    %v589 = vsel %vm585, %v573, %v588
    %v590 = vsel %vm584, %v587, %v589
    %v591 = vsel %vm583, %v570, %v573
    %v592 = vsel %vm586, %v579, 920167782
    %v593 = vsel %vm585, %v576, %v592
    %v594 = vsel %vm584, %v591, %v593
    %v595 = vsel %vm583, %v573, %v576
    %v596 = vsel %vm586, %v582, 1326507024
    %v597 = vsel %vm585, %v579, %v596
    %v598 = vsel %vm584, %v595, %v597
    %v599 = vshll.u32 %v559, 8
    %v600 = vand.u32 %v599, 65535
    %v601 = vshrl.u32 %v599, 16
    %v602 = vand.u32 %v598, 65535
    %v603 = vshrl.u32 %v598, 16
    %v604 = vmul.u32 %v600, %v602
    %v605 = vmul.u32 %v600, %v603
    %v606 = vmul.u32 %v601, %v602
    %v607 = vmul.u32 %v601, %v603
    %v608 = vshll.u32 %v605, 16
    %v609 = vshrl.u32 %v605, 16
    %v610 = vshll.u32 %v606, 16
    %v611 = vshrl.u32 %v606, 16
    %vm612 = vc.u32 %v604, %v608
    %v613 = vsel %vm612, 1, 0
    %v614 = vadd.s32 %v604, %v608
    %v615 = vadd.s32 %v607, %v613
    %vm616 = vc.u32 %v614, %v610
    %v617 = vsel %vm616, 1, 0
    %v618 = vadd.s32 %v614, %v610
    %v619 = vadd.s32 %v615, %v617
    %v620 = vadd.s32 %v619, %v609
    %v621 = vadd.s32 %v620, %v611
    %v622 = vand.u32 %v599, 65535
    %v623 = vshrl.u32 %v599, 16
    %v624 = vand.u32 %v594, 65535
    %v625 = vshrl.u32 %v594, 16
    %v626 = vmul.u32 %v622, %v624
    %v627 = vmul.u32 %v622, %v625
    %v628 = vmul.u32 %v623, %v624
    %v629 = vmul.u32 %v623, %v625
    %v630 = vshll.u32 %v627, 16
    %v631 = vshrl.u32 %v627, 16
    %v632 = vshll.u32 %v628, 16
    %v633 = vshrl.u32 %v628, 16
    %vm634 = vc.u32 %v626, %v630
    %v635 = vsel %vm634, 1, 0
    %v636 = vadd.s32 %v626, %v630
    %v637 = vadd.s32 %v629, %v635
    %vm638 = vc.u32 %v636, %v632
    %v639 = vsel %vm638, 1, 0
    %v640 = vadd.s32 %v636, %v632
    %v641 = vadd.s32 %v637, %v639
    %v642 = vadd.s32 %v641, %v631
    %v643 = vadd.s32 %v642, %v633
    %v644 = vmul.u32 %v599, %v590
    %v645 = vadd.s32 %v621, %v640
    %vm646 = vc.u32 %v621, %v640
    %v647 = vadd.s32 %v643, 1
    %v648 = vsel %vm646, %v647, %v643
    %v649 = vadd.s32 %v644, %v648
    %v650 = vadd.s32 %v649, 536870912
    %v651 = vshrl.u32 %v650, 30
    %v652 = vshll.u32 %v651, 30
    %v653 = vsub.s32 %v649, %v652
    %vm654 = vcmp.lt.s32.totalorder %v653, 0
    %v655 = vsub.s32 0, %v653
    %v656 = vsel %vm654, %v655, %v653
    %v657 = vclz %v656
    %v658 = vsub.s32 %v657, 2
    %vm659 = vcmp.gt.s32.totalorder 0, %v658
    %v660 = vsel %vm659, 0, %v658
    %v661 = vsub.s32 32, %v660
    %v662 = vshll.u32 %v653, %v660
    %v663 = vshrl.u32 %v645, %v661
    %v664 = vor.u32 %v662, %v663
    %v665 = vsub.s32 4294967266, %v660
    %v666 = vadd.s32 %v665, 127
    %v667 = vshll.u32 %v666, 23
    %v668 = vor.u32 4788187, %v667
    %v669 = vand.u32 2147483647, %v668
    %v671 = vcvt.s32.f32 %v664
    %v672 = vmul.f32 %v671, %v669
    %v673 = vxor.u32 %v672, 2147483648
    %v674 = vsel %vm553, %v673, %v672
    %v675 = vsub.s32 4, %v651
    %v676 = vsel %vm553, %v675, %v651
    %v677 = vsel %vm552, %v88, %v674
    %v678 = vsel %vm552, 0, %v676
    %v679 = vmul.f32 %v677, %v677
    %v680 = vmul.f32 %v679, -0.001358992
    %v681 = vadd.f32 %v680, 0.041655596
    %v682 = vmul.f32 %v679, %v681
    %v683 = vadd.f32 %v682, -0.4999988
    %v684 = vmul.f32 %v679, %v683
    %v685 = vadd.f32 1.0, %v684
    %v686 = vmul.f32 %v677, %v677
    %v687 = vmul.f32 %v686, -0.00019511016
    %v688 = vadd.f32 %v687, 0.008332121
    %v689 = vmul.f32 %v686, %v688
    %v690 = vadd.f32 %v689, -0.16666654
    %v691 = vmul.f32 %v686, %v690
    %v692 = vadd.f32 %v691, 1.0
    %v693 = vmul.f32 %v692, %v677
    %vm694 = vweird.f32 %v88
    %v695 = vand.u32 %v678, 3
    %vm696 = vcmp.lt.s32.totalorder %v695, 2
    %vm697 = vcmp.eq.s32.totalorder %v695, 0
    %v698 = vxor.u32 %v693, 2147483648
    %v699 = vsel %vm697, %v685, %v698
    %vm700 = vcmp.eq.s32.totalorder %v695, 2
    %v701 = vxor.u32 %v685, 2147483648
    %v702 = vsel %vm700, %v701, %v693
    %v703 = vsel %vm696, %v699, %v702
    %v704 = vsel %vm694, nan, %v703
    %v705 = vand.u32 2147483647, %v85
    %vm706 = vcmp.le.f32.partialorder %v705, 0.7853982
    %vm707 = vcmp.lt.s32.totalorder %v85, 0
    %v708 = vand.u32 %v85, 2139095040
    %v709 = vshrl.u32 %v708, 23
    %v710 = vsub.s32 %v709, 127
    %v711 = vand.u32 2147483647, %v85
    %v712 = vand.u32 %v711, 8388607
    %v713 = vor.u32 %v712, 8388608
    %v714 = vsub.s32 0, %v713
    %v715 = vadd.s32 %v710, 1
    %vm716 = vcmp.gt.s32.totalorder %v715, 0
    %v717 = vsel %vm716, %v715, 0
    %v718 = vshrl.u32 %v717, 5
    %v719 = vand.u32 %v717, 31
    %v720 = vsub.s32 32, %v719
    %v721 = vshrl.u32 683565275, %v720
    %v722 = vshll.u32 683565275, %v719
    %v723 = vshrl.u32 2475754826, %v720
    %v724 = vor.u32 %v722, %v723
    %v725 = vshll.u32 2475754826, %v719
    %v726 = vshrl.u32 2131351028, %v720
    %v727 = vor.u32 %v725, %v726
    %v728 = vshll.u32 2131351028, %v719
    %v729 = vshrl.u32 2102212464, %v720
    %v730 = vor.u32 %v728, %v729
    %v731 = vshll.u32 2102212464, %v719
    %v732 = vshrl.u32 920167782, %v720
    %v733 = vor.u32 %v731, %v732
    %v734 = vshll.u32 920167782, %v719
    %v735 = vshrl.u32 1326507024, %v720
    %v736 = vor.u32 %v734, %v735
    %vm737 = vcmp.lt.s32.totalorder %v718, 1
    %vm738 = vcmp.lt.s32.totalorder %v718, 2
    %vm739 = vcmp.lt.s32.totalorder %v718, 3
    %vm740 = vcmp.lt.s32.totalorder %v718, 4
    %v741 = vsel %vm737, %v721, %v724
    %v742 = vsel %vm740, %v730, 2102212464
    %v743 = vsel %vm739, %v727, %v742
    %v744 = vsel %vm738, %v741, %v743
    %v745 = vsel %vm737, %v724, %v727
    %v746 = vsel %vm740, %v733, 920167782
    %v747 = vsel %vm739, %v730, %v746
    %v748 = vsel %vm738, %v745, %v747
    %v749 = vsel %vm737, %v727, %v730
    %v750 = vsel %vm740, %v736, 1326507024
    %v751 = vsel %vm739, %v733, %v750
    %v752 = vsel %vm738, %v749, %v751
    %v753 = vshll.u32 %v713, 8
    %v754 = vand.u32 %v753, 65535
    %v755 = vshrl.u32 %v753, 16
    %v756 = vand.u32 %v752, 65535
    %v757 = vshrl.u32 %v752, 16
    %v758 = vmul.u32 %v754, %v756
    %v759 = vmul.u32 %v754, %v757
    %v760 = vmul.u32 %v755, %v756
    %v761 = vmul.u32 %v755, %v757
    %v762 = vshll.u32 %v759, 16
    %v763 = vshrl.u32 %v759, 16
    %v764 = vshll.u32 %v760, 16
    %v765 = vshrl.u32 %v760, 16
    %vm766 = vc.u32 %v758, %v762
    %v767 = vsel %vm766, 1, 0
    %v768 = vadd.s32 %v758, %v762
    %v769 = vadd.s32 %v761, %v767
    %vm770 = vc.u32 %v768, %v764
    %v771 = vsel %vm770, 1, 0
    %v772 = vadd.s32 %v768, %v764
    %v773 = vadd.s32 %v769, %v771
    %v774 = vadd.s32 %v773, %v763
    %v775 = vadd.s32 %v774, %v765
    %v776 = vand.u32 %v753, 65535
    %v777 = vshrl.u32 %v753, 16
    %v778 = vand.u32 %v748, 65535
    %v779 = vshrl.u32 %v748, 16
    %v780 = vmul.u32 %v776, %v778
    %v781 = vmul.u32 %v776, %v779
    %v782 = vmul.u32 %v777, %v778
    %v783 = vmul.u32 %v777, %v779
    %v784 = vshll.u32 %v781, 16
    %v785 = vshrl.u32 %v781, 16
    %v786 = vshll.u32 %v782, 16
    %v787 = vshrl.u32 %v782, 16
    %vm788 = vc.u32 %v780, %v784
    %v789 = vsel %vm788, 1, 0
    %v790 = vadd.s32 %v780, %v784
    %v791 = vadd.s32 %v783, %v789
    %vm792 = vc.u32 %v790, %v786
    %v793 = vsel %vm792, 1, 0
    %v794 = vadd.s32 %v790, %v786
    %v795 = vadd.s32 %v791, %v793
    %v796 = vadd.s32 %v795, %v785
    %v797 = vadd.s32 %v796, %v787
    %v798 = vmul.u32 %v753, %v744
    %v799 = vadd.s32 %v775, %v794
    %vm800 = vc.u32 %v775, %v794
    %v801 = vadd.s32 %v797, 1
    %v802 = vsel %vm800, %v801, %v797
    %v803 = vadd.s32 %v798, %v802
    %v804 = vadd.s32 %v803, 536870912
    %v805 = vshrl.u32 %v804, 30
    %v806 = vshll.u32 %v805, 30
    %v807 = vsub.s32 %v803, %v806
    %vm808 = vcmp.lt.s32.totalorder %v807, 0
    %v809 = vsub.s32 0, %v807
    %v810 = vsel %vm808, %v809, %v807
    %v811 = vclz %v810
    %v812 = vsub.s32 %v811, 2
    %vm813 = vcmp.gt.s32.totalorder 0, %v812
    %v814 = vsel %vm813, 0, %v812
    %v815 = vsub.s32 32, %v814
    %v816 = vshll.u32 %v807, %v814
    %v817 = vshrl.u32 %v799, %v815
    %v818 = vor.u32 %v816, %v817
    %v819 = vsub.s32 4294967266, %v814
    %v820 = vadd.s32 %v819, 127
    %v821 = vshll.u32 %v820, 23
    %v822 = vor.u32 4788187, %v821
    %v823 = vand.u32 2147483647, %v822
    %v825 = vcvt.s32.f32 %v818
    %v826 = vmul.f32 %v825, %v823
    %v827 = vxor.u32 %v826, 2147483648
    %v828 = vsel %vm707, %v827, %v826
    %v829 = vsub.s32 4, %v805
    %v830 = vsel %vm707, %v829, %v805
    %v831 = vsel %vm706, %v85, %v828
    %v832 = vsel %vm706, 0, %v830
    %v833 = vmul.f32 %v831, %v831
    %v834 = vmul.f32 %v833, -0.001358992
    %v835 = vadd.f32 %v834, 0.041655596
    %v836 = vmul.f32 %v833, %v835
    %v837 = vadd.f32 %v836, -0.4999988
    %v838 = vmul.f32 %v833, %v837
    %v839 = vadd.f32 1.0, %v838
    %v840 = vmul.f32 %v831, %v831
    %v841 = vmul.f32 %v840, -0.00019511016
    %v842 = vadd.f32 %v841, 0.008332121
    %v843 = vmul.f32 %v840, %v842
    %v844 = vadd.f32 %v843, -0.16666654
    %v845 = vmul.f32 %v840, %v844
    %v846 = vadd.f32 %v845, 1.0
    %v847 = vmul.f32 %v846, %v831
    %vm848 = vweird.f32 %v85
    %v849 = vadd.s32 %v832, 3
    %v850 = vand.u32 %v849, 3
    %vm851 = vcmp.lt.s32.totalorder %v850, 2
    %vm852 = vcmp.eq.s32.totalorder %v850, 0
    %v853 = vxor.u32 %v847, 2147483648
    %v854 = vsel %vm852, %v839, %v853
    %vm855 = vcmp.eq.s32.totalorder %v850, 2
    %v856 = vxor.u32 %v839, 2147483648
    %v857 = vsel %vm855, %v856, %v847
    %v858 = vsel %vm851, %v854, %v857
    %v859 = vsel %vm848, nan, %v858
    %v860 = vand.u32 2147483647, %v86
    %vm861 = vcmp.le.f32.partialorder %v860, 0.7853982
    %vm862 = vcmp.lt.s32.totalorder %v86, 0
    %v863 = vand.u32 %v86, 2139095040
    %v864 = vshrl.u32 %v863, 23
    %v865 = vsub.s32 %v864, 127
    %v866 = vand.u32 2147483647, %v86
    %v867 = vand.u32 %v866, 8388607
    %v868 = vor.u32 %v867, 8388608
    %v869 = vsub.s32 0, %v868
    %v870 = vadd.s32 %v865, 1
    %vm871 = vcmp.gt.s32.totalorder %v870, 0
    %v872 = vsel %vm871, %v870, 0
    %v873 = vshrl.u32 %v872, 5
    %v874 = vand.u32 %v872, 31
    %v875 = vsub.s32 32, %v874
    %v876 = vshrl.u32 683565275, %v875
    %v877 = vshll.u32 683565275, %v874
    %v878 = vshrl.u32 2475754826, %v875
    %v879 = vor.u32 %v877, %v878
    %v880 = vshll.u32 2475754826, %v874
    %v881 = vshrl.u32 2131351028, %v875
    %v882 = vor.u32 %v880, %v881
    %v883 = vshll.u32 2131351028, %v874
    %v884 = vshrl.u32 2102212464, %v875
    %v885 = vor.u32 %v883, %v884
    %v886 = vshll.u32 2102212464, %v874
    %v887 = vshrl.u32 920167782, %v875
    %v888 = vor.u32 %v886, %v887
    %v889 = vshll.u32 920167782, %v874
    %v890 = vshrl.u32 1326507024, %v875
    %v891 = vor.u32 %v889, %v890
    %vm892 = vcmp.lt.s32.totalorder %v873, 1
    %vm893 = vcmp.lt.s32.totalorder %v873, 2
    %vm894 = vcmp.lt.s32.totalorder %v873, 3
    %vm895 = vcmp.lt.s32.totalorder %v873, 4
    %v896 = vsel %vm892, %v876, %v879
    %v897 = vsel %vm895, %v885, 2102212464
    %v898 = vsel %vm894, %v882, %v897
    %v899 = vsel %vm893, %v896, %v898
    %v900 = vsel %vm892, %v879, %v882
    %v901 = vsel %vm895, %v888, 920167782
    %v902 = vsel %vm894, %v885, %v901
    %v903 = vsel %vm893, %v900, %v902
    %v904 = vsel %vm892, %v882, %v885
    %v905 = vsel %vm895, %v891, 1326507024
    %v906 = vsel %vm894, %v888, %v905
    %v907 = vsel %vm893, %v904, %v906
    %v908 = vshll.u32 %v868, 8
    %v909 = vand.u32 %v908, 65535
    %v910 = vshrl.u32 %v908, 16
    %v911 = vand.u32 %v907, 65535
    %v912 = vshrl.u32 %v907, 16
    %v913 = vmul.u32 %v909, %v911
    %v914 = vmul.u32 %v909, %v912
    %v915 = vmul.u32 %v910, %v911
    %v916 = vmul.u32 %v910, %v912
    %v917 = vshll.u32 %v914, 16
    %v918 = vshrl.u32 %v914, 16
    %v919 = vshll.u32 %v915, 16
    %v920 = vshrl.u32 %v915, 16
    %vm921 = vc.u32 %v913, %v917
    %v922 = vsel %vm921, 1, 0
    %v923 = vadd.s32 %v913, %v917
    %v924 = vadd.s32 %v916, %v922
    %vm925 = vc.u32 %v923, %v919
    %v926 = vsel %vm925, 1, 0
    %v927 = vadd.s32 %v923, %v919
    %v928 = vadd.s32 %v924, %v926
    %v929 = vadd.s32 %v928, %v918
    %v930 = vadd.s32 %v929, %v920
    %v931 = vand.u32 %v908, 65535
    %v932 = vshrl.u32 %v908, 16
    %v933 = vand.u32 %v903, 65535
    %v934 = vshrl.u32 %v903, 16
    %v935 = vmul.u32 %v931, %v933
    %v936 = vmul.u32 %v931, %v934
    %v937 = vmul.u32 %v932, %v933
    %v938 = vmul.u32 %v932, %v934
    %v939 = vshll.u32 %v936, 16
    %v940 = vshrl.u32 %v936, 16
    %v941 = vshll.u32 %v937, 16
    %v942 = vshrl.u32 %v937, 16
    %vm943 = vc.u32 %v935, %v939
    %v944 = vsel %vm943, 1, 0
    %v945 = vadd.s32 %v935, %v939
    %v946 = vadd.s32 %v938, %v944
    %vm947 = vc.u32 %v945, %v941
    %v948 = vsel %vm947, 1, 0
    %v949 = vadd.s32 %v945, %v941
    %v950 = vadd.s32 %v946, %v948
    %v951 = vadd.s32 %v950, %v940
    %v952 = vadd.s32 %v951, %v942
    %v953 = vmul.u32 %v908, %v899
    %v954 = vadd.s32 %v930, %v949
    %vm955 = vc.u32 %v930, %v949
    %v956 = vadd.s32 %v952, 1
    %v957 = vsel %vm955, %v956, %v952
    %v958 = vadd.s32 %v953, %v957
    %v959 = vadd.s32 %v958, 536870912
    %v960 = vshrl.u32 %v959, 30
    %v961 = vshll.u32 %v960, 30
    %v962 = vsub.s32 %v958, %v961
    %vm963 = vcmp.lt.s32.totalorder %v962, 0
    %v964 = vsub.s32 0, %v962
    %v965 = vsel %vm963, %v964, %v962
    %v966 = vclz %v965
    %v967 = vsub.s32 %v966, 2
    %vm968 = vcmp.gt.s32.totalorder 0, %v967
    %v969 = vsel %vm968, 0, %v967
    %v970 = vsub.s32 32, %v969
    %v971 = vshll.u32 %v962, %v969
    %v972 = vshrl.u32 %v954, %v970
    %v973 = vor.u32 %v971, %v972
    %v974 = vsub.s32 4294967266, %v969
    %v975 = vadd.s32 %v974, 127
    %v976 = vshll.u32 %v975, 23
    %v977 = vor.u32 4788187, %v976
    %v978 = vand.u32 2147483647, %v977
    %v980 = vcvt.s32.f32 %v973
    %v981 = vmul.f32 %v980, %v978
    %v982 = vxor.u32 %v981, 2147483648
    %v983 = vsel %vm862, %v982, %v981
    %v984 = vsub.s32 4, %v960
    %v985 = vsel %vm862, %v984, %v960
    %v986 = vsel %vm861, %v86, %v983
    %v987 = vsel %vm861, 0, %v985
    %v988 = vmul.f32 %v986, %v986
    %v989 = vmul.f32 %v988, -0.001358992
    %v990 = vadd.f32 %v989, 0.041655596
    %v991 = vmul.f32 %v988, %v990
    %v992 = vadd.f32 %v991, -0.4999988
    %v993 = vmul.f32 %v988, %v992
    %v994 = vadd.f32 1.0, %v993
    %v995 = vmul.f32 %v986, %v986
    %v996 = vmul.f32 %v995, -0.00019511016
    %v997 = vadd.f32 %v996, 0.008332121
    %v998 = vmul.f32 %v995, %v997
    %v999 = vadd.f32 %v998, -0.16666654
    %v1000 = vmul.f32 %v995, %v999
    %v1001 = vadd.f32 %v1000, 1.0
    %v1002 = vmul.f32 %v1001, %v986
    %vm1003 = vweird.f32 %v86
    %v1004 = vadd.s32 %v987, 3
    %v1005 = vand.u32 %v1004, 3
    %vm1006 = vcmp.lt.s32.totalorder %v1005, 2
    %vm1007 = vcmp.eq.s32.totalorder %v1005, 0
    %v1008 = vxor.u32 %v1002, 2147483648
    %v1009 = vsel %vm1007, %v994, %v1008
    %vm1010 = vcmp.eq.s32.totalorder %v1005, 2
    %v1011 = vxor.u32 %v994, 2147483648
    %v1012 = vsel %vm1010, %v1011, %v1002
    %v1013 = vsel %vm1006, %v1009, %v1012
    %v1014 = vsel %vm1003, nan, %v1013
    %v1015 = vand.u32 2147483647, %v87
    %vm1016 = vcmp.le.f32.partialorder %v1015, 0.7853982
    %vm1017 = vcmp.lt.s32.totalorder %v87, 0
    %v1018 = vand.u32 %v87, 2139095040
    %v1019 = vshrl.u32 %v1018, 23
    %v1020 = vsub.s32 %v1019, 127
    %v1021 = vand.u32 2147483647, %v87
    %v1022 = vand.u32 %v1021, 8388607
    %v1023 = vor.u32 %v1022, 8388608
    %v1024 = vsub.s32 0, %v1023
    %v1025 = vadd.s32 %v1020, 1
    %vm1026 = vcmp.gt.s32.totalorder %v1025, 0
    %v1027 = vsel %vm1026, %v1025, 0
    %v1028 = vshrl.u32 %v1027, 5
    %v1029 = vand.u32 %v1027, 31
    %v1030 = vsub.s32 32, %v1029
    %v1031 = vshrl.u32 683565275, %v1030
    %v1032 = vshll.u32 683565275, %v1029
    %v1033 = vshrl.u32 2475754826, %v1030
    %v1034 = vor.u32 %v1032, %v1033
    %v1035 = vshll.u32 2475754826, %v1029
    %v1036 = vshrl.u32 2131351028, %v1030
    %v1037 = vor.u32 %v1035, %v1036
    %v1038 = vshll.u32 2131351028, %v1029
    %v1039 = vshrl.u32 2102212464, %v1030
    %v1040 = vor.u32 %v1038, %v1039
    %v1041 = vshll.u32 2102212464, %v1029
    %v1042 = vshrl.u32 920167782, %v1030
    %v1043 = vor.u32 %v1041, %v1042
    %v1044 = vshll.u32 920167782, %v1029
    %v1045 = vshrl.u32 1326507024, %v1030
    %v1046 = vor.u32 %v1044, %v1045
    %vm1047 = vcmp.lt.s32.totalorder %v1028, 1
    %vm1048 = vcmp.lt.s32.totalorder %v1028, 2
    %vm1049 = vcmp.lt.s32.totalorder %v1028, 3
    %vm1050 = vcmp.lt.s32.totalorder %v1028, 4
    %v1051 = vsel %vm1047, %v1031, %v1034
    %v1052 = vsel %vm1050, %v1040, 2102212464
    %v1053 = vsel %vm1049, %v1037, %v1052
    %v1054 = vsel %vm1048, %v1051, %v1053
    %v1055 = vsel %vm1047, %v1034, %v1037
    %v1056 = vsel %vm1050, %v1043, 920167782
    %v1057 = vsel %vm1049, %v1040, %v1056
    %v1058 = vsel %vm1048, %v1055, %v1057
    %v1059 = vsel %vm1047, %v1037, %v1040
    %v1060 = vsel %vm1050, %v1046, 1326507024
    %v1061 = vsel %vm1049, %v1043, %v1060
    %v1062 = vsel %vm1048, %v1059, %v1061
    %v1063 = vshll.u32 %v1023, 8
    %v1064 = vand.u32 %v1063, 65535
    %v1065 = vshrl.u32 %v1063, 16
    %v1066 = vand.u32 %v1062, 65535
    %v1067 = vshrl.u32 %v1062, 16
    %v1068 = vmul.u32 %v1064, %v1066
    %v1069 = vmul.u32 %v1064, %v1067
    %v1070 = vmul.u32 %v1065, %v1066
    %v1071 = vmul.u32 %v1065, %v1067
    %v1072 = vshll.u32 %v1069, 16
    %v1073 = vshrl.u32 %v1069, 16
    %v1074 = vshll.u32 %v1070, 16
    %v1075 = vshrl.u32 %v1070, 16
    %vm1076 = vc.u32 %v1068, %v1072
    %v1077 = vsel %vm1076, 1, 0
    %v1078 = vadd.s32 %v1068, %v1072
    %v1079 = vadd.s32 %v1071, %v1077
    %vm1080 = vc.u32 %v1078, %v1074
    %v1081 = vsel %vm1080, 1, 0
    %v1082 = vadd.s32 %v1078, %v1074
    %v1083 = vadd.s32 %v1079, %v1081
    %v1084 = vadd.s32 %v1083, %v1073
    %v1085 = vadd.s32 %v1084, %v1075
    %v1086 = vand.u32 %v1063, 65535
    %v1087 = vshrl.u32 %v1063, 16
    %v1088 = vand.u32 %v1058, 65535
    %v1089 = vshrl.u32 %v1058, 16
    %v1090 = vmul.u32 %v1086, %v1088
    %v1091 = vmul.u32 %v1086, %v1089
    %v1092 = vmul.u32 %v1087, %v1088
    %v1093 = vmul.u32 %v1087, %v1089
    %v1094 = vshll.u32 %v1091, 16
    %v1095 = vshrl.u32 %v1091, 16
    %v1096 = vshll.u32 %v1092, 16
    %v1097 = vshrl.u32 %v1092, 16
    %vm1098 = vc.u32 %v1090, %v1094
    %v1099 = vsel %vm1098, 1, 0
    %v1100 = vadd.s32 %v1090, %v1094
    %v1101 = vadd.s32 %v1093, %v1099
    %vm1102 = vc.u32 %v1100, %v1096
    %v1103 = vsel %vm1102, 1, 0
    %v1104 = vadd.s32 %v1100, %v1096
    %v1105 = vadd.s32 %v1101, %v1103
    %v1106 = vadd.s32 %v1105, %v1095
    %v1107 = vadd.s32 %v1106, %v1097
    %v1108 = vmul.u32 %v1063, %v1054
    %v1109 = vadd.s32 %v1085, %v1104
    %vm1110 = vc.u32 %v1085, %v1104
    %v1111 = vadd.s32 %v1107, 1
    %v1112 = vsel %vm1110, %v1111, %v1107
    %v1113 = vadd.s32 %v1108, %v1112
    %v1114 = vadd.s32 %v1113, 536870912
    %v1115 = vshrl.u32 %v1114, 30
    %v1116 = vshll.u32 %v1115, 30
    %v1117 = vsub.s32 %v1113, %v1116
    %vm1118 = vcmp.lt.s32.totalorder %v1117, 0
    %v1119 = vsub.s32 0, %v1117
    %v1120 = vsel %vm1118, %v1119, %v1117
    %v1121 = vclz %v1120
    %v1122 = vsub.s32 %v1121, 2
    %vm1123 = vcmp.gt.s32.totalorder 0, %v1122
    %v1124 = vsel %vm1123, 0, %v1122
    %v1125 = vsub.s32 32, %v1124
    %v1126 = vshll.u32 %v1117, %v1124
    %v1127 = vshrl.u32 %v1109, %v1125
    %v1128 = vor.u32 %v1126, %v1127
    %v1129 = vsub.s32 4294967266, %v1124
    %v1130 = vadd.s32 %v1129, 127
    %v1131 = vshll.u32 %v1130, 23
    %v1132 = vor.u32 4788187, %v1131
    %v1133 = vand.u32 2147483647, %v1132
    %v1135 = vcvt.s32.f32 %v1128
    %v1136 = vmul.f32 %v1135, %v1133
    %v1137 = vxor.u32 %v1136, 2147483648
    %v1138 = vsel %vm1017, %v1137, %v1136
    %v1139 = vsub.s32 4, %v1115
    %v1140 = vsel %vm1017, %v1139, %v1115
    %v1141 = vsel %vm1016, %v87, %v1138
    %v1142 = vsel %vm1016, 0, %v1140
    %v1143 = vmul.f32 %v1141, %v1141
    %v1144 = vmul.f32 %v1143, -0.001358992
    %v1145 = vadd.f32 %v1144, 0.041655596
    %v1146 = vmul.f32 %v1143, %v1145
    %v1147 = vadd.f32 %v1146, -0.4999988
    %v1148 = vmul.f32 %v1143, %v1147
    %v1149 = vadd.f32 1.0, %v1148
    %v1150 = vmul.f32 %v1141, %v1141
    %v1151 = vmul.f32 %v1150, -0.00019511016
    %v1152 = vadd.f32 %v1151, 0.008332121
    %v1153 = vmul.f32 %v1150, %v1152
    %v1154 = vadd.f32 %v1153, -0.16666654
    %v1155 = vmul.f32 %v1150, %v1154
    %v1156 = vadd.f32 %v1155, 1.0
    %v1157 = vmul.f32 %v1156, %v1141
    %vm1158 = vweird.f32 %v87
    %v1159 = vadd.s32 %v1142, 3
    %v1160 = vand.u32 %v1159, 3
    %vm1161 = vcmp.lt.s32.totalorder %v1160, 2
    %vm1162 = vcmp.eq.s32.totalorder %v1160, 0
    %v1163 = vxor.u32 %v1157, 2147483648
    %v1164 = vsel %vm1162, %v1149, %v1163
    %vm1165 = vcmp.eq.s32.totalorder %v1160, 2
    %v1166 = vxor.u32 %v1149, 2147483648
    %v1167 = vsel %vm1165, %v1166, %v1157
    %v1168 = vsel %vm1161, %v1164, %v1167
    %v1169 = vsel %vm1158, nan, %v1168
    %v1170 = vand.u32 2147483647, %v88
    %vm1171 = vcmp.le.f32.partialorder %v1170, 0.7853982
    %vm1172 = vcmp.lt.s32.totalorder %v88, 0
    %v1173 = vand.u32 %v88, 2139095040
    %v1174 = vshrl.u32 %v1173, 23
    %v1175 = vsub.s32 %v1174, 127
    %v1176 = vand.u32 2147483647, %v88
    %v1177 = vand.u32 %v1176, 8388607
    %v1178 = vor.u32 %v1177, 8388608
    %v1179 = vsub.s32 0, %v1178
    %v1180 = vadd.s32 %v1175, 1
    %vm1181 = vcmp.gt.s32.totalorder %v1180, 0
    %v1182 = vsel %vm1181, %v1180, 0
    %v1183 = vshrl.u32 %v1182, 5
    %v1184 = vand.u32 %v1182, 31
    %v1185 = vsub.s32 32, %v1184
    %v1186 = vshrl.u32 683565275, %v1185
    %v1187 = vshll.u32 683565275, %v1184
    %v1188 = vshrl.u32 2475754826, %v1185
    %v1189 = vor.u32 %v1187, %v1188
    %v1190 = vshll.u32 2475754826, %v1184
    %v1191 = vshrl.u32 2131351028, %v1185
    %v1192 = vor.u32 %v1190, %v1191
    %v1193 = vshll.u32 2131351028, %v1184
    %v1194 = vshrl.u32 2102212464, %v1185
    %v1195 = vor.u32 %v1193, %v1194
    %v1196 = vshll.u32 2102212464, %v1184
    %v1197 = vshrl.u32 920167782, %v1185
    %v1198 = vor.u32 %v1196, %v1197
    %v1199 = vshll.u32 920167782, %v1184
    %v1200 = vshrl.u32 1326507024, %v1185
    %v1201 = vor.u32 %v1199, %v1200
    %vm1202 = vcmp.lt.s32.totalorder %v1183, 1
    %vm1203 = vcmp.lt.s32.totalorder %v1183, 2
    %vm1204 = vcmp.lt.s32.totalorder %v1183, 3
    %vm1205 = vcmp.lt.s32.totalorder %v1183, 4
    %v1206 = vsel %vm1202, %v1186, %v1189
    %v1207 = vsel %vm1205, %v1195, 2102212464
    %v1208 = vsel %vm1204, %v1192, %v1207
    %v1209 = vsel %vm1203, %v1206, %v1208
    %v1210 = vsel %vm1202, %v1189, %v1192
    %v1211 = vsel %vm1205, %v1198, 920167782
    %v1212 = vsel %vm1204, %v1195, %v1211
    %v1213 = vsel %vm1203, %v1210, %v1212
    %v1214 = vsel %vm1202, %v1192, %v1195
    %v1215 = vsel %vm1205, %v1201, 1326507024
    %v1216 = vsel %vm1204, %v1198, %v1215
    %v1217 = vsel %vm1203, %v1214, %v1216
    %v1218 = vshll.u32 %v1178, 8
    %v1219 = vand.u32 %v1218, 65535
    %v1220 = vshrl.u32 %v1218, 16
    %v1221 = vand.u32 %v1217, 65535
    %v1222 = vshrl.u32 %v1217, 16
    %v1223 = vmul.u32 %v1219, %v1221
    %v1224 = vmul.u32 %v1219, %v1222
    %v1225 = vmul.u32 %v1220, %v1221
    %v1226 = vmul.u32 %v1220, %v1222
    %v1227 = vshll.u32 %v1224, 16
    %v1228 = vshrl.u32 %v1224, 16
    %v1229 = vshll.u32 %v1225, 16
    %v1230 = vshrl.u32 %v1225, 16
    %vm1231 = vc.u32 %v1223, %v1227
    %v1232 = vsel %vm1231, 1, 0
    %v1233 = vadd.s32 %v1223, %v1227
    %v1234 = vadd.s32 %v1226, %v1232
    %vm1235 = vc.u32 %v1233, %v1229
    %v1236 = vsel %vm1235, 1, 0
    %v1237 = vadd.s32 %v1233, %v1229
    %v1238 = vadd.s32 %v1234, %v1236
    %v1239 = vadd.s32 %v1238, %v1228
    %v1240 = vadd.s32 %v1239, %v1230
    %v1241 = vand.u32 %v1218, 65535
    %v1242 = vshrl.u32 %v1218, 16
    %v1243 = vand.u32 %v1213, 65535
    %v1244 = vshrl.u32 %v1213, 16
    %v1245 = vmul.u32 %v1241, %v1243
    %v1246 = vmul.u32 %v1241, %v1244
    %v1247 = vmul.u32 %v1242, %v1243
    %v1248 = vmul.u32 %v1242, %v1244
    %v1249 = vshll.u32 %v1246, 16
    %v1250 = vshrl.u32 %v1246, 16
    %v1251 = vshll.u32 %v1247, 16
    %v1252 = vshrl.u32 %v1247, 16
    %vm1253 = vc.u32 %v1245, %v1249
    %v1254 = vsel %vm1253, 1, 0
    %v1255 = vadd.s32 %v1245, %v1249
    %v1256 = vadd.s32 %v1248, %v1254
    %vm1257 = vc.u32 %v1255, %v1251
    %v1258 = vsel %vm1257, 1, 0
    %v1259 = vadd.s32 %v1255, %v1251
    %v1260 = vadd.s32 %v1256, %v1258
    %v1261 = vadd.s32 %v1260, %v1250
    %v1262 = vadd.s32 %v1261, %v1252
    %v1263 = vmul.u32 %v1218, %v1209
    %v1264 = vadd.s32 %v1240, %v1259
    %vm1265 = vc.u32 %v1240, %v1259
    %v1266 = vadd.s32 %v1262, 1
    %v1267 = vsel %vm1265, %v1266, %v1262
    %v1268 = vadd.s32 %v1263, %v1267
    %v1269 = vadd.s32 %v1268, 536870912
    %v1270 = vshrl.u32 %v1269, 30
    %v1271 = vshll.u32 %v1270, 30
    %v1272 = vsub.s32 %v1268, %v1271
    %vm1273 = vcmp.lt.s32.totalorder %v1272, 0
    %v1274 = vsub.s32 0, %v1272
    %v1275 = vsel %vm1273, %v1274, %v1272
    %v1276 = vclz %v1275
    %v1277 = vsub.s32 %v1276, 2
    %vm1278 = vcmp.gt.s32.totalorder 0, %v1277
    %v1279 = vsel %vm1278, 0, %v1277
    %v1280 = vsub.s32 32, %v1279
    %v1281 = vshll.u32 %v1272, %v1279
    %v1282 = vshrl.u32 %v1264, %v1280
    %v1283 = vor.u32 %v1281, %v1282
    %v1284 = vsub.s32 4294967266, %v1279
    %v1285 = vadd.s32 %v1284, 127
    %v1286 = vshll.u32 %v1285, 23
    %v1287 = vor.u32 4788187, %v1286
    %v1288 = vand.u32 2147483647, %v1287
    %v1290 = vcvt.s32.f32 %v1283
    %v1291 = vmul.f32 %v1290, %v1288
    %v1292 = vxor.u32 %v1291, 2147483648
    %v1293 = vsel %vm1172, %v1292, %v1291
    %v1294 = vsub.s32 4, %v1270
    %v1295 = vsel %vm1172, %v1294, %v1270
    %v1296 = vsel %vm1171, %v88, %v1293
    %v1297 = vsel %vm1171, 0, %v1295
    %v1298 = vmul.f32 %v1296, %v1296
    %v1299 = vmul.f32 %v1298, -0.001358992
    %v1300 = vadd.f32 %v1299, 0.041655596
    %v1301 = vmul.f32 %v1298, %v1300
    %v1302 = vadd.f32 %v1301, -0.4999988
    %v1303 = vmul.f32 %v1298, %v1302
    %v1304 = vadd.f32 1.0, %v1303
    %v1305 = vmul.f32 %v1296, %v1296
    %v1306 = vmul.f32 %v1305, -0.00019511016
    %v1307 = vadd.f32 %v1306, 0.008332121
    %v1308 = vmul.f32 %v1305, %v1307
    %v1309 = vadd.f32 %v1308, -0.16666654
    %v1310 = vmul.f32 %v1305, %v1309
    %v1311 = vadd.f32 %v1310, 1.0
    %v1312 = vmul.f32 %v1311, %v1296
    %vm1313 = vweird.f32 %v88
    %v1314 = vadd.s32 %v1297, 3
    %v1315 = vand.u32 %v1314, 3
    %vm1316 = vcmp.lt.s32.totalorder %v1315, 2
    %vm1317 = vcmp.eq.s32.totalorder %v1315, 0
    %v1318 = vxor.u32 %v1312, 2147483648
    %v1319 = vsel %vm1317, %v1304, %v1318
    %vm1320 = vcmp.eq.s32.totalorder %v1315, 2
    %v1321 = vxor.u32 %v1304, 2147483648
    %v1322 = vsel %vm1320, %v1321, %v1312
    %v1323 = vsel %vm1316, %v1319, %v1322
    %v1324 = vsel %vm1313, nan, %v1323
    %v1325 = vld [vmem:[%s2] sm:$0xf]
    %v1326 = vld [vmem:[%s2 + $0x4] sm:$0xf]
    %v1327 = vld [vmem:[%s2 + $0x8] sm:$0xf]
    %v1328 = vld [vmem:[%s2 + $0xc] sm:$0xf]
    %v1329 = vld [vmem:[%s2 + $0x10] sm:$0xf]
    %v1330 = vld [vmem:[%s2 + $0x14] sm:$0xf]
    %v1331 = vld [vmem:[%s2 + $0x18] sm:$0xf]
    %v1332 = vld [vmem:[%s2 + $0x1c] sm:$0xf]
    %v1333 = vld [vmem:[%s2 + $0x20] sm:$0xf]
    %v1334 = vld [vmem:[%s2 + $0x24] sm:$0xf]
    %v1335 = vld [vmem:[%s2 + $0x28] sm:$0xf]
    %v1336 = vld [vmem:[%s2 + $0x2c] sm:$0xf]
    %v1337 = vpack.c.bf16 %v550, %v242
    %v1338 = vpack.c.bf16 %v704, %v396
    %v1351 = vunpack.c.l.b16 %v1325
    %v1352 = vunpack.c.l.b16 %v1326
    %v1353 = vunpack.c.l.b16 %v1327
    %v1354 = vunpack.c.l.b16 %v1328
    %v1355 = vunpack.c.l.b16 %v1329
    %v1356 = vunpack.c.l.b16 %v1330
    %v1357 = vunpack.c.l.b16 %v1331
    %v1358 = vunpack.c.l.b16 %v1332
    %v1359 = vunpack.c.l.b16 %v1333
    %v1360 = vunpack.c.l.b16 %v1334
    %v1361 = vunpack.c.l.b16 %v1335
    %v1362 = vunpack.c.l.b16 %v1336
    %v1363 = vpack.c.b16 %v1352, %v1351
    %v1364 = vpack.c.b16 %v1354, %v1353
    %v1365 = vpack.c.b16 %v1356, %v1355
    %v1366 = vpack.c.b16 %v1358, %v1357
    %v1367 = vpack.c.b16 %v1360, %v1359
    %v1368 = vpack.c.b16 %v1362, %v1361
    %vm1369 = vcmask 130048
    %v1371 = vsel %vm1369, %v1363, 0
    %v1374 = vsel %vm1369, %v1364, 0
    %v1377 = vsel %vm1369, %v1365, 0
    %v1380 = vsel %vm1369, %v1366, 0
    %v1383 = vsel %vm1369, %v1367, 0
    %v1386 = vsel %vm1369, %v1368, 0
    %1388 = vmatpush.bf16.msra.mxu0 0
    %1389 = vmatpush.bf16.msra.mxu0 0
    %1390 = vmatpush.bf16.msra.mxu0 0
    %1391 = vmatpush.bf16.msra.mxu0 0
    %1392 = vmatpush.bf16.msra.mxu0 0
    %1393 = vmatpush.bf16.msra.mxu0 0
    %1394 = vmatpush.bf16.msra.mxu0 0
    %1395 = vmatpush.bf16.msra.mxu0 %v1337
    %1396 = vmatmul.bf16.gmra.mxu0 %v1371
    %v1397 = vpop.f32.mrf.mxu0
    %v1398 = vadd.f32 0.0, %v1397
    %v1399 = vpop.f32.mrf.mxu0
    %v1400 = vadd.f32 0.0, %v1399
    %1401 = vmatmul.bf16.gmra.mxu0 %v1374
    %v1402 = vpop.f32.mrf.mxu0
    %v1403 = vadd.f32 0.0, %v1402
    %v1404 = vpop.f32.mrf.mxu0
    %v1405 = vadd.f32 0.0, %v1404
    %1406 = vmatmul.bf16.gmra.mxu0 %v1377
    %v1407 = vpop.f32.mrf.mxu0
    %v1408 = vadd.f32 0.0, %v1407
    %v1409 = vpop.f32.mrf.mxu0
    %v1410 = vadd.f32 0.0, %v1409
    %1411 = vmatmul.bf16.gmra.mxu0 %v1380
    %v1412 = vpop.f32.mrf.mxu0
    %v1413 = vadd.f32 0.0, %v1412
    %v1414 = vpop.f32.mrf.mxu0
    %v1415 = vadd.f32 0.0, %v1414
    %1416 = vmatmul.bf16.gmra.mxu0 %v1383
    %v1417 = vpop.f32.mrf.mxu0
    %v1418 = vadd.f32 0.0, %v1417
    %v1419 = vpop.f32.mrf.mxu0
    %v1420 = vadd.f32 0.0, %v1419
    %1421 = vmatmul.bf16.gmra.mxu0 %v1386
    %v1422 = vpop.f32.mrf.mxu0
    %v1423 = vadd.f32 0.0, %v1422
    %v1424 = vpop.f32.mrf.mxu0
    %v1425 = vadd.f32 0.0, %v1424
    %1426 = vdwg.mxu0
    %1427 = vmatpush.bf16.msra.mxu0 0
    %1428 = vmatpush.bf16.msra.mxu0 0
    %1429 = vmatpush.bf16.msra.mxu0 0
    %1430 = vmatpush.bf16.msra.mxu0 0
    %1431 = vmatpush.bf16.msra.mxu0 0
    %1432 = vmatpush.bf16.msra.mxu0 0
    %1433 = vmatpush.bf16.msra.mxu0 0
    %1434 = vmatpush.bf16.msra.mxu0 %v1338
    %1435 = vmatmul.bf16.gmra.mxu0 %v1371
    %v1436 = vpop.f32.mrf.mxu0
    %v1437 = vadd.f32 0.0, %v1436
    %v1438 = vpop.f32.mrf.mxu0
    %v1439 = vadd.f32 0.0, %v1438
    %1440 = vmatmul.bf16.gmra.mxu0 %v1374
    %v1441 = vpop.f32.mrf.mxu0
    %v1442 = vadd.f32 0.0, %v1441
    %v1443 = vpop.f32.mrf.mxu0
    %v1444 = vadd.f32 0.0, %v1443
    %1445 = vmatmul.bf16.gmra.mxu0 %v1377
    %v1446 = vpop.f32.mrf.mxu0
    %v1447 = vadd.f32 0.0, %v1446
    %v1448 = vpop.f32.mrf.mxu0
    %v1449 = vadd.f32 0.0, %v1448
    %1450 = vmatmul.bf16.gmra.mxu0 %v1380
    %v1451 = vpop.f32.mrf.mxu0
    %v1452 = vadd.f32 0.0, %v1451
    %v1453 = vpop.f32.mrf.mxu0
    %v1454 = vadd.f32 0.0, %v1453
    %1455 = vmatmul.bf16.gmra.mxu0 %v1383
    %v1456 = vpop.f32.mrf.mxu0
    %v1457 = vadd.f32 0.0, %v1456
    %v1458 = vpop.f32.mrf.mxu0
    %v1459 = vadd.f32 0.0, %v1458
    %1460 = vmatmul.bf16.gmra.mxu0 %v1386
    %v1461 = vpop.f32.mrf.mxu0
    %v1462 = vadd.f32 0.0, %v1461
    %v1463 = vpop.f32.mrf.mxu0
    %v1464 = vadd.f32 0.0, %v1463
    %1465 = vdwg.mxu0
    %v1466 = vpack.c.bf16 %v1169, %v859
    %v1467 = vpack.c.bf16 %v1324, %v1014
    %1468 = vmatpush.bf16.msra.mxu0 0
    %1469 = vmatpush.bf16.msra.mxu0 0
    %1470 = vmatpush.bf16.msra.mxu0 0
    %1471 = vmatpush.bf16.msra.mxu0 0
    %1472 = vmatpush.bf16.msra.mxu0 0
    %1473 = vmatpush.bf16.msra.mxu0 0
    %1474 = vmatpush.bf16.msra.mxu0 0
    %1475 = vmatpush.bf16.msra.mxu0 %v1466
    %1476 = vmatmul.bf16.gmra.mxu0 %v1371
    %v1477 = vpop.f32.mrf.mxu0
    %v1478 = vadd.f32 0.0, %v1477
    %v1479 = vpop.f32.mrf.mxu0
    %v1480 = vadd.f32 0.0, %v1479
    %1481 = vmatmul.bf16.gmra.mxu0 %v1374
    %v1482 = vpop.f32.mrf.mxu0
    %v1483 = vadd.f32 0.0, %v1482
    %v1484 = vpop.f32.mrf.mxu0
    %v1485 = vadd.f32 0.0, %v1484
    %1486 = vmatmul.bf16.gmra.mxu0 %v1377
    %v1487 = vpop.f32.mrf.mxu0
    %v1488 = vadd.f32 0.0, %v1487
    %v1489 = vpop.f32.mrf.mxu0
    %v1490 = vadd.f32 0.0, %v1489
    %1491 = vmatmul.bf16.gmra.mxu0 %v1380
    %v1492 = vpop.f32.mrf.mxu0
    %v1493 = vadd.f32 0.0, %v1492
    %v1494 = vpop.f32.mrf.mxu0
    %v1495 = vadd.f32 0.0, %v1494
    %1496 = vmatmul.bf16.gmra.mxu0 %v1383
    %v1497 = vpop.f32.mrf.mxu0
    %v1498 = vadd.f32 0.0, %v1497
    %v1499 = vpop.f32.mrf.mxu0
    %v1500 = vadd.f32 0.0, %v1499
    %1501 = vmatmul.bf16.gmra.mxu0 %v1386
    %v1502 = vpop.f32.mrf.mxu0
    %v1503 = vadd.f32 0.0, %v1502
    %v1504 = vpop.f32.mrf.mxu0
    %v1505 = vadd.f32 0.0, %v1504
    %1506 = vdwg.mxu0
    %1507 = vmatpush.bf16.msra.mxu0 0
    %1508 = vmatpush.bf16.msra.mxu0 0
    %1509 = vmatpush.bf16.msra.mxu0 0
    %1510 = vmatpush.bf16.msra.mxu0 0
    %1511 = vmatpush.bf16.msra.mxu0 0
    %1512 = vmatpush.bf16.msra.mxu0 0
    %1513 = vmatpush.bf16.msra.mxu0 0
    %1514 = vmatpush.bf16.msra.mxu0 %v1467
    %1515 = vmatmul.bf16.gmra.mxu0 %v1371
    %v1516 = vpop.f32.mrf.mxu0
    %v1517 = vadd.f32 0.0, %v1516
    %v1518 = vpop.f32.mrf.mxu0
    %v1519 = vadd.f32 0.0, %v1518
    %1520 = vmatmul.bf16.gmra.mxu0 %v1374
    %v1521 = vpop.f32.mrf.mxu0
    %v1522 = vadd.f32 0.0, %v1521
    %v1523 = vpop.f32.mrf.mxu0
    %v1524 = vadd.f32 0.0, %v1523
    %1525 = vmatmul.bf16.gmra.mxu0 %v1377
    %v1526 = vpop.f32.mrf.mxu0
    %v1527 = vadd.f32 0.0, %v1526
    %v1528 = vpop.f32.mrf.mxu0
    %v1529 = vadd.f32 0.0, %v1528
    %1530 = vmatmul.bf16.gmra.mxu0 %v1380
    %v1531 = vpop.f32.mrf.mxu0
    %v1532 = vadd.f32 0.0, %v1531
    %v1533 = vpop.f32.mrf.mxu0
    %v1534 = vadd.f32 0.0, %v1533
    %1535 = vmatmul.bf16.gmra.mxu0 %v1383
    %v1536 = vpop.f32.mrf.mxu0
    %v1537 = vadd.f32 0.0, %v1536
    %v1538 = vpop.f32.mrf.mxu0
    %v1539 = vadd.f32 0.0, %v1538
    %1540 = vmatmul.bf16.gmra.mxu0 %v1386
    %v1541 = vpop.f32.mrf.mxu0
    %v1542 = vadd.f32 0.0, %v1541
    %v1543 = vpop.f32.mrf.mxu0
    %v1544 = vadd.f32 0.0, %v1543
    %1545 = vdwg.mxu0
    %v1546 = vld [vmem:[#allocation2] sm:$0xff]
    %v1547 = vld [vmem:[#allocation2 + $0x8] sm:$0xff]
    %v1548 = vld [vmem:[#allocation2 + $0x10] sm:$0xff]
    %v1549 = vld [vmem:[#allocation2 + $0x18] sm:$0xff]
    %v1550 = vld [vmem:[#allocation2 + $0x20] sm:$0xff]
    %v1551 = vld [vmem:[#allocation2 + $0x28] sm:$0xff]
    %v1552 = vld [vmem:[#allocation2 + $0x30] sm:$0xff]
    %v1553 = vld [vmem:[#allocation2 + $0x38] sm:$0xff]
    %v1554 = vld [vmem:[#allocation2 + $0x40] sm:$0xff]
    %v1555 = vld [vmem:[#allocation2 + $0x48] sm:$0xff]
    %v1556 = vld [vmem:[#allocation2 + $0x50] sm:$0xff]
    %v1557 = vld [vmem:[#allocation2 + $0x58] sm:$0xff]
    %v1558 = vsub.f32 %v1398, %v1493
    %v1559 = vsub.f32 %v1437, %v1532
    %v1560 = vsub.f32 %v1400, %v1495
    %v1561 = vsub.f32 %v1439, %v1534
    %v1562 = vsub.f32 %v1403, %v1498
    %v1563 = vsub.f32 %v1442, %v1537
    %v1564 = vsub.f32 %v1405, %v1500
    %v1565 = vsub.f32 %v1444, %v1539
    %v1566 = vsub.f32 %v1408, %v1503
    %v1567 = vsub.f32 %v1447, %v1542
    %v1568 = vsub.f32 %v1410, %v1505
    %v1569 = vsub.f32 %v1449, %v1544
    %v1570 = vadd.f32 %v1546, %v1558
    %v1571 = vadd.f32 %v1547, %v1559
    %v1572 = vadd.f32 %v1548, %v1560
    %v1573 = vadd.f32 %v1549, %v1561
    %v1574 = vadd.f32 %v1550, %v1562
    %v1575 = vadd.f32 %v1551, %v1563
    %v1576 = vadd.f32 %v1552, %v1564
    %v1577 = vadd.f32 %v1553, %v1565
    %v1578 = vadd.f32 %v1554, %v1566
    %v1579 = vadd.f32 %v1555, %v1567
    %v1580 = vadd.f32 %v1556, %v1568
    %v1581 = vadd.f32 %v1557, %v1569
    %1582 = vst [vmem:[#allocation2] sm:$0xff] %v1570
    %1583 = vst [vmem:[#allocation2 + $0x8] sm:$0xff] %v1571
    %1584 = vst [vmem:[#allocation2 + $0x10] sm:$0xff] %v1572
    %1585 = vst [vmem:[#allocation2 + $0x18] sm:$0xff] %v1573
    %1586 = vst [vmem:[#allocation2 + $0x20] sm:$0xff] %v1574
    %1587 = vst [vmem:[#allocation2 + $0x28] sm:$0xff] %v1575
    %1588 = vst [vmem:[#allocation2 + $0x30] sm:$0xff] %v1576
    %1589 = vst [vmem:[#allocation2 + $0x38] sm:$0xff] %v1577
    %1590 = vst [vmem:[#allocation2 + $0x40] sm:$0xff] %v1578
    %1591 = vst [vmem:[#allocation2 + $0x48] sm:$0xff] %v1579
    %1592 = vst [vmem:[#allocation2 + $0x50] sm:$0xff] %v1580
    %1593 = vst [vmem:[#allocation2 + $0x58] sm:$0xff] %v1581
    %s1594 = scalar_lea.vmem [#allocation2], 96
    %v1595 = vld [vmem:[%s1594] sm:$0xff]
    %v1596 = vld [vmem:[%s1594 + $0x8] sm:$0xff]
    %v1597 = vld [vmem:[%s1594 + $0x10] sm:$0xff]
    %v1598 = vld [vmem:[%s1594 + $0x18] sm:$0xff]
    %v1599 = vld [vmem:[%s1594 + $0x20] sm:$0xff]
    %v1600 = vld [vmem:[%s1594 + $0x28] sm:$0xff]
    %v1601 = vld [vmem:[%s1594 + $0x30] sm:$0xff]
    %v1602 = vld [vmem:[%s1594 + $0x38] sm:$0xff]
    %v1603 = vld [vmem:[%s1594 + $0x40] sm:$0xff]
    %v1604 = vld [vmem:[%s1594 + $0x48] sm:$0xff]
    %v1605 = vld [vmem:[%s1594 + $0x50] sm:$0xff]
    %v1606 = vld [vmem:[%s1594 + $0x58] sm:$0xff]
    %v1607 = vadd.f32 %v1478, %v1413
    %v1608 = vadd.f32 %v1517, %v1452
    %v1609 = vadd.f32 %v1480, %v1415
    %v1610 = vadd.f32 %v1519, %v1454
    %v1611 = vadd.f32 %v1483, %v1418
    %v1612 = vadd.f32 %v1522, %v1457
    %v1613 = vadd.f32 %v1485, %v1420
    %v1614 = vadd.f32 %v1524, %v1459
    %v1615 = vadd.f32 %v1488, %v1423
    %v1616 = vadd.f32 %v1527, %v1462
    %v1617 = vadd.f32 %v1490, %v1425
    %v1618 = vadd.f32 %v1529, %v1464
    %v1619 = vadd.f32 %v1595, %v1607
    %v1620 = vadd.f32 %v1596, %v1608
    %v1621 = vadd.f32 %v1597, %v1609
    %v1622 = vadd.f32 %v1598, %v1610
    %v1623 = vadd.f32 %v1599, %v1611
    %v1624 = vadd.f32 %v1600, %v1612
    %v1625 = vadd.f32 %v1601, %v1613
    %v1626 = vadd.f32 %v1602, %v1614
    %v1627 = vadd.f32 %v1603, %v1615
    %v1628 = vadd.f32 %v1604, %v1616
    %v1629 = vadd.f32 %v1605, %v1617
    %v1630 = vadd.f32 %v1606, %v1618
    %1631 = vst [vmem:[%s1594] sm:$0xff] %v1619
    %1632 = vst [vmem:[%s1594 + $0x8] sm:$0xff] %v1620
    %1633 = vst [vmem:[%s1594 + $0x10] sm:$0xff] %v1621
    %1634 = vst [vmem:[%s1594 + $0x18] sm:$0xff] %v1622
    %1635 = vst [vmem:[%s1594 + $0x20] sm:$0xff] %v1623
    %1636 = vst [vmem:[%s1594 + $0x28] sm:$0xff] %v1624
    %1637 = vst [vmem:[%s1594 + $0x30] sm:$0xff] %v1625
    %1638 = vst [vmem:[%s1594 + $0x38] sm:$0xff] %v1626
    %1639 = vst [vmem:[%s1594 + $0x40] sm:$0xff] %v1627
    %1640 = vst [vmem:[%s1594 + $0x48] sm:$0xff] %v1628
    %1641 = vst [vmem:[%s1594 + $0x50] sm:$0xff] %v1629
    %1642 = vst [vmem:[%s1594 + $0x58] sm:$0xff] %v1630
    // Predicated region
    $region22: #{tpu_custom_call.1} parent=1 // pred_check
      %p1643 = pneg %p19
    $region23: #{tpu_custom_call.1} parent=1 // pred_check_branch
      %1645 = sbr.rel (%p1643) target = $region25
    $region24: #{tpu_custom_call.1} parent=1 // pred_region
      %v1646 = vlaneseq
      %v1647 = vshrl.u32 %v1646, 7
      %v1648 = vadd.s32 %v1647, 8
      %v1649 = vcvt.s32.f32 %v1647
      %v1650 = vcvt.s32.f32 %v1648
      %v1651 = vsub.f32 %v1649, 8.0
      %v1652 = vsub.f32 %v1650, 8.0
      %v1653 = vmul.f32 %v1651, 0.0625
      %v1654 = vmul.f32 %v1652, 0.0625
      %s1655 = scalar_lea.vmem %s0, 1
      %v1656 = vld [vmem:[%s1655] ss:$2 sm:$0x3]
      %v1658 = vperm.slane %v1656, 0
      %v1659 = vperm.slane %v1656, 1
      %v1662 = vmul.f32 %v1653, %v1658
      %v1663 = vmul.f32 %v1653, %v1659
      %v1664 = vmul.f32 %v1654, %v1658
      %v1665 = vmul.f32 %v1654, %v1659
      %v1666 = vfloor.f32 %v1662
      %v1667 = vfloor.f32 %v1663
      %v1668 = vfloor.f32 %v1664
      %v1669 = vfloor.f32 %v1665
      %v1670 = vsub.f32 %v1662, %v1666
      %v1671 = vsub.f32 %v1663, %v1667
      %v1672 = vsub.f32 %v1664, %v1668
      %v1673 = vsub.f32 %v1665, %v1669
      %v1674 = vmul.f32 %v1670, -6.2831855
      %v1675 = vmul.f32 %v1671, -6.2831855
      %v1676 = vmul.f32 %v1672, -6.2831855
      %v1677 = vmul.f32 %v1673, -6.2831855
      %v1678 = vand.u32 2147483647, %v1674
      %vm1679 = vcmp.le.f32.partialorder %v1678, 0.7853982
      %vm1680 = vcmp.lt.s32.totalorder %v1674, 0
      %v1681 = vand.u32 %v1674, 2139095040
      %v1682 = vshrl.u32 %v1681, 23
      %v1683 = vsub.s32 %v1682, 127
      %v1684 = vand.u32 2147483647, %v1674
      %v1685 = vand.u32 %v1684, 8388607
      %v1686 = vor.u32 %v1685, 8388608
      %v1687 = vsub.s32 0, %v1686
      %v1688 = vadd.s32 %v1683, 1
      %vm1689 = vcmp.gt.s32.totalorder %v1688, 0
      %v1690 = vsel %vm1689, %v1688, 0
      %v1691 = vshrl.u32 %v1690, 5
      %v1692 = vand.u32 %v1690, 31
      %v1693 = vsub.s32 32, %v1692
      %v1694 = vshrl.u32 683565275, %v1693
      %v1695 = vshll.u32 683565275, %v1692
      %v1696 = vshrl.u32 2475754826, %v1693
      %v1697 = vor.u32 %v1695, %v1696
      %v1698 = vshll.u32 2475754826, %v1692
      %v1699 = vshrl.u32 2131351028, %v1693
      %v1700 = vor.u32 %v1698, %v1699
      %v1701 = vshll.u32 2131351028, %v1692
      %v1702 = vshrl.u32 2102212464, %v1693
      %v1703 = vor.u32 %v1701, %v1702
      %v1704 = vshll.u32 2102212464, %v1692
      %v1705 = vshrl.u32 920167782, %v1693
      %v1706 = vor.u32 %v1704, %v1705
      %v1707 = vshll.u32 920167782, %v1692
      %v1708 = vshrl.u32 1326507024, %v1693
      %v1709 = vor.u32 %v1707, %v1708
      %vm1710 = vcmp.lt.s32.totalorder %v1691, 1
      %vm1711 = vcmp.lt.s32.totalorder %v1691, 2
      %vm1712 = vcmp.lt.s32.totalorder %v1691, 3
      %vm1713 = vcmp.lt.s32.totalorder %v1691, 4
      %v1714 = vsel %vm1710, %v1694, %v1697
      %v1715 = vsel %vm1713, %v1703, 2102212464
      %v1716 = vsel %vm1712, %v1700, %v1715
      %v1717 = vsel %vm1711, %v1714, %v1716
      %v1718 = vsel %vm1710, %v1697, %v1700
      %v1719 = vsel %vm1713, %v1706, 920167782
      %v1720 = vsel %vm1712, %v1703, %v1719
      %v1721 = vsel %vm1711, %v1718, %v1720
      %v1722 = vsel %vm1710, %v1700, %v1703
      %v1723 = vsel %vm1713, %v1709, 1326507024
      %v1724 = vsel %vm1712, %v1706, %v1723
      %v1725 = vsel %vm1711, %v1722, %v1724
      %v1726 = vshll.u32 %v1686, 8
      %v1727 = vand.u32 %v1726, 65535
      %v1728 = vshrl.u32 %v1726, 16
      %v1729 = vand.u32 %v1725, 65535
      %v1730 = vshrl.u32 %v1725, 16
      %v1731 = vmul.u32 %v1727, %v1729
      %v1732 = vmul.u32 %v1727, %v1730
      %v1733 = vmul.u32 %v1728, %v1729
      %v1734 = vmul.u32 %v1728, %v1730
      %v1735 = vshll.u32 %v1732, 16
      %v1736 = vshrl.u32 %v1732, 16
      %v1737 = vshll.u32 %v1733, 16
      %v1738 = vshrl.u32 %v1733, 16
      %vm1739 = vc.u32 %v1731, %v1735
      %v1740 = vsel %vm1739, 1, 0
      %v1741 = vadd.s32 %v1731, %v1735
      %v1742 = vadd.s32 %v1734, %v1740
      %vm1743 = vc.u32 %v1741, %v1737
      %v1744 = vsel %vm1743, 1, 0
      %v1745 = vadd.s32 %v1741, %v1737
      %v1746 = vadd.s32 %v1742, %v1744
      %v1747 = vadd.s32 %v1746, %v1736
      %v1748 = vadd.s32 %v1747, %v1738
      %v1749 = vand.u32 %v1726, 65535
      %v1750 = vshrl.u32 %v1726, 16
      %v1751 = vand.u32 %v1721, 65535
      %v1752 = vshrl.u32 %v1721, 16
      %v1753 = vmul.u32 %v1749, %v1751
      %v1754 = vmul.u32 %v1749, %v1752
      %v1755 = vmul.u32 %v1750, %v1751
      %v1756 = vmul.u32 %v1750, %v1752
      %v1757 = vshll.u32 %v1754, 16
      %v1758 = vshrl.u32 %v1754, 16
      %v1759 = vshll.u32 %v1755, 16
      %v1760 = vshrl.u32 %v1755, 16
      %vm1761 = vc.u32 %v1753, %v1757
      %v1762 = vsel %vm1761, 1, 0
      %v1763 = vadd.s32 %v1753, %v1757
      %v1764 = vadd.s32 %v1756, %v1762
      %vm1765 = vc.u32 %v1763, %v1759
      %v1766 = vsel %vm1765, 1, 0
      %v1767 = vadd.s32 %v1763, %v1759
      %v1768 = vadd.s32 %v1764, %v1766
      %v1769 = vadd.s32 %v1768, %v1758
      %v1770 = vadd.s32 %v1769, %v1760
      %v1771 = vmul.u32 %v1726, %v1717
      %v1772 = vadd.s32 %v1748, %v1767
      %vm1773 = vc.u32 %v1748, %v1767
      %v1774 = vadd.s32 %v1770, 1
      %v1775 = vsel %vm1773, %v1774, %v1770
      %v1776 = vadd.s32 %v1771, %v1775
      %v1777 = vadd.s32 %v1776, 536870912
      %v1778 = vshrl.u32 %v1777, 30
      %v1779 = vshll.u32 %v1778, 30
      %v1780 = vsub.s32 %v1776, %v1779
      %vm1781 = vcmp.lt.s32.totalorder %v1780, 0
      %v1782 = vsub.s32 0, %v1780
      %v1783 = vsel %vm1781, %v1782, %v1780
      %v1784 = vclz %v1783
      %v1785 = vsub.s32 %v1784, 2
      %vm1786 = vcmp.gt.s32.totalorder 0, %v1785
      %v1787 = vsel %vm1786, 0, %v1785
      %v1788 = vsub.s32 32, %v1787
      %v1789 = vshll.u32 %v1780, %v1787
      %v1790 = vshrl.u32 %v1772, %v1788
      %v1791 = vor.u32 %v1789, %v1790
      %v1792 = vsub.s32 4294967266, %v1787
      %v1793 = vadd.s32 %v1792, 127
      %v1794 = vshll.u32 %v1793, 23
      %v1795 = vor.u32 4788187, %v1794
      %v1796 = vand.u32 2147483647, %v1795
      %v1798 = vcvt.s32.f32 %v1791
      %v1799 = vmul.f32 %v1798, %v1796
      %v1800 = vxor.u32 %v1799, 2147483648
      %v1801 = vsel %vm1680, %v1800, %v1799
      %v1802 = vsub.s32 4, %v1778
      %v1803 = vsel %vm1680, %v1802, %v1778
      %v1804 = vsel %vm1679, %v1674, %v1801
      %v1805 = vsel %vm1679, 0, %v1803
      %v1806 = vmul.f32 %v1804, %v1804
      %v1807 = vmul.f32 %v1806, -0.001358992
      %v1808 = vadd.f32 %v1807, 0.041655596
      %v1809 = vmul.f32 %v1806, %v1808
      %v1810 = vadd.f32 %v1809, -0.4999988
      %v1811 = vmul.f32 %v1806, %v1810
      %v1812 = vadd.f32 1.0, %v1811
      %v1813 = vmul.f32 %v1804, %v1804
      %v1814 = vmul.f32 %v1813, -0.00019511016
      %v1815 = vadd.f32 %v1814, 0.008332121
      %v1816 = vmul.f32 %v1813, %v1815
      %v1817 = vadd.f32 %v1816, -0.16666654
      %v1818 = vmul.f32 %v1813, %v1817
      %v1819 = vadd.f32 %v1818, 1.0
      %v1820 = vmul.f32 %v1819, %v1804
      %vm1821 = vweird.f32 %v1674
      %v1822 = vand.u32 %v1805, 3
      %vm1823 = vcmp.lt.s32.totalorder %v1822, 2
      %vm1824 = vcmp.eq.s32.totalorder %v1822, 0
      %v1825 = vxor.u32 %v1820, 2147483648
      %v1826 = vsel %vm1824, %v1812, %v1825
      %vm1827 = vcmp.eq.s32.totalorder %v1822, 2
      %v1828 = vxor.u32 %v1812, 2147483648
      %v1829 = vsel %vm1827, %v1828, %v1820
      %v1830 = vsel %vm1823, %v1826, %v1829
      %v1831 = vsel %vm1821, nan, %v1830
      %v1832 = vand.u32 2147483647, %v1675
      %vm1833 = vcmp.le.f32.partialorder %v1832, 0.7853982
      %vm1834 = vcmp.lt.s32.totalorder %v1675, 0
      %v1835 = vand.u32 %v1675, 2139095040
      %v1836 = vshrl.u32 %v1835, 23
      %v1837 = vsub.s32 %v1836, 127
      %v1838 = vand.u32 2147483647, %v1675
      %v1839 = vand.u32 %v1838, 8388607
      %v1840 = vor.u32 %v1839, 8388608
      %v1841 = vsub.s32 0, %v1840
      %v1842 = vadd.s32 %v1837, 1
      %vm1843 = vcmp.gt.s32.totalorder %v1842, 0
      %v1844 = vsel %vm1843, %v1842, 0
      %v1845 = vshrl.u32 %v1844, 5
      %v1846 = vand.u32 %v1844, 31
      %v1847 = vsub.s32 32, %v1846
      %v1848 = vshrl.u32 683565275, %v1847
      %v1849 = vshll.u32 683565275, %v1846
      %v1850 = vshrl.u32 2475754826, %v1847
      %v1851 = vor.u32 %v1849, %v1850
      %v1852 = vshll.u32 2475754826, %v1846
      %v1853 = vshrl.u32 2131351028, %v1847
      %v1854 = vor.u32 %v1852, %v1853
      %v1855 = vshll.u32 2131351028, %v1846
      %v1856 = vshrl.u32 2102212464, %v1847
      %v1857 = vor.u32 %v1855, %v1856
      %v1858 = vshll.u32 2102212464, %v1846
      %v1859 = vshrl.u32 920167782, %v1847
      %v1860 = vor.u32 %v1858, %v1859
      %v1861 = vshll.u32 920167782, %v1846
      %v1862 = vshrl.u32 1326507024, %v1847
      %v1863 = vor.u32 %v1861, %v1862
      %vm1864 = vcmp.lt.s32.totalorder %v1845, 1
      %vm1865 = vcmp.lt.s32.totalorder %v1845, 2
      %vm1866 = vcmp.lt.s32.totalorder %v1845, 3
      %vm1867 = vcmp.lt.s32.totalorder %v1845, 4
      %v1868 = vsel %vm1864, %v1848, %v1851
      %v1869 = vsel %vm1867, %v1857, 2102212464
      %v1870 = vsel %vm1866, %v1854, %v1869
      %v1871 = vsel %vm1865, %v1868, %v1870
      %v1872 = vsel %vm1864, %v1851, %v1854
      %v1873 = vsel %vm1867, %v1860, 920167782
      %v1874 = vsel %vm1866, %v1857, %v1873
      %v1875 = vsel %vm1865, %v1872, %v1874
      %v1876 = vsel %vm1864, %v1854, %v1857
      %v1877 = vsel %vm1867, %v1863, 1326507024
      %v1878 = vsel %vm1866, %v1860, %v1877
      %v1879 = vsel %vm1865, %v1876, %v1878
      %v1880 = vshll.u32 %v1840, 8
      %v1881 = vand.u32 %v1880, 65535
      %v1882 = vshrl.u32 %v1880, 16
      %v1883 = vand.u32 %v1879, 65535
      %v1884 = vshrl.u32 %v1879, 16
      %v1885 = vmul.u32 %v1881, %v1883
      %v1886 = vmul.u32 %v1881, %v1884
      %v1887 = vmul.u32 %v1882, %v1883
      %v1888 = vmul.u32 %v1882, %v1884
      %v1889 = vshll.u32 %v1886, 16
      %v1890 = vshrl.u32 %v1886, 16
      %v1891 = vshll.u32 %v1887, 16
      %v1892 = vshrl.u32 %v1887, 16
      %vm1893 = vc.u32 %v1885, %v1889
      %v1894 = vsel %vm1893, 1, 0
      %v1895 = vadd.s32 %v1885, %v1889
      %v1896 = vadd.s32 %v1888, %v1894
      %vm1897 = vc.u32 %v1895, %v1891
      %v1898 = vsel %vm1897, 1, 0
      %v1899 = vadd.s32 %v1895, %v1891
      %v1900 = vadd.s32 %v1896, %v1898
      %v1901 = vadd.s32 %v1900, %v1890
      %v1902 = vadd.s32 %v1901, %v1892
      %v1903 = vand.u32 %v1880, 65535
      %v1904 = vshrl.u32 %v1880, 16
      %v1905 = vand.u32 %v1875, 65535
      %v1906 = vshrl.u32 %v1875, 16
      %v1907 = vmul.u32 %v1903, %v1905
      %v1908 = vmul.u32 %v1903, %v1906
      %v1909 = vmul.u32 %v1904, %v1905
      %v1910 = vmul.u32 %v1904, %v1906
      %v1911 = vshll.u32 %v1908, 16
      %v1912 = vshrl.u32 %v1908, 16
      %v1913 = vshll.u32 %v1909, 16
      %v1914 = vshrl.u32 %v1909, 16
      %vm1915 = vc.u32 %v1907, %v1911
      %v1916 = vsel %vm1915, 1, 0
      %v1917 = vadd.s32 %v1907, %v1911
      %v1918 = vadd.s32 %v1910, %v1916
      %vm1919 = vc.u32 %v1917, %v1913
      %v1920 = vsel %vm1919, 1, 0
      %v1921 = vadd.s32 %v1917, %v1913
      %v1922 = vadd.s32 %v1918, %v1920
      %v1923 = vadd.s32 %v1922, %v1912
      %v1924 = vadd.s32 %v1923, %v1914
      %v1925 = vmul.u32 %v1880, %v1871
      %v1926 = vadd.s32 %v1902, %v1921
      %vm1927 = vc.u32 %v1902, %v1921
      %v1928 = vadd.s32 %v1924, 1
      %v1929 = vsel %vm1927, %v1928, %v1924
      %v1930 = vadd.s32 %v1925, %v1929
      %v1931 = vadd.s32 %v1930, 536870912
      %v1932 = vshrl.u32 %v1931, 30
      %v1933 = vshll.u32 %v1932, 30
      %v1934 = vsub.s32 %v1930, %v1933
      %vm1935 = vcmp.lt.s32.totalorder %v1934, 0
      %v1936 = vsub.s32 0, %v1934
      %v1937 = vsel %vm1935, %v1936, %v1934
      %v1938 = vclz %v1937
      %v1939 = vsub.s32 %v1938, 2
      %vm1940 = vcmp.gt.s32.totalorder 0, %v1939
      %v1941 = vsel %vm1940, 0, %v1939
      %v1942 = vsub.s32 32, %v1941
      %v1943 = vshll.u32 %v1934, %v1941
      %v1944 = vshrl.u32 %v1926, %v1942
      %v1945 = vor.u32 %v1943, %v1944
      %v1946 = vsub.s32 4294967266, %v1941
      %v1947 = vadd.s32 %v1946, 127
      %v1948 = vshll.u32 %v1947, 23
      %v1949 = vor.u32 4788187, %v1948
      %v1950 = vand.u32 2147483647, %v1949
      %v1952 = vcvt.s32.f32 %v1945
      %v1953 = vmul.f32 %v1952, %v1950
      %v1954 = vxor.u32 %v1953, 2147483648
      %v1955 = vsel %vm1834, %v1954, %v1953
      %v1956 = vsub.s32 4, %v1932
      %v1957 = vsel %vm1834, %v1956, %v1932
      %v1958 = vsel %vm1833, %v1675, %v1955
      %v1959 = vsel %vm1833, 0, %v1957
      %v1960 = vmul.f32 %v1958, %v1958
      %v1961 = vmul.f32 %v1960, -0.001358992
      %v1962 = vadd.f32 %v1961, 0.041655596
      %v1963 = vmul.f32 %v1960, %v1962
      %v1964 = vadd.f32 %v1963, -0.4999988
      %v1965 = vmul.f32 %v1960, %v1964
      %v1966 = vadd.f32 1.0, %v1965
      %v1967 = vmul.f32 %v1958, %v1958
      %v1968 = vmul.f32 %v1967, -0.00019511016
      %v1969 = vadd.f32 %v1968, 0.008332121
      %v1970 = vmul.f32 %v1967, %v1969
      %v1971 = vadd.f32 %v1970, -0.16666654
      %v1972 = vmul.f32 %v1967, %v1971
      %v1973 = vadd.f32 %v1972, 1.0
      %v1974 = vmul.f32 %v1973, %v1958
      %vm1975 = vweird.f32 %v1675
      %v1976 = vand.u32 %v1959, 3
      %vm1977 = vcmp.lt.s32.totalorder %v1976, 2
      %vm1978 = vcmp.eq.s32.totalorder %v1976, 0
      %v1979 = vxor.u32 %v1974, 2147483648
      %v1980 = vsel %vm1978, %v1966, %v1979
      %vm1981 = vcmp.eq.s32.totalorder %v1976, 2
      %v1982 = vxor.u32 %v1966, 2147483648
      %v1983 = vsel %vm1981, %v1982, %v1974
      %v1984 = vsel %vm1977, %v1980, %v1983
      %v1985 = vsel %vm1975, nan, %v1984
      %v1986 = vand.u32 2147483647, %v1676
      %vm1987 = vcmp.le.f32.partialorder %v1986, 0.7853982
      %vm1988 = vcmp.lt.s32.totalorder %v1676, 0
      %v1989 = vand.u32 %v1676, 2139095040
      %v1990 = vshrl.u32 %v1989, 23
      %v1991 = vsub.s32 %v1990, 127
      %v1992 = vand.u32 2147483647, %v1676
      %v1993 = vand.u32 %v1992, 8388607
      %v1994 = vor.u32 %v1993, 8388608
      %v1995 = vsub.s32 0, %v1994
      %v1996 = vadd.s32 %v1991, 1
      %vm1997 = vcmp.gt.s32.totalorder %v1996, 0
      %v1998 = vsel %vm1997, %v1996, 0
      %v1999 = vshrl.u32 %v1998, 5
      %v2000 = vand.u32 %v1998, 31
      %v2001 = vsub.s32 32, %v2000
      %v2002 = vshrl.u32 683565275, %v2001
      %v2003 = vshll.u32 683565275, %v2000
      %v2004 = vshrl.u32 2475754826, %v2001
      %v2005 = vor.u32 %v2003, %v2004
      %v2006 = vshll.u32 2475754826, %v2000
      %v2007 = vshrl.u32 2131351028, %v2001
      %v2008 = vor.u32 %v2006, %v2007
      %v2009 = vshll.u32 2131351028, %v2000
      %v2010 = vshrl.u32 2102212464, %v2001
      %v2011 = vor.u32 %v2009, %v2010
      %v2012 = vshll.u32 2102212464, %v2000
      %v2013 = vshrl.u32 920167782, %v2001
      %v2014 = vor.u32 %v2012, %v2013
      %v2015 = vshll.u32 920167782, %v2000
      %v2016 = vshrl.u32 1326507024, %v2001
      %v2017 = vor.u32 %v2015, %v2016
      %vm2018 = vcmp.lt.s32.totalorder %v1999, 1
      %vm2019 = vcmp.lt.s32.totalorder %v1999, 2
      %vm2020 = vcmp.lt.s32.totalorder %v1999, 3
      %vm2021 = vcmp.lt.s32.totalorder %v1999, 4
      %v2022 = vsel %vm2018, %v2002, %v2005
      %v2023 = vsel %vm2021, %v2011, 2102212464
      %v2024 = vsel %vm2020, %v2008, %v2023
      %v2025 = vsel %vm2019, %v2022, %v2024
      %v2026 = vsel %vm2018, %v2005, %v2008
      %v2027 = vsel %vm2021, %v2014, 920167782
      %v2028 = vsel %vm2020, %v2011, %v2027
      %v2029 = vsel %vm2019, %v2026, %v2028
      %v2030 = vsel %vm2018, %v2008, %v2011
      %v2031 = vsel %vm2021, %v2017, 1326507024
      %v2032 = vsel %vm2020, %v2014, %v2031
      %v2033 = vsel %vm2019, %v2030, %v2032
      %v2034 = vshll.u32 %v1994, 8
      %v2035 = vand.u32 %v2034, 65535
      %v2036 = vshrl.u32 %v2034, 16
      %v2037 = vand.u32 %v2033, 65535
      %v2038 = vshrl.u32 %v2033, 16
      %v2039 = vmul.u32 %v2035, %v2037
      %v2040 = vmul.u32 %v2035, %v2038
      %v2041 = vmul.u32 %v2036, %v2037
      %v2042 = vmul.u32 %v2036, %v2038
      %v2043 = vshll.u32 %v2040, 16
      %v2044 = vshrl.u32 %v2040, 16
      %v2045 = vshll.u32 %v2041, 16
      %v2046 = vshrl.u32 %v2041, 16
      %vm2047 = vc.u32 %v2039, %v2043
      %v2048 = vsel %vm2047, 1, 0
      %v2049 = vadd.s32 %v2039, %v2043
      %v2050 = vadd.s32 %v2042, %v2048
      %vm2051 = vc.u32 %v2049, %v2045
      %v2052 = vsel %vm2051, 1, 0
      %v2053 = vadd.s32 %v2049, %v2045
      %v2054 = vadd.s32 %v2050, %v2052
      %v2055 = vadd.s32 %v2054, %v2044
      %v2056 = vadd.s32 %v2055, %v2046
      %v2057 = vand.u32 %v2034, 65535
      %v2058 = vshrl.u32 %v2034, 16
      %v2059 = vand.u32 %v2029, 65535
      %v2060 = vshrl.u32 %v2029, 16
      %v2061 = vmul.u32 %v2057, %v2059
      %v2062 = vmul.u32 %v2057, %v2060
      %v2063 = vmul.u32 %v2058, %v2059
      %v2064 = vmul.u32 %v2058, %v2060
      %v2065 = vshll.u32 %v2062, 16
      %v2066 = vshrl.u32 %v2062, 16
      %v2067 = vshll.u32 %v2063, 16
      %v2068 = vshrl.u32 %v2063, 16
      %vm2069 = vc.u32 %v2061, %v2065
      %v2070 = vsel %vm2069, 1, 0
      %v2071 = vadd.s32 %v2061, %v2065
      %v2072 = vadd.s32 %v2064, %v2070
      %vm2073 = vc.u32 %v2071, %v2067
      %v2074 = vsel %vm2073, 1, 0
      %v2075 = vadd.s32 %v2071, %v2067
      %v2076 = vadd.s32 %v2072, %v2074
      %v2077 = vadd.s32 %v2076, %v2066
      %v2078 = vadd.s32 %v2077, %v2068
      %v2079 = vmul.u32 %v2034, %v2025
      %v2080 = vadd.s32 %v2056, %v2075
      %vm2081 = vc.u32 %v2056, %v2075
      %v2082 = vadd.s32 %v2078, 1
      %v2083 = vsel %vm2081, %v2082, %v2078
      %v2084 = vadd.s32 %v2079, %v2083
      %v2085 = vadd.s32 %v2084, 536870912
      %v2086 = vshrl.u32 %v2085, 30
      %v2087 = vshll.u32 %v2086, 30
      %v2088 = vsub.s32 %v2084, %v2087
      %vm2089 = vcmp.lt.s32.totalorder %v2088, 0
      %v2090 = vsub.s32 0, %v2088
      %v2091 = vsel %vm2089, %v2090, %v2088
      %v2092 = vclz %v2091
      %v2093 = vsub.s32 %v2092, 2
      %vm2094 = vcmp.gt.s32.totalorder 0, %v2093
      %v2095 = vsel %vm2094, 0, %v2093
      %v2096 = vsub.s32 32, %v2095
      %v2097 = vshll.u32 %v2088, %v2095
      %v2098 = vshrl.u32 %v2080, %v2096
      %v2099 = vor.u32 %v2097, %v2098
      %v2100 = vsub.s32 4294967266, %v2095
      %v2101 = vadd.s32 %v2100, 127
      %v2102 = vshll.u32 %v2101, 23
      %v2103 = vor.u32 4788187, %v2102
      %v2104 = vand.u32 2147483647, %v2103
      %v2106 = vcvt.s32.f32 %v2099
      %v2107 = vmul.f32 %v2106, %v2104
      %v2108 = vxor.u32 %v2107, 2147483648
      %v2109 = vsel %vm1988, %v2108, %v2107
      %v2110 = vsub.s32 4, %v2086
      %v2111 = vsel %vm1988, %v2110, %v2086
      %v2112 = vsel %vm1987, %v1676, %v2109
      %v2113 = vsel %vm1987, 0, %v2111
      %v2114 = vmul.f32 %v2112, %v2112
      %v2115 = vmul.f32 %v2114, -0.001358992
      %v2116 = vadd.f32 %v2115, 0.041655596
      %v2117 = vmul.f32 %v2114, %v2116
      %v2118 = vadd.f32 %v2117, -0.4999988
      %v2119 = vmul.f32 %v2114, %v2118
      %v2120 = vadd.f32 1.0, %v2119
      %v2121 = vmul.f32 %v2112, %v2112
      %v2122 = vmul.f32 %v2121, -0.00019511016
      %v2123 = vadd.f32 %v2122, 0.008332121
      %v2124 = vmul.f32 %v2121, %v2123
      %v2125 = vadd.f32 %v2124, -0.16666654
      %v2126 = vmul.f32 %v2121, %v2125
      %v2127 = vadd.f32 %v2126, 1.0
      %v2128 = vmul.f32 %v2127, %v2112
      %vm2129 = vweird.f32 %v1676
      %v2130 = vand.u32 %v2113, 3
      %vm2131 = vcmp.lt.s32.totalorder %v2130, 2
      %vm2132 = vcmp.eq.s32.totalorder %v2130, 0
      %v2133 = vxor.u32 %v2128, 2147483648
      %v2134 = vsel %vm2132, %v2120, %v2133
      %vm2135 = vcmp.eq.s32.totalorder %v2130, 2
      %v2136 = vxor.u32 %v2120, 2147483648
      %v2137 = vsel %vm2135, %v2136, %v2128
      %v2138 = vsel %vm2131, %v2134, %v2137
      %v2139 = vsel %vm2129, nan, %v2138
      %v2140 = vand.u32 2147483647, %v1677
      %vm2141 = vcmp.le.f32.partialorder %v2140, 0.7853982
      %vm2142 = vcmp.lt.s32.totalorder %v1677, 0
      %v2143 = vand.u32 %v1677, 2139095040
      %v2144 = vshrl.u32 %v2143, 23
      %v2145 = vsub.s32 %v2144, 127
      %v2146 = vand.u32 2147483647, %v1677
      %v2147 = vand.u32 %v2146, 8388607
      %v2148 = vor.u32 %v2147, 8388608
      %v2149 = vsub.s32 0, %v2148
      %v2150 = vadd.s32 %v2145, 1
      %vm2151 = vcmp.gt.s32.totalorder %v2150, 0
      %v2152 = vsel %vm2151, %v2150, 0
      %v2153 = vshrl.u32 %v2152, 5
      %v2154 = vand.u32 %v2152, 31
      %v2155 = vsub.s32 32, %v2154
      %v2156 = vshrl.u32 683565275, %v2155
      %v2157 = vshll.u32 683565275, %v2154
      %v2158 = vshrl.u32 2475754826, %v2155
      %v2159 = vor.u32 %v2157, %v2158
      %v2160 = vshll.u32 2475754826, %v2154
      %v2161 = vshrl.u32 2131351028, %v2155
      %v2162 = vor.u32 %v2160, %v2161
      %v2163 = vshll.u32 2131351028, %v2154
      %v2164 = vshrl.u32 2102212464, %v2155
      %v2165 = vor.u32 %v2163, %v2164
      %v2166 = vshll.u32 2102212464, %v2154
      %v2167 = vshrl.u32 920167782, %v2155
      %v2168 = vor.u32 %v2166, %v2167
      %v2169 = vshll.u32 920167782, %v2154
      %v2170 = vshrl.u32 1326507024, %v2155
      %v2171 = vor.u32 %v2169, %v2170
      %vm2172 = vcmp.lt.s32.totalorder %v2153, 1
      %vm2173 = vcmp.lt.s32.totalorder %v2153, 2
      %vm2174 = vcmp.lt.s32.totalorder %v2153, 3
      %vm2175 = vcmp.lt.s32.totalorder %v2153, 4
      %v2176 = vsel %vm2172, %v2156, %v2159
      %v2177 = vsel %vm2175, %v2165, 2102212464
      %v2178 = vsel %vm2174, %v2162, %v2177
      %v2179 = vsel %vm2173, %v2176, %v2178
      %v2180 = vsel %vm2172, %v2159, %v2162
      %v2181 = vsel %vm2175, %v2168, 920167782
      %v2182 = vsel %vm2174, %v2165, %v2181
      %v2183 = vsel %vm2173, %v2180, %v2182
      %v2184 = vsel %vm2172, %v2162, %v2165
      %v2185 = vsel %vm2175, %v2171, 1326507024
      %v2186 = vsel %vm2174, %v2168, %v2185
      %v2187 = vsel %vm2173, %v2184, %v2186
      %v2188 = vshll.u32 %v2148, 8
      %v2189 = vand.u32 %v2188, 65535
      %v2190 = vshrl.u32 %v2188, 16
      %v2191 = vand.u32 %v2187, 65535
      %v2192 = vshrl.u32 %v2187, 16
      %v2193 = vmul.u32 %v2189, %v2191
      %v2194 = vmul.u32 %v2189, %v2192
      %v2195 = vmul.u32 %v2190, %v2191
      %v2196 = vmul.u32 %v2190, %v2192
      %v2197 = vshll.u32 %v2194, 16
      %v2198 = vshrl.u32 %v2194, 16
      %v2199 = vshll.u32 %v2195, 16
      %v2200 = vshrl.u32 %v2195, 16
      %vm2201 = vc.u32 %v2193, %v2197
      %v2202 = vsel %vm2201, 1, 0
      %v2203 = vadd.s32 %v2193, %v2197
      %v2204 = vadd.s32 %v2196, %v2202
      %vm2205 = vc.u32 %v2203, %v2199
      %v2206 = vsel %vm2205, 1, 0
      %v2207 = vadd.s32 %v2203, %v2199
      %v2208 = vadd.s32 %v2204, %v2206
      %v2209 = vadd.s32 %v2208, %v2198
      %v2210 = vadd.s32 %v2209, %v2200
      %v2211 = vand.u32 %v2188, 65535
      %v2212 = vshrl.u32 %v2188, 16
      %v2213 = vand.u32 %v2183, 65535
      %v2214 = vshrl.u32 %v2183, 16
      %v2215 = vmul.u32 %v2211, %v2213
      %v2216 = vmul.u32 %v2211, %v2214
      %v2217 = vmul.u32 %v2212, %v2213
      %v2218 = vmul.u32 %v2212, %v2214
      %v2219 = vshll.u32 %v2216, 16
      %v2220 = vshrl.u32 %v2216, 16
      %v2221 = vshll.u32 %v2217, 16
      %v2222 = vshrl.u32 %v2217, 16
      %vm2223 = vc.u32 %v2215, %v2219
      %v2224 = vsel %vm2223, 1, 0
      %v2225 = vadd.s32 %v2215, %v2219
      %v2226 = vadd.s32 %v2218, %v2224
      %vm2227 = vc.u32 %v2225, %v2221
      %v2228 = vsel %vm2227, 1, 0
      %v2229 = vadd.s32 %v2225, %v2221
      %v2230 = vadd.s32 %v2226, %v2228
      %v2231 = vadd.s32 %v2230, %v2220
      %v2232 = vadd.s32 %v2231, %v2222
      %v2233 = vmul.u32 %v2188, %v2179
      %v2234 = vadd.s32 %v2210, %v2229
      %vm2235 = vc.u32 %v2210, %v2229
      %v2236 = vadd.s32 %v2232, 1
      %v2237 = vsel %vm2235, %v2236, %v2232
      %v2238 = vadd.s32 %v2233, %v2237
      %v2239 = vadd.s32 %v2238, 536870912
      %v2240 = vshrl.u32 %v2239, 30
      %v2241 = vshll.u32 %v2240, 30
      %v2242 = vsub.s32 %v2238, %v2241
      %vm2243 = vcmp.lt.s32.totalorder %v2242, 0
      %v2244 = vsub.s32 0, %v2242
      %v2245 = vsel %vm2243, %v2244, %v2242
      %v2246 = vclz %v2245
      %v2247 = vsub.s32 %v2246, 2
      %vm2248 = vcmp.gt.s32.totalorder 0, %v2247
      %v2249 = vsel %vm2248, 0, %v2247
      %v2250 = vsub.s32 32, %v2249
      %v2251 = vshll.u32 %v2242, %v2249
      %v2252 = vshrl.u32 %v2234, %v2250
      %v2253 = vor.u32 %v2251, %v2252
      %v2254 = vsub.s32 4294967266, %v2249
      %v2255 = vadd.s32 %v2254, 127
      %v2256 = vshll.u32 %v2255, 23
      %v2257 = vor.u32 4788187, %v2256
      %v2258 = vand.u32 2147483647, %v2257
      %v2260 = vcvt.s32.f32 %v2253
      %v2261 = vmul.f32 %v2260, %v2258
      %v2262 = vxor.u32 %v2261, 2147483648
      %v2263 = vsel %vm2142, %v2262, %v2261
      %v2264 = vsub.s32 4, %v2240
      %v2265 = vsel %vm2142, %v2264, %v2240
      %v2266 = vsel %vm2141, %v1677, %v2263
      %v2267 = vsel %vm2141, 0, %v2265
      %v2268 = vmul.f32 %v2266, %v2266
      %v2269 = vmul.f32 %v2268, -0.001358992
      %v2270 = vadd.f32 %v2269, 0.041655596
      %v2271 = vmul.f32 %v2268, %v2270
      %v2272 = vadd.f32 %v2271, -0.4999988
      %v2273 = vmul.f32 %v2268, %v2272
      %v2274 = vadd.f32 1.0, %v2273
      %v2275 = vmul.f32 %v2266, %v2266
      %v2276 = vmul.f32 %v2275, -0.00019511016
      %v2277 = vadd.f32 %v2276, 0.008332121
      %v2278 = vmul.f32 %v2275, %v2277
      %v2279 = vadd.f32 %v2278, -0.16666654
      %v2280 = vmul.f32 %v2275, %v2279
      %v2281 = vadd.f32 %v2280, 1.0
      %v2282 = vmul.f32 %v2281, %v2266
      %vm2283 = vweird.f32 %v1677
      %v2284 = vand.u32 %v2267, 3
      %vm2285 = vcmp.lt.s32.totalorder %v2284, 2
      %vm2286 = vcmp.eq.s32.totalorder %v2284, 0
      %v2287 = vxor.u32 %v2282, 2147483648
      %v2288 = vsel %vm2286, %v2274, %v2287
      %vm2289 = vcmp.eq.s32.totalorder %v2284, 2
      %v2290 = vxor.u32 %v2274, 2147483648
      %v2291 = vsel %vm2289, %v2290, %v2282
      %v2292 = vsel %vm2285, %v2288, %v2291
      %v2293 = vsel %vm2283, nan, %v2292
      %v2294 = vand.u32 2147483647, %v1674
      %vm2295 = vcmp.le.f32.partialorder %v2294, 0.7853982
      %vm2296 = vcmp.lt.s32.totalorder %v1674, 0
      %v2297 = vand.u32 %v1674, 2139095040
      %v2298 = vshrl.u32 %v2297, 23
      %v2299 = vsub.s32 %v2298, 127
      %v2300 = vand.u32 2147483647, %v1674
      %v2301 = vand.u32 %v2300, 8388607
      %v2302 = vor.u32 %v2301, 8388608
      %v2303 = vsub.s32 0, %v2302
      %v2304 = vadd.s32 %v2299, 1
      %vm2305 = vcmp.gt.s32.totalorder %v2304, 0
      %v2306 = vsel %vm2305, %v2304, 0
      %v2307 = vshrl.u32 %v2306, 5
      %v2308 = vand.u32 %v2306, 31
      %v2309 = vsub.s32 32, %v2308
      %v2310 = vshrl.u32 683565275, %v2309
      %v2311 = vshll.u32 683565275, %v2308
      %v2312 = vshrl.u32 2475754826, %v2309
      %v2313 = vor.u32 %v2311, %v2312
      %v2314 = vshll.u32 2475754826, %v2308
      %v2315 = vshrl.u32 2131351028, %v2309
      %v2316 = vor.u32 %v2314, %v2315
      %v2317 = vshll.u32 2131351028, %v2308
      %v2318 = vshrl.u32 2102212464, %v2309
      %v2319 = vor.u32 %v2317, %v2318
      %v2320 = vshll.u32 2102212464, %v2308
      %v2321 = vshrl.u32 920167782, %v2309
      %v2322 = vor.u32 %v2320, %v2321
      %v2323 = vshll.u32 920167782, %v2308
      %v2324 = vshrl.u32 1326507024, %v2309
      %v2325 = vor.u32 %v2323, %v2324
      %vm2326 = vcmp.lt.s32.totalorder %v2307, 1
      %vm2327 = vcmp.lt.s32.totalorder %v2307, 2
      %vm2328 = vcmp.lt.s32.totalorder %v2307, 3
      %vm2329 = vcmp.lt.s32.totalorder %v2307, 4
      %v2330 = vsel %vm2326, %v2310, %v2313
      %v2331 = vsel %vm2329, %v2319, 2102212464
      %v2332 = vsel %vm2328, %v2316, %v2331
      %v2333 = vsel %vm2327, %v2330, %v2332
      %v2334 = vsel %vm2326, %v2313, %v2316
      %v2335 = vsel %vm2329, %v2322, 920167782
      %v2336 = vsel %vm2328, %v2319, %v2335
      %v2337 = vsel %vm2327, %v2334, %v2336
      %v2338 = vsel %vm2326, %v2316, %v2319
      %v2339 = vsel %vm2329, %v2325, 1326507024
      %v2340 = vsel %vm2328, %v2322, %v2339
      %v2341 = vsel %vm2327, %v2338, %v2340
      %v2342 = vshll.u32 %v2302, 8
      %v2343 = vand.u32 %v2342, 65535
      %v2344 = vshrl.u32 %v2342, 16
      %v2345 = vand.u32 %v2341, 65535
      %v2346 = vshrl.u32 %v2341, 16
      %v2347 = vmul.u32 %v2343, %v2345
      %v2348 = vmul.u32 %v2343, %v2346
      %v2349 = vmul.u32 %v2344, %v2345
      %v2350 = vmul.u32 %v2344, %v2346
      %v2351 = vshll.u32 %v2348, 16
      %v2352 = vshrl.u32 %v2348, 16
      %v2353 = vshll.u32 %v2349, 16
      %v2354 = vshrl.u32 %v2349, 16
      %vm2355 = vc.u32 %v2347, %v2351
      %v2356 = vsel %vm2355, 1, 0
      %v2357 = vadd.s32 %v2347, %v2351
      %v2358 = vadd.s32 %v2350, %v2356
      %vm2359 = vc.u32 %v2357, %v2353
      %v2360 = vsel %vm2359, 1, 0
      %v2361 = vadd.s32 %v2357, %v2353
      %v2362 = vadd.s32 %v2358, %v2360
      %v2363 = vadd.s32 %v2362, %v2352
      %v2364 = vadd.s32 %v2363, %v2354
      %v2365 = vand.u32 %v2342, 65535
      %v2366 = vshrl.u32 %v2342, 16
      %v2367 = vand.u32 %v2337, 65535
      %v2368 = vshrl.u32 %v2337, 16
      %v2369 = vmul.u32 %v2365, %v2367
      %v2370 = vmul.u32 %v2365, %v2368
      %v2371 = vmul.u32 %v2366, %v2367
      %v2372 = vmul.u32 %v2366, %v2368
      %v2373 = vshll.u32 %v2370, 16
      %v2374 = vshrl.u32 %v2370, 16
      %v2375 = vshll.u32 %v2371, 16
      %v2376 = vshrl.u32 %v2371, 16
      %vm2377 = vc.u32 %v2369, %v2373
      %v2378 = vsel %vm2377, 1, 0
      %v2379 = vadd.s32 %v2369, %v2373
      %v2380 = vadd.s32 %v2372, %v2378
      %vm2381 = vc.u32 %v2379, %v2375
      %v2382 = vsel %vm2381, 1, 0
      %v2383 = vadd.s32 %v2379, %v2375
      %v2384 = vadd.s32 %v2380, %v2382
      %v2385 = vadd.s32 %v2384, %v2374
      %v2386 = vadd.s32 %v2385, %v2376
      %v2387 = vmul.u32 %v2342, %v2333
      %v2388 = vadd.s32 %v2364, %v2383
      %vm2389 = vc.u32 %v2364, %v2383
      %v2390 = vadd.s32 %v2386, 1
      %v2391 = vsel %vm2389, %v2390, %v2386
      %v2392 = vadd.s32 %v2387, %v2391
      %v2393 = vadd.s32 %v2392, 536870912
      %v2394 = vshrl.u32 %v2393, 30
      %v2395 = vshll.u32 %v2394, 30
      %v2396 = vsub.s32 %v2392, %v2395
      %vm2397 = vcmp.lt.s32.totalorder %v2396, 0
      %v2398 = vsub.s32 0, %v2396
      %v2399 = vsel %vm2397, %v2398, %v2396
      %v2400 = vclz %v2399
      %v2401 = vsub.s32 %v2400, 2
      %vm2402 = vcmp.gt.s32.totalorder 0, %v2401
      %v2403 = vsel %vm2402, 0, %v2401
      %v2404 = vsub.s32 32, %v2403
      %v2405 = vshll.u32 %v2396, %v2403
      %v2406 = vshrl.u32 %v2388, %v2404
      %v2407 = vor.u32 %v2405, %v2406
      %v2408 = vsub.s32 4294967266, %v2403
      %v2409 = vadd.s32 %v2408, 127
      %v2410 = vshll.u32 %v2409, 23
      %v2411 = vor.u32 4788187, %v2410
      %v2412 = vand.u32 2147483647, %v2411
      %v2414 = vcvt.s32.f32 %v2407
      %v2415 = vmul.f32 %v2414, %v2412
      %v2416 = vxor.u32 %v2415, 2147483648
      %v2417 = vsel %vm2296, %v2416, %v2415
      %v2418 = vsub.s32 4, %v2394
      %v2419 = vsel %vm2296, %v2418, %v2394
      %v2420 = vsel %vm2295, %v1674, %v2417
      %v2421 = vsel %vm2295, 0, %v2419
      %v2422 = vmul.f32 %v2420, %v2420
      %v2423 = vmul.f32 %v2422, -0.001358992
      %v2424 = vadd.f32 %v2423, 0.041655596
      %v2425 = vmul.f32 %v2422, %v2424
      %v2426 = vadd.f32 %v2425, -0.4999988
      %v2427 = vmul.f32 %v2422, %v2426
      %v2428 = vadd.f32 1.0, %v2427
      %v2429 = vmul.f32 %v2420, %v2420
      %v2430 = vmul.f32 %v2429, -0.00019511016
      %v2431 = vadd.f32 %v2430, 0.008332121
      %v2432 = vmul.f32 %v2429, %v2431
      %v2433 = vadd.f32 %v2432, -0.16666654
      %v2434 = vmul.f32 %v2429, %v2433
      %v2435 = vadd.f32 %v2434, 1.0
      %v2436 = vmul.f32 %v2435, %v2420
      %vm2437 = vweird.f32 %v1674
      %v2438 = vadd.s32 %v2421, 3
      %v2439 = vand.u32 %v2438, 3
      %vm2440 = vcmp.lt.s32.totalorder %v2439, 2
      %vm2441 = vcmp.eq.s32.totalorder %v2439, 0
      %v2442 = vxor.u32 %v2436, 2147483648
      %v2443 = vsel %vm2441, %v2428, %v2442
      %vm2444 = vcmp.eq.s32.totalorder %v2439, 2
      %v2445 = vxor.u32 %v2428, 2147483648
      %v2446 = vsel %vm2444, %v2445, %v2436
      %v2447 = vsel %vm2440, %v2443, %v2446
      %v2448 = vsel %vm2437, nan, %v2447
      %v2449 = vand.u32 2147483647, %v1675
      %vm2450 = vcmp.le.f32.partialorder %v2449, 0.7853982
      %vm2451 = vcmp.lt.s32.totalorder %v1675, 0
      %v2452 = vand.u32 %v1675, 2139095040
      %v2453 = vshrl.u32 %v2452, 23
      %v2454 = vsub.s32 %v2453, 127
      %v2455 = vand.u32 2147483647, %v1675
      %v2456 = vand.u32 %v2455, 8388607
      %v2457 = vor.u32 %v2456, 8388608
      %v2458 = vsub.s32 0, %v2457
      %v2459 = vadd.s32 %v2454, 1
      %vm2460 = vcmp.gt.s32.totalorder %v2459, 0
      %v2461 = vsel %vm2460, %v2459, 0
      %v2462 = vshrl.u32 %v2461, 5
      %v2463 = vand.u32 %v2461, 31
      %v2464 = vsub.s32 32, %v2463
      %v2465 = vshrl.u32 683565275, %v2464
      %v2466 = vshll.u32 683565275, %v2463
      %v2467 = vshrl.u32 2475754826, %v2464
      %v2468 = vor.u32 %v2466, %v2467
      %v2469 = vshll.u32 2475754826, %v2463
      %v2470 = vshrl.u32 2131351028, %v2464
      %v2471 = vor.u32 %v2469, %v2470
      %v2472 = vshll.u32 2131351028, %v2463
      %v2473 = vshrl.u32 2102212464, %v2464
      %v2474 = vor.u32 %v2472, %v2473
      %v2475 = vshll.u32 2102212464, %v2463
      %v2476 = vshrl.u32 920167782, %v2464
      %v2477 = vor.u32 %v2475, %v2476
      %v2478 = vshll.u32 920167782, %v2463
      %v2479 = vshrl.u32 1326507024, %v2464
      %v2480 = vor.u32 %v2478, %v2479
      %vm2481 = vcmp.lt.s32.totalorder %v2462, 1
      %vm2482 = vcmp.lt.s32.totalorder %v2462, 2
      %vm2483 = vcmp.lt.s32.totalorder %v2462, 3
      %vm2484 = vcmp.lt.s32.totalorder %v2462, 4
      %v2485 = vsel %vm2481, %v2465, %v2468
      %v2486 = vsel %vm2484, %v2474, 2102212464
      %v2487 = vsel %vm2483, %v2471, %v2486
      %v2488 = vsel %vm2482, %v2485, %v2487
      %v2489 = vsel %vm2481, %v2468, %v2471
      %v2490 = vsel %vm2484, %v2477, 920167782
      %v2491 = vsel %vm2483, %v2474, %v2490
      %v2492 = vsel %vm2482, %v2489, %v2491
      %v2493 = vsel %vm2481, %v2471, %v2474
      %v2494 = vsel %vm2484, %v2480, 1326507024
      %v2495 = vsel %vm2483, %v2477, %v2494
      %v2496 = vsel %vm2482, %v2493, %v2495
      %v2497 = vshll.u32 %v2457, 8
      %v2498 = vand.u32 %v2497, 65535
      %v2499 = vshrl.u32 %v2497, 16
      %v2500 = vand.u32 %v2496, 65535
      %v2501 = vshrl.u32 %v2496, 16
      %v2502 = vmul.u32 %v2498, %v2500
      %v2503 = vmul.u32 %v2498, %v2501
      %v2504 = vmul.u32 %v2499, %v2500
      %v2505 = vmul.u32 %v2499, %v2501
      %v2506 = vshll.u32 %v2503, 16
      %v2507 = vshrl.u32 %v2503, 16
      %v2508 = vshll.u32 %v2504, 16
      %v2509 = vshrl.u32 %v2504, 16
      %vm2510 = vc.u32 %v2502, %v2506
      %v2511 = vsel %vm2510, 1, 0
      %v2512 = vadd.s32 %v2502, %v2506
      %v2513 = vadd.s32 %v2505, %v2511
      %vm2514 = vc.u32 %v2512, %v2508
      %v2515 = vsel %vm2514, 1, 0
      %v2516 = vadd.s32 %v2512, %v2508
      %v2517 = vadd.s32 %v2513, %v2515
      %v2518 = vadd.s32 %v2517, %v2507
      %v2519 = vadd.s32 %v2518, %v2509
      %v2520 = vand.u32 %v2497, 65535
      %v2521 = vshrl.u32 %v2497, 16
      %v2522 = vand.u32 %v2492, 65535
      %v2523 = vshrl.u32 %v2492, 16
      %v2524 = vmul.u32 %v2520, %v2522
      %v2525 = vmul.u32 %v2520, %v2523
      %v2526 = vmul.u32 %v2521, %v2522
      %v2527 = vmul.u32 %v2521, %v2523
      %v2528 = vshll.u32 %v2525, 16
      %v2529 = vshrl.u32 %v2525, 16
      %v2530 = vshll.u32 %v2526, 16
      %v2531 = vshrl.u32 %v2526, 16
      %vm2532 = vc.u32 %v2524, %v2528
      %v2533 = vsel %vm2532, 1, 0
      %v2534 = vadd.s32 %v2524, %v2528
      %v2535 = vadd.s32 %v2527, %v2533
      %vm2536 = vc.u32 %v2534, %v2530
      %v2537 = vsel %vm2536, 1, 0
      %v2538 = vadd.s32 %v2534, %v2530
      %v2539 = vadd.s32 %v2535, %v2537
      %v2540 = vadd.s32 %v2539, %v2529
      %v2541 = vadd.s32 %v2540, %v2531
      %v2542 = vmul.u32 %v2497, %v2488
      %v2543 = vadd.s32 %v2519, %v2538
      %vm2544 = vc.u32 %v2519, %v2538
      %v2545 = vadd.s32 %v2541, 1
      %v2546 = vsel %vm2544, %v2545, %v2541
      %v2547 = vadd.s32 %v2542, %v2546
      %v2548 = vadd.s32 %v2547, 536870912
      %v2549 = vshrl.u32 %v2548, 30
      %v2550 = vshll.u32 %v2549, 30
      %v2551 = vsub.s32 %v2547, %v2550
      %vm2552 = vcmp.lt.s32.totalorder %v2551, 0
      %v2553 = vsub.s32 0, %v2551
      %v2554 = vsel %vm2552, %v2553, %v2551
      %v2555 = vclz %v2554
      %v2556 = vsub.s32 %v2555, 2
      %vm2557 = vcmp.gt.s32.totalorder 0, %v2556
      %v2558 = vsel %vm2557, 0, %v2556
      %v2559 = vsub.s32 32, %v2558
      %v2560 = vshll.u32 %v2551, %v2558
      %v2561 = vshrl.u32 %v2543, %v2559
      %v2562 = vor.u32 %v2560, %v2561
      %v2563 = vsub.s32 4294967266, %v2558
      %v2564 = vadd.s32 %v2563, 127
      %v2565 = vshll.u32 %v2564, 23
      %v2566 = vor.u32 4788187, %v2565
      %v2567 = vand.u32 2147483647, %v2566
      %v2569 = vcvt.s32.f32 %v2562
      %v2570 = vmul.f32 %v2569, %v2567
      %v2571 = vxor.u32 %v2570, 2147483648
      %v2572 = vsel %vm2451, %v2571, %v2570
      %v2573 = vsub.s32 4, %v2549
      %v2574 = vsel %vm2451, %v2573, %v2549
      %v2575 = vsel %vm2450, %v1675, %v2572
      %v2576 = vsel %vm2450, 0, %v2574
      %v2577 = vmul.f32 %v2575, %v2575
      %v2578 = vmul.f32 %v2577, -0.001358992
      %v2579 = vadd.f32 %v2578, 0.041655596
      %v2580 = vmul.f32 %v2577, %v2579
      %v2581 = vadd.f32 %v2580, -0.4999988
      %v2582 = vmul.f32 %v2577, %v2581
      %v2583 = vadd.f32 1.0, %v2582
      %v2584 = vmul.f32 %v2575, %v2575
      %v2585 = vmul.f32 %v2584, -0.00019511016
      %v2586 = vadd.f32 %v2585, 0.008332121
      %v2587 = vmul.f32 %v2584, %v2586
      %v2588 = vadd.f32 %v2587, -0.16666654
      %v2589 = vmul.f32 %v2584, %v2588
      %v2590 = vadd.f32 %v2589, 1.0
      %v2591 = vmul.f32 %v2590, %v2575
      %vm2592 = vweird.f32 %v1675
      %v2593 = vadd.s32 %v2576, 3
      %v2594 = vand.u32 %v2593, 3
      %vm2595 = vcmp.lt.s32.totalorder %v2594, 2
      %vm2596 = vcmp.eq.s32.totalorder %v2594, 0
      %v2597 = vxor.u32 %v2591, 2147483648
      %v2598 = vsel %vm2596, %v2583, %v2597
      %vm2599 = vcmp.eq.s32.totalorder %v2594, 2
      %v2600 = vxor.u32 %v2583, 2147483648
      %v2601 = vsel %vm2599, %v2600, %v2591
      %v2602 = vsel %vm2595, %v2598, %v2601
      %v2603 = vsel %vm2592, nan, %v2602
      %v2604 = vand.u32 2147483647, %v1676
      %vm2605 = vcmp.le.f32.partialorder %v2604, 0.7853982
      %vm2606 = vcmp.lt.s32.totalorder %v1676, 0
      %v2607 = vand.u32 %v1676, 2139095040
      %v2608 = vshrl.u32 %v2607, 23
      %v2609 = vsub.s32 %v2608, 127
      %v2610 = vand.u32 2147483647, %v1676
      %v2611 = vand.u32 %v2610, 8388607
      %v2612 = vor.u32 %v2611, 8388608
      %v2613 = vsub.s32 0, %v2612
      %v2614 = vadd.s32 %v2609, 1
      %vm2615 = vcmp.gt.s32.totalorder %v2614, 0
      %v2616 = vsel %vm2615, %v2614, 0
      %v2617 = vshrl.u32 %v2616, 5
      %v2618 = vand.u32 %v2616, 31
      %v2619 = vsub.s32 32, %v2618
      %v2620 = vshrl.u32 683565275, %v2619
      %v2621 = vshll.u32 683565275, %v2618
      %v2622 = vshrl.u32 2475754826, %v2619
      %v2623 = vor.u32 %v2621, %v2622
      %v2624 = vshll.u32 2475754826, %v2618
      %v2625 = vshrl.u32 2131351028, %v2619
      %v2626 = vor.u32 %v2624, %v2625
      %v2627 = vshll.u32 2131351028, %v2618
      %v2628 = vshrl.u32 2102212464, %v2619
      %v2629 = vor.u32 %v2627, %v2628
      %v2630 = vshll.u32 2102212464, %v2618
      %v2631 = vshrl.u32 920167782, %v2619
      %v2632 = vor.u32 %v2630, %v2631
      %v2633 = vshll.u32 920167782, %v2618
      %v2634 = vshrl.u32 1326507024, %v2619
      %v2635 = vor.u32 %v2633, %v2634
      %vm2636 = vcmp.lt.s32.totalorder %v2617, 1
      %vm2637 = vcmp.lt.s32.totalorder %v2617, 2
      %vm2638 = vcmp.lt.s32.totalorder %v2617, 3
      %vm2639 = vcmp.lt.s32.totalorder %v2617, 4
      %v2640 = vsel %vm2636, %v2620, %v2623
      %v2641 = vsel %vm2639, %v2629, 2102212464
      %v2642 = vsel %vm2638, %v2626, %v2641
      %v2643 = vsel %vm2637, %v2640, %v2642
      %v2644 = vsel %vm2636, %v2623, %v2626
      %v2645 = vsel %vm2639, %v2632, 920167782
      %v2646 = vsel %vm2638, %v2629, %v2645
      %v2647 = vsel %vm2637, %v2644, %v2646
      %v2648 = vsel %vm2636, %v2626, %v2629
      %v2649 = vsel %vm2639, %v2635, 1326507024
      %v2650 = vsel %vm2638, %v2632, %v2649
      %v2651 = vsel %vm2637, %v2648, %v2650
      %v2652 = vshll.u32 %v2612, 8
      %v2653 = vand.u32 %v2652, 65535
      %v2654 = vshrl.u32 %v2652, 16
      %v2655 = vand.u32 %v2651, 65535
      %v2656 = vshrl.u32 %v2651, 16
      %v2657 = vmul.u32 %v2653, %v2655
      %v2658 = vmul.u32 %v2653, %v2656
      %v2659 = vmul.u32 %v2654, %v2655
      %v2660 = vmul.u32 %v2654, %v2656
      %v2661 = vshll.u32 %v2658, 16
      %v2662 = vshrl.u32 %v2658, 16
      %v2663 = vshll.u32 %v2659, 16
      %v2664 = vshrl.u32 %v2659, 16
      %vm2665 = vc.u32 %v2657, %v2661
      %v2666 = vsel %vm2665, 1, 0
      %v2667 = vadd.s32 %v2657, %v2661
      %v2668 = vadd.s32 %v2660, %v2666
      %vm2669 = vc.u32 %v2667, %v2663
      %v2670 = vsel %vm2669, 1, 0
      %v2671 = vadd.s32 %v2667, %v2663
      %v2672 = vadd.s32 %v2668, %v2670
      %v2673 = vadd.s32 %v2672, %v2662
      %v2674 = vadd.s32 %v2673, %v2664
      %v2675 = vand.u32 %v2652, 65535
      %v2676 = vshrl.u32 %v2652, 16
      %v2677 = vand.u32 %v2647, 65535
      %v2678 = vshrl.u32 %v2647, 16
      %v2679 = vmul.u32 %v2675, %v2677
      %v2680 = vmul.u32 %v2675, %v2678
      %v2681 = vmul.u32 %v2676, %v2677
      %v2682 = vmul.u32 %v2676, %v2678
      %v2683 = vshll.u32 %v2680, 16
      %v2684 = vshrl.u32 %v2680, 16
      %v2685 = vshll.u32 %v2681, 16
      %v2686 = vshrl.u32 %v2681, 16
      %vm2687 = vc.u32 %v2679, %v2683
      %v2688 = vsel %vm2687, 1, 0
      %v2689 = vadd.s32 %v2679, %v2683
      %v2690 = vadd.s32 %v2682, %v2688
      %vm2691 = vc.u32 %v2689, %v2685
      %v2692 = vsel %vm2691, 1, 0
      %v2693 = vadd.s32 %v2689, %v2685
      %v2694 = vadd.s32 %v2690, %v2692
      %v2695 = vadd.s32 %v2694, %v2684
      %v2696 = vadd.s32 %v2695, %v2686
      %v2697 = vmul.u32 %v2652, %v2643
      %v2698 = vadd.s32 %v2674, %v2693
      %vm2699 = vc.u32 %v2674, %v2693
      %v2700 = vadd.s32 %v2696, 1
      %v2701 = vsel %vm2699, %v2700, %v2696
      %v2702 = vadd.s32 %v2697, %v2701
      %v2703 = vadd.s32 %v2702, 536870912
      %v2704 = vshrl.u32 %v2703, 30
      %v2705 = vshll.u32 %v2704, 30
      %v2706 = vsub.s32 %v2702, %v2705
      %vm2707 = vcmp.lt.s32.totalorder %v2706, 0
      %v2708 = vsub.s32 0, %v2706
      %v2709 = vsel %vm2707, %v2708, %v2706
      %v2710 = vclz %v2709
      %v2711 = vsub.s32 %v2710, 2
      %vm2712 = vcmp.gt.s32.totalorder 0, %v2711
      %v2713 = vsel %vm2712, 0, %v2711
      %v2714 = vsub.s32 32, %v2713
      %v2715 = vshll.u32 %v2706, %v2713
      %v2716 = vshrl.u32 %v2698, %v2714
      %v2717 = vor.u32 %v2715, %v2716
      %v2718 = vsub.s32 4294967266, %v2713
      %v2719 = vadd.s32 %v2718, 127
      %v2720 = vshll.u32 %v2719, 23
      %v2721 = vor.u32 4788187, %v2720
      %v2722 = vand.u32 2147483647, %v2721
      %v2724 = vcvt.s32.f32 %v2717
      %v2725 = vmul.f32 %v2724, %v2722
      %v2726 = vxor.u32 %v2725, 2147483648
      %v2727 = vsel %vm2606, %v2726, %v2725
      %v2728 = vsub.s32 4, %v2704
      %v2729 = vsel %vm2606, %v2728, %v2704
      %v2730 = vsel %vm2605, %v1676, %v2727
      %v2731 = vsel %vm2605, 0, %v2729
      %v2732 = vmul.f32 %v2730, %v2730
      %v2733 = vmul.f32 %v2732, -0.001358992
      %v2734 = vadd.f32 %v2733, 0.041655596
      %v2735 = vmul.f32 %v2732, %v2734
      %v2736 = vadd.f32 %v2735, -0.4999988
      %v2737 = vmul.f32 %v2732, %v2736
      %v2738 = vadd.f32 1.0, %v2737
      %v2739 = vmul.f32 %v2730, %v2730
      %v2740 = vmul.f32 %v2739, -0.00019511016
      %v2741 = vadd.f32 %v2740, 0.008332121
      %v2742 = vmul.f32 %v2739, %v2741
      %v2743 = vadd.f32 %v2742, -0.16666654
      %v2744 = vmul.f32 %v2739, %v2743
      %v2745 = vadd.f32 %v2744, 1.0
      %v2746 = vmul.f32 %v2745, %v2730
      %vm2747 = vweird.f32 %v1676
      %v2748 = vadd.s32 %v2731, 3
      %v2749 = vand.u32 %v2748, 3
      %vm2750 = vcmp.lt.s32.totalorder %v2749, 2
      %vm2751 = vcmp.eq.s32.totalorder %v2749, 0
      %v2752 = vxor.u32 %v2746, 2147483648
      %v2753 = vsel %vm2751, %v2738, %v2752
      %vm2754 = vcmp.eq.s32.totalorder %v2749, 2
      %v2755 = vxor.u32 %v2738, 2147483648
      %v2756 = vsel %vm2754, %v2755, %v2746
      %v2757 = vsel %vm2750, %v2753, %v2756
      %v2758 = vsel %vm2747, nan, %v2757
      %v2759 = vand.u32 2147483647, %v1677
      %vm2760 = vcmp.le.f32.partialorder %v2759, 0.7853982
      %vm2761 = vcmp.lt.s32.totalorder %v1677, 0
      %v2762 = vand.u32 %v1677, 2139095040
      %v2763 = vshrl.u32 %v2762, 23
      %v2764 = vsub.s32 %v2763, 127
      %v2765 = vand.u32 2147483647, %v1677
      %v2766 = vand.u32 %v2765, 8388607
      %v2767 = vor.u32 %v2766, 8388608
      %v2768 = vsub.s32 0, %v2767
      %v2769 = vadd.s32 %v2764, 1
      %vm2770 = vcmp.gt.s32.totalorder %v2769, 0
      %v2771 = vsel %vm2770, %v2769, 0
      %v2772 = vshrl.u32 %v2771, 5
      %v2773 = vand.u32 %v2771, 31
      %v2774 = vsub.s32 32, %v2773
      %v2775 = vshrl.u32 683565275, %v2774
      %v2776 = vshll.u32 683565275, %v2773
      %v2777 = vshrl.u32 2475754826, %v2774
      %v2778 = vor.u32 %v2776, %v2777
      %v2779 = vshll.u32 2475754826, %v2773
      %v2780 = vshrl.u32 2131351028, %v2774
      %v2781 = vor.u32 %v2779, %v2780
      %v2782 = vshll.u32 2131351028, %v2773
      %v2783 = vshrl.u32 2102212464, %v2774
      %v2784 = vor.u32 %v2782, %v2783
      %v2785 = vshll.u32 2102212464, %v2773
      %v2786 = vshrl.u32 920167782, %v2774
      %v2787 = vor.u32 %v2785, %v2786
      %v2788 = vshll.u32 920167782, %v2773
      %v2789 = vshrl.u32 1326507024, %v2774
      %v2790 = vor.u32 %v2788, %v2789
      %vm2791 = vcmp.lt.s32.totalorder %v2772, 1
      %vm2792 = vcmp.lt.s32.totalorder %v2772, 2
      %vm2793 = vcmp.lt.s32.totalorder %v2772, 3
      %vm2794 = vcmp.lt.s32.totalorder %v2772, 4
      %v2795 = vsel %vm2791, %v2775, %v2778
      %v2796 = vsel %vm2794, %v2784, 2102212464
      %v2797 = vsel %vm2793, %v2781, %v2796
      %v2798 = vsel %vm2792, %v2795, %v2797
      %v2799 = vsel %vm2791, %v2778, %v2781
      %v2800 = vsel %vm2794, %v2787, 920167782
      %v2801 = vsel %vm2793, %v2784, %v2800
      %v2802 = vsel %vm2792, %v2799, %v2801
      %v2803 = vsel %vm2791, %v2781, %v2784
      %v2804 = vsel %vm2794, %v2790, 1326507024
      %v2805 = vsel %vm2793, %v2787, %v2804
      %v2806 = vsel %vm2792, %v2803, %v2805
      %v2807 = vshll.u32 %v2767, 8
      %v2808 = vand.u32 %v2807, 65535
      %v2809 = vshrl.u32 %v2807, 16
      %v2810 = vand.u32 %v2806, 65535
      %v2811 = vshrl.u32 %v2806, 16
      %v2812 = vmul.u32 %v2808, %v2810
      %v2813 = vmul.u32 %v2808, %v2811
      %v2814 = vmul.u32 %v2809, %v2810
      %v2815 = vmul.u32 %v2809, %v2811
      %v2816 = vshll.u32 %v2813, 16
      %v2817 = vshrl.u32 %v2813, 16
      %v2818 = vshll.u32 %v2814, 16
      %v2819 = vshrl.u32 %v2814, 16
      %vm2820 = vc.u32 %v2812, %v2816
      %v2821 = vsel %vm2820, 1, 0
      %v2822 = vadd.s32 %v2812, %v2816
      %v2823 = vadd.s32 %v2815, %v2821
      %vm2824 = vc.u32 %v2822, %v2818
      %v2825 = vsel %vm2824, 1, 0
      %v2826 = vadd.s32 %v2822, %v2818
      %v2827 = vadd.s32 %v2823, %v2825
      %v2828 = vadd.s32 %v2827, %v2817
      %v2829 = vadd.s32 %v2828, %v2819
      %v2830 = vand.u32 %v2807, 65535
      %v2831 = vshrl.u32 %v2807, 16
      %v2832 = vand.u32 %v2802, 65535
      %v2833 = vshrl.u32 %v2802, 16
      %v2834 = vmul.u32 %v2830, %v2832
      %v2835 = vmul.u32 %v2830, %v2833
      %v2836 = vmul.u32 %v2831, %v2832
      %v2837 = vmul.u32 %v2831, %v2833
      %v2838 = vshll.u32 %v2835, 16
      %v2839 = vshrl.u32 %v2835, 16
      %v2840 = vshll.u32 %v2836, 16
      %v2841 = vshrl.u32 %v2836, 16
      %vm2842 = vc.u32 %v2834, %v2838
      %v2843 = vsel %vm2842, 1, 0
      %v2844 = vadd.s32 %v2834, %v2838
      %v2845 = vadd.s32 %v2837, %v2843
      %vm2846 = vc.u32 %v2844, %v2840
      %v2847 = vsel %vm2846, 1, 0
      %v2848 = vadd.s32 %v2844, %v2840
      %v2849 = vadd.s32 %v2845, %v2847
      %v2850 = vadd.s32 %v2849, %v2839
      %v2851 = vadd.s32 %v2850, %v2841
      %v2852 = vmul.u32 %v2807, %v2798
      %v2853 = vadd.s32 %v2829, %v2848
      %vm2854 = vc.u32 %v2829, %v2848
      %v2855 = vadd.s32 %v2851, 1
      %v2856 = vsel %vm2854, %v2855, %v2851
      %v2857 = vadd.s32 %v2852, %v2856
      %v2858 = vadd.s32 %v2857, 536870912
      %v2859 = vshrl.u32 %v2858, 30
      %v2860 = vshll.u32 %v2859, 30
      %v2861 = vsub.s32 %v2857, %v2860
      %vm2862 = vcmp.lt.s32.totalorder %v2861, 0
      %v2863 = vsub.s32 0, %v2861
      %v2864 = vsel %vm2862, %v2863, %v2861
      %v2865 = vclz %v2864
      %v2866 = vsub.s32 %v2865, 2
      %vm2867 = vcmp.gt.s32.totalorder 0, %v2866
      %v2868 = vsel %vm2867, 0, %v2866
      %v2869 = vsub.s32 32, %v2868
      %v2870 = vshll.u32 %v2861, %v2868
      %v2871 = vshrl.u32 %v2853, %v2869
      %v2872 = vor.u32 %v2870, %v2871
      %v2873 = vsub.s32 4294967266, %v2868
      %v2874 = vadd.s32 %v2873, 127
      %v2875 = vshll.u32 %v2874, 23
      %v2876 = vor.u32 4788187, %v2875
      %v2877 = vand.u32 2147483647, %v2876
      %v2879 = vcvt.s32.f32 %v2872
      %v2880 = vmul.f32 %v2879, %v2877
      %v2881 = vxor.u32 %v2880, 2147483648
      %v2882 = vsel %vm2761, %v2881, %v2880
      %v2883 = vsub.s32 4, %v2859
      %v2884 = vsel %vm2761, %v2883, %v2859
      %v2885 = vsel %vm2760, %v1677, %v2882
      %v2886 = vsel %vm2760, 0, %v2884
      %v2887 = vmul.f32 %v2885, %v2885
      %v2888 = vmul.f32 %v2887, -0.001358992
      %v2889 = vadd.f32 %v2888, 0.041655596
      %v2890 = vmul.f32 %v2887, %v2889
      %v2891 = vadd.f32 %v2890, -0.4999988
      %v2892 = vmul.f32 %v2887, %v2891
      %v2893 = vadd.f32 1.0, %v2892
      %v2894 = vmul.f32 %v2885, %v2885
      %v2895 = vmul.f32 %v2894, -0.00019511016
      %v2896 = vadd.f32 %v2895, 0.008332121
      %v2897 = vmul.f32 %v2894, %v2896
      %v2898 = vadd.f32 %v2897, -0.16666654
      %v2899 = vmul.f32 %v2894, %v2898
      %v2900 = vadd.f32 %v2899, 1.0
      %v2901 = vmul.f32 %v2900, %v2885
      %vm2902 = vweird.f32 %v1677
      %v2903 = vadd.s32 %v2886, 3
      %v2904 = vand.u32 %v2903, 3
      %vm2905 = vcmp.lt.s32.totalorder %v2904, 2
      %vm2906 = vcmp.eq.s32.totalorder %v2904, 0
      %v2907 = vxor.u32 %v2901, 2147483648
      %v2908 = vsel %vm2906, %v2893, %v2907
      %vm2909 = vcmp.eq.s32.totalorder %v2904, 2
      %v2910 = vxor.u32 %v2893, 2147483648
      %v2911 = vsel %vm2909, %v2910, %v2901
      %v2912 = vsel %vm2905, %v2908, %v2911
      %v2913 = vsel %vm2902, nan, %v2912
      %v2914 = vld [vmem:[#allocation2] sm:$0xff]
      %v2915 = vld [vmem:[#allocation2 + $0x8] sm:$0xff]
      %v2916 = vld [vmem:[#allocation2 + $0x10] sm:$0xff]
      %v2917 = vld [vmem:[#allocation2 + $0x18] sm:$0xff]
      %v2918 = vld [vmem:[#allocation2 + $0x20] sm:$0xff]
      %v2919 = vld [vmem:[#allocation2 + $0x28] sm:$0xff]
      %v2920 = vld [vmem:[#allocation2 + $0x30] sm:$0xff]
      %v2921 = vld [vmem:[#allocation2 + $0x38] sm:$0xff]
      %v2922 = vld [vmem:[#allocation2 + $0x40] sm:$0xff]
      %v2923 = vld [vmem:[#allocation2 + $0x48] sm:$0xff]
      %v2924 = vld [vmem:[#allocation2 + $0x50] sm:$0xff]
      %v2925 = vld [vmem:[#allocation2 + $0x58] sm:$0xff]
      %v2926 = vld [vmem:[%s1594] sm:$0xff]
      %v2927 = vld [vmem:[%s1594 + $0x8] sm:$0xff]
      %v2928 = vld [vmem:[%s1594 + $0x10] sm:$0xff]
      %v2929 = vld [vmem:[%s1594 + $0x18] sm:$0xff]
      %v2930 = vld [vmem:[%s1594 + $0x20] sm:$0xff]
      %v2931 = vld [vmem:[%s1594 + $0x28] sm:$0xff]
      %v2932 = vld [vmem:[%s1594 + $0x30] sm:$0xff]
      %v2933 = vld [vmem:[%s1594 + $0x38] sm:$0xff]
      %v2934 = vld [vmem:[%s1594 + $0x40] sm:$0xff]
      %v2935 = vld [vmem:[%s1594 + $0x48] sm:$0xff]
      %v2936 = vld [vmem:[%s1594 + $0x50] sm:$0xff]
      %v2937 = vld [vmem:[%s1594 + $0x58] sm:$0xff]
      %v2938 = vmul.f32 %v2914, %v1831
      %v2939 = vmul.f32 %v2915, %v1985
      %v2940 = vmul.f32 %v2916, %v2139
      %v2941 = vmul.f32 %v2917, %v2293
      %v2942 = vmul.f32 %v2926, %v2448
      %v2943 = vmul.f32 %v2927, %v2603
      %v2944 = vmul.f32 %v2928, %v2758
      %v2945 = vmul.f32 %v2929, %v2913
      %v2946 = vsub.f32 %v2938, %v2942
      %v2947 = vsub.f32 %v2939, %v2943
      %v2948 = vsub.f32 %v2940, %v2944
      %v2949 = vsub.f32 %v2941, %v2945
      %v2950 = vadd.f32 %v2946, %v2948
      %v2951 = vrot.slane %v2950, 4
      %v2952 = vadd.f32 %v2950, %v2951
      %v2953 = vrot.slane %v2952, 2
      %v2954 = vadd.f32 %v2952, %v2953
      %v2955 = vrot.slane %v2954, 1
      %v2956 = vadd.f32 %v2954, %v2955
      %v2957 = vadd.f32 %v2947, %v2949
      %v2958 = vrot.slane %v2957, 4
      %v2959 = vadd.f32 %v2957, %v2958
      %v2960 = vrot.slane %v2959, 2
      %v2961 = vadd.f32 %v2959, %v2960
      %v2962 = vrot.slane %v2961, 1
      %v2963 = vadd.f32 %v2961, %v2962
      %v2964 = vmul.f32 %v2914, %v2448
      %v2965 = vmul.f32 %v2915, %v2603
      %v2966 = vmul.f32 %v2916, %v2758
      %v2967 = vmul.f32 %v2917, %v2913
      %v2968 = vmul.f32 %v2926, %v1831
      %v2969 = vmul.f32 %v2927, %v1985
      %v2970 = vmul.f32 %v2928, %v2139
      %v2971 = vmul.f32 %v2929, %v2293
      %v2972 = vadd.f32 %v2964, %v2968
      %v2973 = vadd.f32 %v2965, %v2969
      %v2974 = vadd.f32 %v2966, %v2970
      %v2975 = vadd.f32 %v2967, %v2971
      %v2976 = vadd.f32 %v2972, %v2974
      %v2977 = vrot.slane %v2976, 4
      %v2978 = vadd.f32 %v2976, %v2977
      %v2979 = vrot.slane %v2978, 2
      %v2980 = vadd.f32 %v2978, %v2979
      %v2981 = vrot.slane %v2980, 1
      %v2982 = vadd.f32 %v2980, %v2981
      %v2983 = vadd.f32 %v2973, %v2975
      %v2984 = vrot.slane %v2983, 4
      %v2985 = vadd.f32 %v2983, %v2984
      %v2986 = vrot.slane %v2985, 2
      %v2987 = vadd.f32 %v2985, %v2986
      %v2988 = vrot.slane %v2987, 1
      %v2989 = vadd.f32 %v2987, %v2988
      %v2990 = vld [vmem:[%s3] sm:$0xf]
      %v2991 = vld [vmem:[%s3 + $0x8] sm:$0xf]
      %v2992 = vld [vmem:[%s3] sm:$0xf0]
      %v2993 = vld [vmem:[%s3 + $0x8] sm:$0xf0]
      %v2994 = vmul.f32 %v2990, %v2956
      %v2995 = vmul.f32 %v2991, %v2963
      %v2996 = vadd.f32 %v2994, 0.0
      %v2997 = vadd.f32 %v2995, 0.0
      %v2998 = vmul.f32 %v2992, %v2982
      %v2999 = vmul.f32 %v2993, %v2989
      %v3002 = vrot.slane %v2998, 4
      %v3003 = vrot.slane %v2999, 4
      %v3006 = vsub.f32 %v2996, %v3002
      %v3007 = vsub.f32 %v2997, %v3003
      %v3008 = vmul.f32 %v2990, %v2982
      %v3009 = vmul.f32 %v2991, %v2989
      %v3010 = vadd.f32 %v3008, 0.0
      %v3011 = vadd.f32 %v3009, 0.0
      %v3012 = vmul.f32 %v2992, %v2956
      %v3013 = vmul.f32 %v2993, %v2963
      %v3016 = vrot.slane %v3012, 4
      %v3017 = vrot.slane %v3013, 4
      %v3020 = vadd.f32 %v3010, %v3016
      %v3021 = vadd.f32 %v3011, %v3017
      %v3022 = vmul.f32 %v2918, %v1831
      %v3023 = vmul.f32 %v2919, %v1985
      %v3024 = vmul.f32 %v2920, %v2139
      %v3025 = vmul.f32 %v2921, %v2293
      %v3026 = vmul.f32 %v2930, %v2448
      %v3027 = vmul.f32 %v2931, %v2603
      %v3028 = vmul.f32 %v2932, %v2758
      %v3029 = vmul.f32 %v2933, %v2913
      %v3030 = vsub.f32 %v3022, %v3026
      %v3031 = vsub.f32 %v3023, %v3027
      %v3032 = vsub.f32 %v3024, %v3028
      %v3033 = vsub.f32 %v3025, %v3029
      %v3034 = vadd.f32 %v3030, %v3032
      %v3035 = vrot.slane %v3034, 4
      %v3036 = vadd.f32 %v3034, %v3035
      %v3037 = vrot.slane %v3036, 2
      %v3038 = vadd.f32 %v3036, %v3037
      %v3039 = vrot.slane %v3038, 1
      %v3040 = vadd.f32 %v3038, %v3039
      %v3041 = vadd.f32 %v3031, %v3033
      %v3042 = vrot.slane %v3041, 4
      %v3043 = vadd.f32 %v3041, %v3042
      %v3044 = vrot.slane %v3043, 2
      %v3045 = vadd.f32 %v3043, %v3044
      %v3046 = vrot.slane %v3045, 1
      %v3047 = vadd.f32 %v3045, %v3046
      %v3048 = vmul.f32 %v2918, %v2448
      %v3049 = vmul.f32 %v2919, %v2603
      %v3050 = vmul.f32 %v2920, %v2758
      %v3051 = vmul.f32 %v2921, %v2913
      %v3052 = vmul.f32 %v2930, %v1831
      %v3053 = vmul.f32 %v2931, %v1985
      %v3054 = vmul.f32 %v2932, %v2139
      %v3055 = vmul.f32 %v2933, %v2293
      %v3056 = vadd.f32 %v3048, %v3052
      %v3057 = vadd.f32 %v3049, %v3053
      %v3058 = vadd.f32 %v3050, %v3054
      %v3059 = vadd.f32 %v3051, %v3055
      %v3060 = vadd.f32 %v3056, %v3058
      %v3061 = vrot.slane %v3060, 4
      %v3062 = vadd.f32 %v3060, %v3061
      %v3063 = vrot.slane %v3062, 2
      %v3064 = vadd.f32 %v3062, %v3063
      %v3065 = vrot.slane %v3064, 1
      %v3066 = vadd.f32 %v3064, %v3065
      %v3067 = vadd.f32 %v3057, %v3059
      %v3068 = vrot.slane %v3067, 4
      %v3069 = vadd.f32 %v3067, %v3068
      %v3070 = vrot.slane %v3069, 2
      %v3071 = vadd.f32 %v3069, %v3070
      %v3072 = vrot.slane %v3071, 1
      %v3073 = vadd.f32 %v3071, %v3072
      %s3074 = scalar_lea.vmem %s3, 16
      %v3075 = vld [vmem:[%s3074] sm:$0xf]
      %v3076 = vld [vmem:[%s3074 + $0x8] sm:$0xf]
      %v3077 = vld [vmem:[%s3074] sm:$0xf0]
      %v3078 = vld [vmem:[%s3074 + $0x8] sm:$0xf0]
      %v3079 = vmul.f32 %v3075, %v3040
      %v3080 = vmul.f32 %v3076, %v3047
      %v3081 = vadd.f32 %v3006, %v3079
      %v3082 = vadd.f32 %v3007, %v3080
      %v3083 = vmul.f32 %v3077, %v3066
      %v3084 = vmul.f32 %v3078, %v3073
      %v3087 = vrot.slane %v3083, 4
      %v3088 = vrot.slane %v3084, 4
      %v3091 = vsub.f32 %v3081, %v3087
      %v3092 = vsub.f32 %v3082, %v3088
      %v3093 = vmul.f32 %v3075, %v3066
      %v3094 = vmul.f32 %v3076, %v3073
      %v3095 = vadd.f32 %v3020, %v3093
      %v3096 = vadd.f32 %v3021, %v3094
      %v3097 = vmul.f32 %v3077, %v3040
      %v3098 = vmul.f32 %v3078, %v3047
      %v3101 = vrot.slane %v3097, 4
      %v3102 = vrot.slane %v3098, 4
      %v3105 = vadd.f32 %v3095, %v3101
      %v3106 = vadd.f32 %v3096, %v3102
      %v3107 = vmul.f32 %v2922, %v1831
      %v3108 = vmul.f32 %v2923, %v1985
      %v3109 = vmul.f32 %v2924, %v2139
      %v3110 = vmul.f32 %v2925, %v2293
      %v3111 = vmul.f32 %v2934, %v2448
      %v3112 = vmul.f32 %v2935, %v2603
      %v3113 = vmul.f32 %v2936, %v2758
      %v3114 = vmul.f32 %v2937, %v2913
      %v3115 = vsub.f32 %v3107, %v3111
      %v3116 = vsub.f32 %v3108, %v3112
      %v3117 = vsub.f32 %v3109, %v3113
      %v3118 = vsub.f32 %v3110, %v3114
      %v3119 = vadd.f32 %v3115, %v3117
      %v3120 = vrot.slane %v3119, 4
      %v3121 = vadd.f32 %v3119, %v3120
      %v3122 = vrot.slane %v3121, 2
      %v3123 = vadd.f32 %v3121, %v3122
      %v3124 = vrot.slane %v3123, 1
      %v3125 = vadd.f32 %v3123, %v3124
      %v3126 = vadd.f32 %v3116, %v3118
      %v3127 = vrot.slane %v3126, 4
      %v3128 = vadd.f32 %v3126, %v3127
      %v3129 = vrot.slane %v3128, 2
      %v3130 = vadd.f32 %v3128, %v3129
      %v3131 = vrot.slane %v3130, 1
      %v3132 = vadd.f32 %v3130, %v3131
      %v3133 = vmul.f32 %v2922, %v2448
      %v3134 = vmul.f32 %v2923, %v2603
      %v3135 = vmul.f32 %v2924, %v2758
      %v3136 = vmul.f32 %v2925, %v2913
      %v3137 = vmul.f32 %v2934, %v1831
      %v3138 = vmul.f32 %v2935, %v1985
      %v3139 = vmul.f32 %v2936, %v2139
      %v3140 = vmul.f32 %v2937, %v2293
      %v3141 = vadd.f32 %v3133, %v3137
      %v3142 = vadd.f32 %v3134, %v3138
      %v3143 = vadd.f32 %v3135, %v3139
      %v3144 = vadd.f32 %v3136, %v3140
      %v3145 = vadd.f32 %v3141, %v3143
      %v3146 = vrot.slane %v3145, 4
      %v3147 = vadd.f32 %v3145, %v3146
      %v3148 = vrot.slane %v3147, 2
      %v3149 = vadd.f32 %v3147, %v3148
      %v3150 = vrot.slane %v3149, 1
      %v3151 = vadd.f32 %v3149, %v3150
      %v3152 = vadd.f32 %v3142, %v3144
      %v3153 = vrot.slane %v3152, 4
      %v3154 = vadd.f32 %v3152, %v3153
      %v3155 = vrot.slane %v3154, 2
      %v3156 = vadd.f32 %v3154, %v3155
      %v3157 = vrot.slane %v3156, 1
      %v3158 = vadd.f32 %v3156, %v3157
      %s3159 = scalar_lea.vmem %s3, 32
      %v3160 = vld [vmem:[%s3159] sm:$0xf]
      %v3161 = vld [vmem:[%s3159 + $0x8] sm:$0xf]
      %v3162 = vld [vmem:[%s3159] sm:$0xf0]
      %v3163 = vld [vmem:[%s3159 + $0x8] sm:$0xf0]
      %v3164 = vmul.f32 %v3160, %v3125
      %v3165 = vmul.f32 %v3161, %v3132
      %v3166 = vadd.f32 %v3091, %v3164
      %v3167 = vadd.f32 %v3092, %v3165
      %v3168 = vmul.f32 %v3162, %v3151
      %v3169 = vmul.f32 %v3163, %v3158
      %v3172 = vrot.slane %v3168, 4
      %v3173 = vrot.slane %v3169, 4
      %v3176 = vsub.f32 %v3166, %v3172
      %v3177 = vsub.f32 %v3167, %v3173
      %v3178 = vmul.f32 %v3160, %v3151
      %v3179 = vmul.f32 %v3161, %v3158
      %v3180 = vadd.f32 %v3105, %v3178
      %v3181 = vadd.f32 %v3106, %v3179
      %v3182 = vmul.f32 %v3162, %v3125
      %v3183 = vmul.f32 %v3163, %v3132
      %v3186 = vrot.slane %v3182, 4
      %v3187 = vrot.slane %v3183, 4
      %v3190 = vadd.f32 %v3180, %v3186
      %v3191 = vadd.f32 %v3181, %v3187
      %3192 = vst [vmem:[#allocation3] sm:$0xf] %v3176
      %3193 = vst [vmem:[#allocation3 + $0x8] sm:$0xf] %v3177
      %v3196 = vrot.slane %v3190, 4
      %v3197 = vrot.slane %v3191, 4
      %3200 = vst [vmem:[#allocation3] sm:$0xf0] %v3196
      %3201 = vst [vmem:[#allocation3 + $0x8] sm:$0xf0] %v3197
    $region25: #{tpu_custom_call.1} parent=1 // pred_fallthru
      _
    // Predicated region
    $region26: #{tpu_custom_call.1} parent=1 // pred_check
      _
    $region27: #{tpu_custom_call.1} parent=1 // pred_check_branch
      %3203 = sbr.rel (0) target = $region29
    $region28: #{tpu_custom_call.1} parent=1 // pred_region
      %3205 = vsyncadd [#allocation4], 0
      %s3207 = sshll.u32 [#allocation3], 4
      %s3208 = int_to_ptr.vmem [resolvable:$true] %s3207
      %s3209 = sshll.u32 %s4, 4
      %s3210 = int_to_ptr.hbm [resolvable:$true] %s3209
      %3212 = dma.vmem_to_hbm [thread:$0]  %s3208, 256, %s3210, [#allocation4]
    $region29: #{tpu_custom_call.1} parent=1 // pred_fallthru
      _
    // Predicated region
    $region30: #{tpu_custom_call.1} parent=1 // pred_check
      _
    $region31: #{tpu_custom_call.1} parent=1 // pred_check_branch
      %3214 = sbr.rel (0) target = $region33
    $region32: #{tpu_custom_call.1} parent=1 // pred_region
      %3216 = dma.done [#allocation4], 256
    $region33: #{tpu_custom_call.1} parent=1 // pred_fallthru
      _
    %3217 = vsyncpa [#allocation4], 1

</llo_original>
